<compile_context>
chip_gen: v7x
topology: tpu7x:2x2x1
jax: 0.10.0
libtpu: 0.0.40
codegen_flags: <defaults>
</compile_context>

<pallas_src>
import functools

import jax
import jax.numpy as jnp
from jax.experimental import pallas as pl
from jax.experimental.pallas import tpu as pltpu

# ---- model dims (fixed by the PyTorch module construction) ----
AE_DIM = 128
VAE_DIM = 64
CONVNEXT_DIM = 512
SWIN_DIM = 768
MC3_DIM = 1024
IN_DIM = AE_DIM + VAE_DIM + CONVNEXT_DIM + SWIN_DIM + MC3_DIM  # 2496
H1_DIM = 512
H2_DIM = 256
NUM_CLASSES = 2

# batch tile: 256 x 2496 bf16 ~= 1.2 MiB per buffer; with double buffering plus
# resident bf16 weights (~2.7 MiB) this sits well under the scoped VMEM limit
# on v5e/v6e (16/32 MiB default) and v7x (64 MiB physical).
BLOCK_ROWS = 256


def fusion_mlp_kernel(x_ref, w1_ref, b1_ref, w2_ref, b2_ref, w3_ref, b3_ref,
                      o_ref):
    # layer 1: (TM, 2496) @ (2496, 512), bf16 operands, f32 accumulation
    h1 = jnp.dot(x_ref[...], w1_ref[...], preferred_element_type=jnp.float32)
    h1 = jnp.maximum(h1 + b1_ref[...], 0.0)

    # layer 2: (TM, 512) @ (512, 256)
    h2 = jnp.dot(h1.astype(jnp.bfloat16), w2_ref[...],
                 preferred_element_type=jnp.float32)
    h2 = jnp.maximum(h2 + b2_ref[...], 0.0)

    # layer 3: (TM, 256) @ (256, 2)
    out = jnp.dot(h2.astype(jnp.bfloat16), w3_ref[...],
                  preferred_element_type=jnp.float32)
    o_ref[...] = (out + b3_ref[...]).astype(o_ref.dtype)


def _round_up(x, m):
    return ((x + m - 1) // m) * m


@functools.partial(jax.jit, static_argnames=("block_rows",))
def integration_model_forward(ae, vae, cx, sw, mc, params,
                              block_rows=BLOCK_ROWS):
    """params: dict with w1,b1,w2,b2,w3,b3 (weights stored (in, out), f32)."""
    batch = ae.shape[0]

    # fused torch.cat: one (B, 2496) bf16 activation -> layer 1 is a single
    # full-K MXU dot inside the kernel.
    x = jnp.concatenate([ae, vae, cx, sw, mc], axis=1).astype(jnp.bfloat16)

    tm = min(block_rows, _round_up(batch, 8))   # sublane-aligned batch tile
    b_pad = _round_up(batch, tm)
    if b_pad != batch:
        x = jnp.pad(x, ((0, b_pad - batch), (0, 0)))
    grid = (b_pad // tm,)

    w1 = params["w1"].astype(jnp.bfloat16)
    w2 = params["w2"].astype(jnp.bfloat16)
    w3 = params["w3"].astype(jnp.bfloat16)
    b1 = params["b1"].astype(jnp.float32)
    b2 = params["b2"].astype(jnp.float32)
    b3 = params["b3"].astype(jnp.float32)

    resident = lambda i: (0, 0)  # weights/biases pinned in VMEM across the grid

    out = pl.pallas_call(
        fusion_mlp_kernel,
        out_shape=jax.ShapeDtypeStruct((b_pad, NUM_CLASSES), jnp.float32),
        grid_spec=pltpu.PrefetchScalarGridSpec(
            num_scalar_prefetch=0,
            grid=grid,
            in_specs=[
                pl.BlockSpec((tm, IN_DIM), lambda i: (i, 0)),      # x tile
                pl.BlockSpec((IN_DIM, H1_DIM), resident),          # w1
                pl.BlockSpec((1, H1_DIM), resident),               # b1
                pl.BlockSpec((H1_DIM, H2_DIM), resident),          # w2
                pl.BlockSpec((1, H2_DIM), resident),               # b2
                pl.BlockSpec((H2_DIM, NUM_CLASSES), resident),     # w3
                pl.BlockSpec((1, NUM_CLASSES), resident),          # b3
            ],
            out_specs=pl.BlockSpec((tm, NUM_CLASSES), lambda i: (i, 0)),
        ),
        compiler_params=pltpu.CompilerParams(
            dimension_semantics=("parallel",),       # v7x: split batch blocks
            vmem_limit_bytes=32 * 1024 * 1024,
        ),
    )(x, w1, b1, w2, b2, w3, b3)

    return out[:batch]


def init_params(key):
    """Deterministic init mimicking nn.Linear default (U[-1/sqrt(fan_in), +])."""
    def linear(key, fan_in, fan_out):
        kw, kb = jax.random.split(key)
        bound = 1.0 / (fan_in ** 0.5)
        w = jax.random.uniform(kw, (fan_in, fan_out), jnp.float32, -bound, bound)
        b = jax.random.uniform(kb, (1, fan_out), jnp.float32, -bound, bound)
        return w, b

    k1, k2, k3 = jax.random.split(key, 3)
    w1, b1 = linear(k1, IN_DIM, H1_DIM)
    w2, b2 = linear(k2, H1_DIM, H2_DIM)
    w3, b3 = linear(k3, H2_DIM, NUM_CLASSES)
    return dict(w1=w1, b1=b1, w2=w2, b2=b2, w3=w3, b3=b3)


def reference_forward(ae, vae, cx, sw, mc, p):
    """Pure-JAX reference using the same bf16 storage of x / weights."""
    x = jnp.concatenate([ae, vae, cx, sw, mc], axis=1)
    x = x.astype(jnp.bfloat16).astype(jnp.float32)
    w1 = p["w1"].astype(jnp.bfloat16).astype(jnp.float32)
    w2 = p["w2"].astype(jnp.bfloat16).astype(jnp.float32)
    w3 = p["w3"].astype(jnp.bfloat16).astype(jnp.float32)
    h1 = jnp.maximum(x @ w1 + p["b1"], 0.0)
    h2 = jnp.maximum(h1 @ w2 + p["b2"], 0.0)
    return h2 @ w3 + p["b3"]


if __name__ == "__main__":
    key = jax.random.PRNGKey(0)
    kp, ka, kv, kc, ks, km = jax.random.split(key, 6)
    params = init_params(kp)

    def make_inputs(batch):
        ae = jax.random.normal(ka, (batch, AE_DIM), jnp.float32)
        vae = jax.random.normal(kv, (batch, VAE_DIM), jnp.float32)
        cx = jax.random.normal(kc, (batch, CONVNEXT_DIM), jnp.float32)
        sw = jax.random.normal(ks, (batch, SWIN_DIM), jnp.float32)
        mc = jax.random.normal(km, (batch, MC3_DIM), jnp.float32)
        return ae, vae, cx, sw, mc

    # batch=2: matches the PyTorch usage (tiny latency case, single tile).
    # batch=300: exercises the multi-block grid + padding path.
    for batch in (2, 300):
        inputs = make_inputs(batch)
        out = jax.block_until_ready(integration_model_forward(*inputs, params))
        ref = reference_forward(*inputs, params)
        assert out.shape == (batch, NUM_CLASSES)
        err = jnp.max(jnp.abs(out - ref))
        assert jnp.allclose(out, ref, atol=2e-2, rtol=2e-2), (
            f"batch={batch} max|err|={err}")

    print("KERNEL_OK")
</pallas_src>

<mosaic_0001>
module attributes {stable_mosaic.version = 11 : i64} {
  func.func @fusion_mlp_kernel(%arg0: i32, %arg1: memref<8x2496xbf16, #tpu.memory_space<vmem>>, %arg2: memref<2496x512xbf16, #tpu.memory_space<vmem>>, %arg3: memref<1x512xf32, #tpu.memory_space<vmem>>, %arg4: memref<512x256xbf16, #tpu.memory_space<vmem>>, %arg5: memref<1x256xf32, #tpu.memory_space<vmem>>, %arg6: memref<256x2xbf16, #tpu.memory_space<vmem>>, %arg7: memref<1x2xf32, #tpu.memory_space<vmem>>, %arg8: memref<8x2xf32, #tpu.memory_space<vmem>>) attributes {dimension_semantics = [#tpu.dimension_semantics<parallel>], iteration_bounds = array<i64: 1>, scalar_prefetch = 0 : i64, scratch_operands = 0 : i64, tpu.core_type = #tpu.core_type<tc>, window_params = [{transform_indices = @transform_0, window_bounds = array<i64: 8, 2496>}, {pipeline_mode = #tpu.pipeline_mode<synchronous>, transform_indices = @transform_1, window_bounds = array<i64: 2496, 512>}, {pipeline_mode = #tpu.pipeline_mode<synchronous>, transform_indices = @transform_2, window_bounds = array<i64: 1, 512>}, {pipeline_mode = #tpu.pipeline_mode<synchronous>, transform_indices = @transform_3, window_bounds = array<i64: 512, 256>}, {pipeline_mode = #tpu.pipeline_mode<synchronous>, transform_indices = @transform_4, window_bounds = array<i64: 1, 256>}, {pipeline_mode = #tpu.pipeline_mode<synchronous>, transform_indices = @transform_5, window_bounds = array<i64: 256, 2>}, {pipeline_mode = #tpu.pipeline_mode<synchronous>, transform_indices = @transform_6, window_bounds = array<i64: 1, 2>}, {transform_indices = @transform_7, window_bounds = array<i64: 8, 2>}]} {
    %c0 = arith.constant 0 : index
    %c0_0 = arith.constant 0 : index
    %0 = vector.load %arg1[%c0, %c0_0] : memref<8x2496xbf16, #tpu.memory_space<vmem>>, vector<8x2496xbf16>
    %c0_1 = arith.constant 0 : index
    %c0_2 = arith.constant 0 : index
    %1 = vector.load %arg2[%c0_1, %c0_2] : memref<2496x512xbf16, #tpu.memory_space<vmem>>, vector<2496x512xbf16>
    %cst = arith.constant dense<0.000000e+00> : vector<8x512xf32>
    %2 = tpu.matmul %0, %1, %cst {dimension_numbers = #tpu.dot_dimension_numbers<[1], [0], [0], [1], [0, 0, 1, 1], [], []>} : vector<8x2496xbf16>, vector<2496x512xbf16>, vector<8x512xf32> -> vector<8x512xf32>
    %c0_3 = arith.constant 0 : index
    %c0_4 = arith.constant 0 : index
    %3 = vector.load %arg3[%c0_3, %c0_4] : memref<1x512xf32, #tpu.memory_space<vmem>>, vector<1x512xf32>
    %4 = vector.broadcast %3 : vector<1x512xf32> to vector<8x512xf32>
    %5 = arith.addf %2, %4 : vector<8x512xf32>
    %cst_5 = arith.constant 0.000000e+00 : f32
    %6 = vector.broadcast %cst_5 : f32 to vector<8x512xf32>
    %7 = arith.maximumf %5, %6 : vector<8x512xf32>
    %8 = arith.truncf %7 : vector<8x512xf32> to vector<8x512xbf16>
    %c0_6 = arith.constant 0 : index
    %c0_7 = arith.constant 0 : index
    %9 = vector.load %arg4[%c0_6, %c0_7] : memref<512x256xbf16, #tpu.memory_space<vmem>>, vector<512x256xbf16>
    %cst_8 = arith.constant dense<0.000000e+00> : vector<8x256xf32>
    %10 = tpu.matmul %8, %9, %cst_8 {dimension_numbers = #tpu.dot_dimension_numbers<[1], [0], [0], [1], [0, 0, 1, 1], [], []>} : vector<8x512xbf16>, vector<512x256xbf16>, vector<8x256xf32> -> vector<8x256xf32>
    %c0_9 = arith.constant 0 : index
    %c0_10 = arith.constant 0 : index
    %11 = vector.load %arg5[%c0_9, %c0_10] : memref<1x256xf32, #tpu.memory_space<vmem>>, vector<1x256xf32>
    %12 = vector.broadcast %11 : vector<1x256xf32> to vector<8x256xf32>
    %13 = arith.addf %10, %12 : vector<8x256xf32>
    %cst_11 = arith.constant 0.000000e+00 : f32
    %14 = vector.broadcast %cst_11 : f32 to vector<8x256xf32>
    %15 = arith.maximumf %13, %14 : vector<8x256xf32>
    %16 = arith.truncf %15 : vector<8x256xf32> to vector<8x256xbf16>
    %c0_12 = arith.constant 0 : index
    %c0_13 = arith.constant 0 : index
    %17 = vector.load %arg6[%c0_12, %c0_13] : memref<256x2xbf16, #tpu.memory_space<vmem>>, vector<256x2xbf16>
    %cst_14 = arith.constant dense<0.000000e+00> : vector<8x2xf32>
    %18 = tpu.matmul %16, %17, %cst_14 {dimension_numbers = #tpu.dot_dimension_numbers<[1], [0], [0], [1], [0, 0, 1, 1], [], []>} : vector<8x256xbf16>, vector<256x2xbf16>, vector<8x2xf32> -> vector<8x2xf32>
    %c0_15 = arith.constant 0 : index
    %c0_16 = arith.constant 0 : index
    %19 = vector.load %arg7[%c0_15, %c0_16] : memref<1x2xf32, #tpu.memory_space<vmem>>, vector<1x2xf32>
    %20 = vector.broadcast %19 : vector<1x2xf32> to vector<8x2xf32>
    %21 = arith.addf %18, %20 : vector<8x2xf32>
    %c0_17 = arith.constant 0 : index
    %c0_18 = arith.constant 0 : index
    %22 = vector.load %arg8[%c0_17, %c0_18] : memref<8x2xf32, #tpu.memory_space<vmem>>, vector<8x2xf32>
    tpu.vector_store %arg8[%c0_17, %c0_18], %21 {strides = array<i32>} : memref<8x2xf32, #tpu.memory_space<vmem>>, vector<8x2xf32>,
    return
  }
  func.func @transform_0(%arg0: i32) -> (i32, i32) {
    %c0_i32 = arith.constant 0 : i32
    %c0_i32_0 = arith.constant 0 : i32
    return %arg0, %c0_i32 : i32, i32
  }
  func.func @transform_1(%arg0: i32) -> (i32, i32) {
    %c0_i32 = arith.constant 0 : i32
    %c0_i32_0 = arith.constant 0 : i32
    %c0_i32_1 = arith.constant 0 : i32
    return %c0_i32, %c0_i32_0 : i32, i32
  }
  func.func @transform_2(%arg0: i32) -> (i32, i32) {
    %c0_i32 = arith.constant 0 : i32
    %c0_i32_0 = arith.constant 0 : i32
    %c0_i32_1 = arith.constant 0 : i32
    return %c0_i32, %c0_i32_0 : i32, i32
  }
  func.func @transform_3(%arg0: i32) -> (i32, i32) {
    %c0_i32 = arith.constant 0 : i32
    %c0_i32_0 = arith.constant 0 : i32
    %c0_i32_1 = arith.constant 0 : i32
    return %c0_i32, %c0_i32_0 : i32, i32
  }
  func.func @transform_4(%arg0: i32) -> (i32, i32) {
    %c0_i32 = arith.constant 0 : i32
    %c0_i32_0 = arith.constant 0 : i32
    %c0_i32_1 = arith.constant 0 : i32
    return %c0_i32, %c0_i32_0 : i32, i32
  }
  func.func @transform_5(%arg0: i32) -> (i32, i32) {
    %c0_i32 = arith.constant 0 : i32
    %c0_i32_0 = arith.constant 0 : i32
    %c0_i32_1 = arith.constant 0 : i32
    return %c0_i32, %c0_i32_0 : i32, i32
  }
  func.func @transform_6(%arg0: i32) -> (i32, i32) {
    %c0_i32 = arith.constant 0 : i32
    %c0_i32_0 = arith.constant 0 : i32
    %c0_i32_1 = arith.constant 0 : i32
    return %c0_i32, %c0_i32_0 : i32, i32
  }
  func.func @transform_7(%arg0: i32) -> (i32, i32) {
    %c0_i32 = arith.constant 0 : i32
    %c0_i32_0 = arith.constant 0 : i32
    return %arg0, %c0_i32 : i32, i32
  }
}

</mosaic_0001>

<llo_original>
// kernel: integration_model_forward.1
$region0: #{integration_model_forward.1}
  #allocation0 [shape = 'u32[]', space=smem, size = 0x4, offset = 0x4, fixed_abs, tag = 'smem constant byte address 0x4 - core index']
  #allocation1 [shape = 'u32[144,128]{1,0:T(1,128)}', space=vmem, size = 0x12000, scoped, tag = 'internal scratch']
  %s0 = inlined_call_operand.vmem [shape: bf16[8,2496], index: 0, kind: input, shape index: {}]
  %s1 = inlined_call_operand.vmem [shape: bf16[2496,512], index: 1, kind: input, shape index: {}]
  %s2 = inlined_call_operand.vmem [shape: f32[1,512], index: 2, kind: input, shape index: {}]
  %s3 = inlined_call_operand.vmem [shape: bf16[512,256], index: 3, kind: input, shape index: {}]
  %s4 = inlined_call_operand.vmem [shape: f32[1,256], index: 4, kind: input, shape index: {}]
  %s5 = inlined_call_operand.vmem [shape: bf16[256,2], index: 5, kind: input, shape index: {}]
  %s6 = inlined_call_operand.vmem [shape: f32[1,2], index: 6, kind: input, shape index: {}]
  %s7 = inlined_call_operand.vmem [shape: f32[8,2], index: 7, kind: output, shape index: {}]
  %s8 = sld [smem:[#allocation0]]
  $region38: #{integration_model_forward.1} parent=0
    _
  %s10 = ssub.s32 1, %s8
  %s11 = scalar_select 0, %s10, %s8
  // Predicated region
  $region2: #{integration_model_forward.1} parent=0 // pred_check
    _
  $region3: #{integration_model_forward.1} parent=0 // pred_check_branch
    %13 = sbr.rel (0) target = $region5
  $region4: #{integration_model_forward.1} parent=0 // pred_region
    _
  $region5: #{integration_model_forward.1} parent=0 // pred_fallthru
    _
  // Predicated region
  $region6: #{integration_model_forward.1} parent=0 // pred_check
    _
  $region7: #{integration_model_forward.1} parent=0 // pred_check_branch
    %15 = sbr.rel (0) target = $region9
  $region8: #{integration_model_forward.1} parent=0 // pred_region
    _
  $region9: #{integration_model_forward.1} parent=0 // pred_fallthru
    _
  // Predicated region
  $region10: #{integration_model_forward.1} parent=0 // pred_check
    _
  $region11: #{integration_model_forward.1} parent=0 // pred_check_branch
    %17 = sbr.rel (0) target = $region13
  $region12: #{integration_model_forward.1} parent=0 // pred_region
    _
  $region13: #{integration_model_forward.1} parent=0 // pred_fallthru
    _
  // Predicated region
  $region14: #{integration_model_forward.1} parent=0 // pred_check
    _
  $region15: #{integration_model_forward.1} parent=0 // pred_check_branch
    %19 = sbr.rel (0) target = $region17
  $region16: #{integration_model_forward.1} parent=0 // pred_region
    _
  $region17: #{integration_model_forward.1} parent=0 // pred_fallthru
    _
  // Predicated region
  $region18: #{integration_model_forward.1} parent=0 // pred_check
    _
  $region19: #{integration_model_forward.1} parent=0 // pred_check_branch
    %21 = sbr.rel (0) target = $region21
  $region20: #{integration_model_forward.1} parent=0 // pred_region
    _
  $region21: #{integration_model_forward.1} parent=0 // pred_fallthru
    _
  // Predicated region
  $region22: #{integration_model_forward.1} parent=0 // pred_check
    _
  $region23: #{integration_model_forward.1} parent=0 // pred_check_branch
    %23 = sbr.rel (0) target = $region25
  $region24: #{integration_model_forward.1} parent=0 // pred_region
    _
  $region25: #{integration_model_forward.1} parent=0 // pred_fallthru
    _
  // Predicated region
  $region26: #{integration_model_forward.1} parent=0 // pred_check
    _
  $region27: #{integration_model_forward.1} parent=0 // pred_check_branch
    %25 = sbr.rel (0) target = $region29
  $region28: #{integration_model_forward.1} parent=0 // pred_region
    _
  $region29: #{integration_model_forward.1} parent=0 // pred_fallthru
    _
  %v27 = vld [vmem:[%s0] sm:$0xff]
  %v28 = vld [vmem:[%s0 + $0x8] sm:$0xff]
  %v29 = vld [vmem:[%s0 + $0x10] sm:$0xff]
  %v30 = vld [vmem:[%s0 + $0x18] sm:$0xff]
  %v31 = vld [vmem:[%s0 + $0x20] sm:$0xff]
  %v32 = vld [vmem:[%s0 + $0x28] sm:$0xff]
  %v33 = vld [vmem:[%s0 + $0x30] sm:$0xff]
  %v34 = vld [vmem:[%s0 + $0x38] sm:$0xff]
  %v35 = vld [vmem:[%s0 + $0x40] sm:$0xff]
  %v36 = vld [vmem:[%s0 + $0x48] sm:$0xff]
  %v37 = vld [vmem:[%s1] sm:$0xff]
  %v38 = vld [vmem:[%s1 + $0x8] sm:$0xff]
  %v39 = vld [vmem:[%s1 + $0x10] sm:$0xff]
  %v40 = vld [vmem:[%s1 + $0x18] sm:$0xff]
  %v41 = vld [vmem:[%s1 + $0x20] sm:$0xff]
  %v42 = vld [vmem:[%s1 + $0x28] sm:$0xff]
  %v43 = vld [vmem:[%s1 + $0x30] sm:$0xff]
  %v44 = vld [vmem:[%s1 + $0x38] sm:$0xff]
  %v45 = vld [vmem:[%s1 + $0x40] sm:$0xff]
  %v46 = vld [vmem:[%s1 + $0x48] sm:$0xff]
  %v47 = vld [vmem:[%s1 + $0x50] sm:$0xff]
  %v48 = vld [vmem:[%s1 + $0x58] sm:$0xff]
  %v49 = vld [vmem:[%s1 + $0x60] sm:$0xff]
  %v50 = vld [vmem:[%s1 + $0x68] sm:$0xff]
  %v51 = vld [vmem:[%s1 + $0x70] sm:$0xff]
  %v52 = vld [vmem:[%s1 + $0x78] sm:$0xff]
  %v53 = vld [vmem:[%s1 + $0x80] sm:$0xff]
  %v54 = vld [vmem:[%s1 + $0x88] sm:$0xff]
  %v55 = vld [vmem:[%s1 + $0x90] sm:$0xff]
  %v56 = vld [vmem:[%s1 + $0x98] sm:$0xff]
  %v57 = vld [vmem:[%s1 + $0xa0] sm:$0xff]
  %v58 = vld [vmem:[%s1 + $0xa8] sm:$0xff]
  %v59 = vld [vmem:[%s1 + $0xb0] sm:$0xff]
  %v60 = vld [vmem:[%s1 + $0xb8] sm:$0xff]
  %v61 = vld [vmem:[%s1 + $0xc0] sm:$0xff]
  %v62 = vld [vmem:[%s1 + $0xc8] sm:$0xff]
  %v63 = vld [vmem:[%s1 + $0xd0] sm:$0xff]
  %v64 = vld [vmem:[%s1 + $0xd8] sm:$0xff]
  %v65 = vld [vmem:[%s1 + $0xe0] sm:$0xff]
  %v66 = vld [vmem:[%s1 + $0xe8] sm:$0xff]
  %v67 = vld [vmem:[%s1 + $0xf0] sm:$0xff]
  %v68 = vld [vmem:[%s1 + $0xf8] sm:$0xff]
  %v69 = vld [vmem:[%s1 + $0x100] sm:$0xff]
  %v70 = vld [vmem:[%s1 + $0x108] sm:$0xff]
  %v71 = vld [vmem:[%s1 + $0x110] sm:$0xff]
  %v72 = vld [vmem:[%s1 + $0x118] sm:$0xff]
  %v73 = vld [vmem:[%s1 + $0x120] sm:$0xff]
  %v74 = vld [vmem:[%s1 + $0x128] sm:$0xff]
  %v75 = vld [vmem:[%s1 + $0x130] sm:$0xff]
  %v76 = vld [vmem:[%s1 + $0x138] sm:$0xff]
  %v77 = vld [vmem:[%s1 + $0x140] sm:$0xff]
  %v78 = vld [vmem:[%s1 + $0x148] sm:$0xff]
  %v79 = vld [vmem:[%s1 + $0x150] sm:$0xff]
  %v80 = vld [vmem:[%s1 + $0x158] sm:$0xff]
  %v81 = vld [vmem:[%s1 + $0x160] sm:$0xff]
  %v82 = vld [vmem:[%s1 + $0x168] sm:$0xff]
  %v83 = vld [vmem:[%s1 + $0x170] sm:$0xff]
  %v84 = vld [vmem:[%s1 + $0x178] sm:$0xff]
  %v85 = vld [vmem:[%s1 + $0x180] sm:$0xff]
  %v86 = vld [vmem:[%s1 + $0x188] sm:$0xff]
  %v87 = vld [vmem:[%s1 + $0x190] sm:$0xff]
  %v88 = vld [vmem:[%s1 + $0x198] sm:$0xff]
  %v89 = vld [vmem:[%s1 + $0x1a0] sm:$0xff]
  %v90 = vld [vmem:[%s1 + $0x1a8] sm:$0xff]
  %v91 = vld [vmem:[%s1 + $0x1b0] sm:$0xff]
  %v92 = vld [vmem:[%s1 + $0x1b8] sm:$0xff]
  %v93 = vld [vmem:[%s1 + $0x1c0] sm:$0xff]
  %v94 = vld [vmem:[%s1 + $0x1c8] sm:$0xff]
  %v95 = vld [vmem:[%s1 + $0x1d0] sm:$0xff]
  %v96 = vld [vmem:[%s1 + $0x1d8] sm:$0xff]
  %v97 = vld [vmem:[%s1 + $0x1e0] sm:$0xff]
  %v98 = vld [vmem:[%s1 + $0x1e8] sm:$0xff]
  %v99 = vld [vmem:[%s1 + $0x1f0] sm:$0xff]
  %v100 = vld [vmem:[%s1 + $0x1f8] sm:$0xff]
  %v101 = vld [vmem:[%s1 + $0x200] sm:$0xff]
  %v102 = vld [vmem:[%s1 + $0x208] sm:$0xff]
  %v103 = vld [vmem:[%s1 + $0x210] sm:$0xff]
  %v104 = vld [vmem:[%s1 + $0x218] sm:$0xff]
  %v105 = vld [vmem:[%s1 + $0x220] sm:$0xff]
  %v106 = vld [vmem:[%s1 + $0x228] sm:$0xff]
  %v107 = vld [vmem:[%s1 + $0x230] sm:$0xff]
  %v108 = vld [vmem:[%s1 + $0x238] sm:$0xff]
  %v109 = vld [vmem:[%s1 + $0x240] sm:$0xff]
  %v110 = vld [vmem:[%s1 + $0x248] sm:$0xff]
  %v111 = vld [vmem:[%s1 + $0x250] sm:$0xff]
  %v112 = vld [vmem:[%s1 + $0x258] sm:$0xff]
  %v113 = vld [vmem:[%s1 + $0x260] sm:$0xff]
  %v114 = vld [vmem:[%s1 + $0x268] sm:$0xff]
  %v115 = vld [vmem:[%s1 + $0x270] sm:$0xff]
  %v116 = vld [vmem:[%s1 + $0x278] sm:$0xff]
  %v117 = vld [vmem:[%s1 + $0x280] sm:$0xff]
  %v118 = vld [vmem:[%s1 + $0x288] sm:$0xff]
  %v119 = vld [vmem:[%s1 + $0x290] sm:$0xff]
  %v120 = vld [vmem:[%s1 + $0x298] sm:$0xff]
  %v121 = vld [vmem:[%s1 + $0x2a0] sm:$0xff]
  %v122 = vld [vmem:[%s1 + $0x2a8] sm:$0xff]
  %v123 = vld [vmem:[%s1 + $0x2b0] sm:$0xff]
  %v124 = vld [vmem:[%s1 + $0x2b8] sm:$0xff]
  %v125 = vld [vmem:[%s1 + $0x2c0] sm:$0xff]
  %v126 = vld [vmem:[%s1 + $0x2c8] sm:$0xff]
  %v127 = vld [vmem:[%s1 + $0x2d0] sm:$0xff]
  %v128 = vld [vmem:[%s1 + $0x2d8] sm:$0xff]
  %v129 = vld [vmem:[%s1 + $0x2e0] sm:$0xff]
  %v130 = vld [vmem:[%s1 + $0x2e8] sm:$0xff]
  %v131 = vld [vmem:[%s1 + $0x2f0] sm:$0xff]
  %v132 = vld [vmem:[%s1 + $0x2f8] sm:$0xff]
  %v133 = vld [vmem:[%s1 + $0x300] sm:$0xff]
  %v134 = vld [vmem:[%s1 + $0x308] sm:$0xff]
  %v135 = vld [vmem:[%s1 + $0x310] sm:$0xff]
  %v136 = vld [vmem:[%s1 + $0x318] sm:$0xff]
  %v137 = vld [vmem:[%s1 + $0x320] sm:$0xff]
  %v138 = vld [vmem:[%s1 + $0x328] sm:$0xff]
  %v139 = vld [vmem:[%s1 + $0x330] sm:$0xff]
  %v140 = vld [vmem:[%s1 + $0x338] sm:$0xff]
  %v141 = vld [vmem:[%s1 + $0x340] sm:$0xff]
  %v142 = vld [vmem:[%s1 + $0x348] sm:$0xff]
  %v143 = vld [vmem:[%s1 + $0x350] sm:$0xff]
  %v144 = vld [vmem:[%s1 + $0x358] sm:$0xff]
  %v145 = vld [vmem:[%s1 + $0x360] sm:$0xff]
  %v146 = vld [vmem:[%s1 + $0x368] sm:$0xff]
  %v147 = vld [vmem:[%s1 + $0x370] sm:$0xff]
  %v148 = vld [vmem:[%s1 + $0x378] sm:$0xff]
  %v149 = vld [vmem:[%s1 + $0x380] sm:$0xff]
  %v150 = vld [vmem:[%s1 + $0x388] sm:$0xff]
  %v151 = vld [vmem:[%s1 + $0x390] sm:$0xff]
  %v152 = vld [vmem:[%s1 + $0x398] sm:$0xff]
  %v153 = vld [vmem:[%s1 + $0x3a0] sm:$0xff]
  %v154 = vld [vmem:[%s1 + $0x3a8] sm:$0xff]
  %v155 = vld [vmem:[%s1 + $0x3b0] sm:$0xff]
  %v156 = vld [vmem:[%s1 + $0x3b8] sm:$0xff]
  %v157 = vld [vmem:[%s1 + $0x3c0] sm:$0xff]
  %v158 = vld [vmem:[%s1 + $0x3c8] sm:$0xff]
  %v159 = vld [vmem:[%s1 + $0x3d0] sm:$0xff]
  %v160 = vld [vmem:[%s1 + $0x3d8] sm:$0xff]
  %v161 = vld [vmem:[%s1 + $0x3e0] sm:$0xff]
  %v162 = vld [vmem:[%s1 + $0x3e8] sm:$0xff]
  %v163 = vld [vmem:[%s1 + $0x3f0] sm:$0xff]
  %v164 = vld [vmem:[%s1 + $0x3f8] sm:$0xff]
  %v165 = vld [vmem:[%s1 + $0x400] sm:$0xff]
  %v166 = vld [vmem:[%s1 + $0x408] sm:$0xff]
  %v167 = vld [vmem:[%s1 + $0x410] sm:$0xff]
  %v168 = vld [vmem:[%s1 + $0x418] sm:$0xff]
  %v169 = vld [vmem:[%s1 + $0x420] sm:$0xff]
  %v170 = vld [vmem:[%s1 + $0x428] sm:$0xff]
  %v171 = vld [vmem:[%s1 + $0x430] sm:$0xff]
  %v172 = vld [vmem:[%s1 + $0x438] sm:$0xff]
  %v173 = vld [vmem:[%s1 + $0x440] sm:$0xff]
  %v174 = vld [vmem:[%s1 + $0x448] sm:$0xff]
  %v175 = vld [vmem:[%s1 + $0x450] sm:$0xff]
  %v176 = vld [vmem:[%s1 + $0x458] sm:$0xff]
  %v177 = vld [vmem:[%s1 + $0x460] sm:$0xff]
  %v178 = vld [vmem:[%s1 + $0x468] sm:$0xff]
  %v179 = vld [vmem:[%s1 + $0x470] sm:$0xff]
  %v180 = vld [vmem:[%s1 + $0x478] sm:$0xff]
  %v181 = vld [vmem:[%s1 + $0x480] sm:$0xff]
  %v182 = vld [vmem:[%s1 + $0x488] sm:$0xff]
  %v183 = vld [vmem:[%s1 + $0x490] sm:$0xff]
  %v184 = vld [vmem:[%s1 + $0x498] sm:$0xff]
  %v185 = vld [vmem:[%s1 + $0x4a0] sm:$0xff]
  %v186 = vld [vmem:[%s1 + $0x4a8] sm:$0xff]
  %v187 = vld [vmem:[%s1 + $0x4b0] sm:$0xff]
  %v188 = vld [vmem:[%s1 + $0x4b8] sm:$0xff]
  %v189 = vld [vmem:[%s1 + $0x4c0] sm:$0xff]
  %v190 = vld [vmem:[%s1 + $0x4c8] sm:$0xff]
  %v191 = vld [vmem:[%s1 + $0x4d0] sm:$0xff]
  %v192 = vld [vmem:[%s1 + $0x4d8] sm:$0xff]
  %v193 = vld [vmem:[%s1 + $0x4e0] sm:$0xff]
  %v194 = vld [vmem:[%s1 + $0x4e8] sm:$0xff]
  %v195 = vld [vmem:[%s1 + $0x4f0] sm:$0xff]
  %v196 = vld [vmem:[%s1 + $0x4f8] sm:$0xff]
  %v197 = vld [vmem:[%s1 + $0x500] sm:$0xff]
  %v198 = vld [vmem:[%s1 + $0x508] sm:$0xff]
  %v199 = vld [vmem:[%s1 + $0x510] sm:$0xff]
  %v200 = vld [vmem:[%s1 + $0x518] sm:$0xff]
  %v201 = vld [vmem:[%s1 + $0x520] sm:$0xff]
  %v202 = vld [vmem:[%s1 + $0x528] sm:$0xff]
  %v203 = vld [vmem:[%s1 + $0x530] sm:$0xff]
  %v204 = vld [vmem:[%s1 + $0x538] sm:$0xff]
  %v205 = vld [vmem:[%s1 + $0x540] sm:$0xff]
  %v206 = vld [vmem:[%s1 + $0x548] sm:$0xff]
  %v207 = vld [vmem:[%s1 + $0x550] sm:$0xff]
  %v208 = vld [vmem:[%s1 + $0x558] sm:$0xff]
  %v209 = vld [vmem:[%s1 + $0x560] sm:$0xff]
  %v210 = vld [vmem:[%s1 + $0x568] sm:$0xff]
  %v211 = vld [vmem:[%s1 + $0x570] sm:$0xff]
  %v212 = vld [vmem:[%s1 + $0x578] sm:$0xff]
  %v213 = vld [vmem:[%s1 + $0x580] sm:$0xff]
  %v214 = vld [vmem:[%s1 + $0x588] sm:$0xff]
  %v215 = vld [vmem:[%s1 + $0x590] sm:$0xff]
  %v216 = vld [vmem:[%s1 + $0x598] sm:$0xff]
  %v217 = vld [vmem:[%s1 + $0x5a0] sm:$0xff]
  %v218 = vld [vmem:[%s1 + $0x5a8] sm:$0xff]
  %v219 = vld [vmem:[%s1 + $0x5b0] sm:$0xff]
  %v220 = vld [vmem:[%s1 + $0x5b8] sm:$0xff]
  %v221 = vld [vmem:[%s1 + $0x5c0] sm:$0xff]
  %v222 = vld [vmem:[%s1 + $0x5c8] sm:$0xff]
  %v223 = vld [vmem:[%s1 + $0x5d0] sm:$0xff]
  %v224 = vld [vmem:[%s1 + $0x5d8] sm:$0xff]
  %v225 = vld [vmem:[%s1 + $0x5e0] sm:$0xff]
  %v226 = vld [vmem:[%s1 + $0x5e8] sm:$0xff]
  %v227 = vld [vmem:[%s1 + $0x5f0] sm:$0xff]
  %v228 = vld [vmem:[%s1 + $0x5f8] sm:$0xff]
  %v229 = vld [vmem:[%s1 + $0x600] sm:$0xff]
  %v230 = vld [vmem:[%s1 + $0x608] sm:$0xff]
  %v231 = vld [vmem:[%s1 + $0x610] sm:$0xff]
  %v232 = vld [vmem:[%s1 + $0x618] sm:$0xff]
  %v233 = vld [vmem:[%s1 + $0x620] sm:$0xff]
  %v234 = vld [vmem:[%s1 + $0x628] sm:$0xff]
  %v235 = vld [vmem:[%s1 + $0x630] sm:$0xff]
  %v236 = vld [vmem:[%s1 + $0x638] sm:$0xff]
  %v237 = vld [vmem:[%s1 + $0x640] sm:$0xff]
  %v238 = vld [vmem:[%s1 + $0x648] sm:$0xff]
  %v239 = vld [vmem:[%s1 + $0x650] sm:$0xff]
  %v240 = vld [vmem:[%s1 + $0x658] sm:$0xff]
  %v241 = vld [vmem:[%s1 + $0x660] sm:$0xff]
  %v242 = vld [vmem:[%s1 + $0x668] sm:$0xff]
  %v243 = vld [vmem:[%s1 + $0x670] sm:$0xff]
  %v244 = vld [vmem:[%s1 + $0x678] sm:$0xff]
  %v245 = vld [vmem:[%s1 + $0x680] sm:$0xff]
  %v246 = vld [vmem:[%s1 + $0x688] sm:$0xff]
  %v247 = vld [vmem:[%s1 + $0x690] sm:$0xff]
  %v248 = vld [vmem:[%s1 + $0x698] sm:$0xff]
  %v249 = vld [vmem:[%s1 + $0x6a0] sm:$0xff]
  %v250 = vld [vmem:[%s1 + $0x6a8] sm:$0xff]
  %v251 = vld [vmem:[%s1 + $0x6b0] sm:$0xff]
  %v252 = vld [vmem:[%s1 + $0x6b8] sm:$0xff]
  %v253 = vld [vmem:[%s1 + $0x6c0] sm:$0xff]
  %v254 = vld [vmem:[%s1 + $0x6c8] sm:$0xff]
  %v255 = vld [vmem:[%s1 + $0x6d0] sm:$0xff]
  %v256 = vld [vmem:[%s1 + $0x6d8] sm:$0xff]
  %v257 = vld [vmem:[%s1 + $0x6e0] sm:$0xff]
  %v258 = vld [vmem:[%s1 + $0x6e8] sm:$0xff]
  %v259 = vld [vmem:[%s1 + $0x6f0] sm:$0xff]
  %v260 = vld [vmem:[%s1 + $0x6f8] sm:$0xff]
  %v261 = vld [vmem:[%s1 + $0x700] sm:$0xff]
  %v262 = vld [vmem:[%s1 + $0x708] sm:$0xff]
  %v263 = vld [vmem:[%s1 + $0x710] sm:$0xff]
  %v264 = vld [vmem:[%s1 + $0x718] sm:$0xff]
  %v265 = vld [vmem:[%s1 + $0x720] sm:$0xff]
  %v266 = vld [vmem:[%s1 + $0x728] sm:$0xff]
  %v267 = vld [vmem:[%s1 + $0x730] sm:$0xff]
  %v268 = vld [vmem:[%s1 + $0x738] sm:$0xff]
  %v269 = vld [vmem:[%s1 + $0x740] sm:$0xff]
  %v270 = vld [vmem:[%s1 + $0x748] sm:$0xff]
  %v271 = vld [vmem:[%s1 + $0x750] sm:$0xff]
  %v272 = vld [vmem:[%s1 + $0x758] sm:$0xff]
  %v273 = vld [vmem:[%s1 + $0x760] sm:$0xff]
  %v274 = vld [vmem:[%s1 + $0x768] sm:$0xff]
  %v275 = vld [vmem:[%s1 + $0x770] sm:$0xff]
  %v276 = vld [vmem:[%s1 + $0x778] sm:$0xff]
  %v277 = vld [vmem:[%s1 + $0x780] sm:$0xff]
  %v278 = vld [vmem:[%s1 + $0x788] sm:$0xff]
  %v279 = vld [vmem:[%s1 + $0x790] sm:$0xff]
  %v280 = vld [vmem:[%s1 + $0x798] sm:$0xff]
  %v281 = vld [vmem:[%s1 + $0x7a0] sm:$0xff]
  %v282 = vld [vmem:[%s1 + $0x7a8] sm:$0xff]
  %v283 = vld [vmem:[%s1 + $0x7b0] sm:$0xff]
  %v284 = vld [vmem:[%s1 + $0x7b8] sm:$0xff]
  %v285 = vld [vmem:[%s1 + $0x7c0] sm:$0xff]
  %v286 = vld [vmem:[%s1 + $0x7c8] sm:$0xff]
  %v287 = vld [vmem:[%s1 + $0x7d0] sm:$0xff]
  %v288 = vld [vmem:[%s1 + $0x7d8] sm:$0xff]
  %v289 = vld [vmem:[%s1 + $0x7e0] sm:$0xff]
  %v290 = vld [vmem:[%s1 + $0x7e8] sm:$0xff]
  %v291 = vld [vmem:[%s1 + $0x7f0] sm:$0xff]
  %v292 = vld [vmem:[%s1 + $0x7f8] sm:$0xff]
  %v293 = vld [vmem:[%s1 + $0x800] sm:$0xff]
  %v294 = vld [vmem:[%s1 + $0x808] sm:$0xff]
  %v295 = vld [vmem:[%s1 + $0x810] sm:$0xff]
  %v296 = vld [vmem:[%s1 + $0x818] sm:$0xff]
  %v297 = vld [vmem:[%s1 + $0x820] sm:$0xff]
  %v298 = vld [vmem:[%s1 + $0x828] sm:$0xff]
  %v299 = vld [vmem:[%s1 + $0x830] sm:$0xff]
  %v300 = vld [vmem:[%s1 + $0x838] sm:$0xff]
  %v301 = vld [vmem:[%s1 + $0x840] sm:$0xff]
  %v302 = vld [vmem:[%s1 + $0x848] sm:$0xff]
  %v303 = vld [vmem:[%s1 + $0x850] sm:$0xff]
  %v304 = vld [vmem:[%s1 + $0x858] sm:$0xff]
  %v305 = vld [vmem:[%s1 + $0x860] sm:$0xff]
  %v306 = vld [vmem:[%s1 + $0x868] sm:$0xff]
  %v307 = vld [vmem:[%s1 + $0x870] sm:$0xff]
  %v308 = vld [vmem:[%s1 + $0x878] sm:$0xff]
  %v309 = vld [vmem:[%s1 + $0x880] sm:$0xff]
  %v310 = vld [vmem:[%s1 + $0x888] sm:$0xff]
  %v311 = vld [vmem:[%s1 + $0x890] sm:$0xff]
  %v312 = vld [vmem:[%s1 + $0x898] sm:$0xff]
  %v313 = vld [vmem:[%s1 + $0x8a0] sm:$0xff]
  %v314 = vld [vmem:[%s1 + $0x8a8] sm:$0xff]
  %v315 = vld [vmem:[%s1 + $0x8b0] sm:$0xff]
  %v316 = vld [vmem:[%s1 + $0x8b8] sm:$0xff]
  %v317 = vld [vmem:[%s1 + $0x8c0] sm:$0xff]
  %v318 = vld [vmem:[%s1 + $0x8c8] sm:$0xff]
  %v319 = vld [vmem:[%s1 + $0x8d0] sm:$0xff]
  %v320 = vld [vmem:[%s1 + $0x8d8] sm:$0xff]
  %v321 = vld [vmem:[%s1 + $0x8e0] sm:$0xff]
  %v322 = vld [vmem:[%s1 + $0x8e8] sm:$0xff]
  %v323 = vld [vmem:[%s1 + $0x8f0] sm:$0xff]
  %v324 = vld [vmem:[%s1 + $0x8f8] sm:$0xff]
  %v325 = vld [vmem:[%s1 + $0x900] sm:$0xff]
  %v326 = vld [vmem:[%s1 + $0x908] sm:$0xff]
  %v327 = vld [vmem:[%s1 + $0x910] sm:$0xff]
  %v328 = vld [vmem:[%s1 + $0x918] sm:$0xff]
  %v329 = vld [vmem:[%s1 + $0x920] sm:$0xff]
  %v330 = vld [vmem:[%s1 + $0x928] sm:$0xff]
  %v331 = vld [vmem:[%s1 + $0x930] sm:$0xff]
  %v332 = vld [vmem:[%s1 + $0x938] sm:$0xff]
  %v333 = vld [vmem:[%s1 + $0x940] sm:$0xff]
  %v334 = vld [vmem:[%s1 + $0x948] sm:$0xff]
  %v335 = vld [vmem:[%s1 + $0x950] sm:$0xff]
  %v336 = vld [vmem:[%s1 + $0x958] sm:$0xff]
  %v337 = vld [vmem:[%s1 + $0x960] sm:$0xff]
  %v338 = vld [vmem:[%s1 + $0x968] sm:$0xff]
  %v339 = vld [vmem:[%s1 + $0x970] sm:$0xff]
  %v340 = vld [vmem:[%s1 + $0x978] sm:$0xff]
  %v341 = vld [vmem:[%s1 + $0x980] sm:$0xff]
  %v342 = vld [vmem:[%s1 + $0x988] sm:$0xff]
  %v343 = vld [vmem:[%s1 + $0x990] sm:$0xff]
  %v344 = vld [vmem:[%s1 + $0x998] sm:$0xff]
  %v345 = vld [vmem:[%s1 + $0x9a0] sm:$0xff]
  %v346 = vld [vmem:[%s1 + $0x9a8] sm:$0xff]
  %v347 = vld [vmem:[%s1 + $0x9b0] sm:$0xff]
  %v348 = vld [vmem:[%s1 + $0x9b8] sm:$0xff]
  %v349 = vld [vmem:[%s1 + $0x9c0] sm:$0xff]
  %v350 = vld [vmem:[%s1 + $0x9c8] sm:$0xff]
  %v351 = vld [vmem:[%s1 + $0x9d0] sm:$0xff]
  %v352 = vld [vmem:[%s1 + $0x9d8] sm:$0xff]
  %v353 = vld [vmem:[%s1 + $0x9e0] sm:$0xff]
  %v354 = vld [vmem:[%s1 + $0x9e8] sm:$0xff]
  %v355 = vld [vmem:[%s1 + $0x9f0] sm:$0xff]
  %v356 = vld [vmem:[%s1 + $0x9f8] sm:$0xff]
  %v357 = vld [vmem:[%s1 + $0xa00] sm:$0xff]
  %v358 = vld [vmem:[%s1 + $0xa08] sm:$0xff]
  %v359 = vld [vmem:[%s1 + $0xa10] sm:$0xff]
  %v360 = vld [vmem:[%s1 + $0xa18] sm:$0xff]
  %v361 = vld [vmem:[%s1 + $0xa20] sm:$0xff]
  %v362 = vld [vmem:[%s1 + $0xa28] sm:$0xff]
  %v363 = vld [vmem:[%s1 + $0xa30] sm:$0xff]
  %v364 = vld [vmem:[%s1 + $0xa38] sm:$0xff]
  %v365 = vld [vmem:[%s1 + $0xa40] sm:$0xff]
  %v366 = vld [vmem:[%s1 + $0xa48] sm:$0xff]
  %v367 = vld [vmem:[%s1 + $0xa50] sm:$0xff]
  %v368 = vld [vmem:[%s1 + $0xa58] sm:$0xff]
  %v369 = vld [vmem:[%s1 + $0xa60] sm:$0xff]
  %v370 = vld [vmem:[%s1 + $0xa68] sm:$0xff]
  %v371 = vld [vmem:[%s1 + $0xa70] sm:$0xff]
  %v372 = vld [vmem:[%s1 + $0xa78] sm:$0xff]
  %v373 = vld [vmem:[%s1 + $0xa80] sm:$0xff]
  %v374 = vld [vmem:[%s1 + $0xa88] sm:$0xff]
  %v375 = vld [vmem:[%s1 + $0xa90] sm:$0xff]
  %v376 = vld [vmem:[%s1 + $0xa98] sm:$0xff]
  %v377 = vld [vmem:[%s1 + $0xaa0] sm:$0xff]
  %v378 = vld [vmem:[%s1 + $0xaa8] sm:$0xff]
  %v379 = vld [vmem:[%s1 + $0xab0] sm:$0xff]
  %v380 = vld [vmem:[%s1 + $0xab8] sm:$0xff]
  %v381 = vld [vmem:[%s1 + $0xac0] sm:$0xff]
  %v382 = vld [vmem:[%s1 + $0xac8] sm:$0xff]
  %v383 = vld [vmem:[%s1 + $0xad0] sm:$0xff]
  %v384 = vld [vmem:[%s1 + $0xad8] sm:$0xff]
  %v385 = vld [vmem:[%s1 + $0xae0] sm:$0xff]
  %v386 = vld [vmem:[%s1 + $0xae8] sm:$0xff]
  %v387 = vld [vmem:[%s1 + $0xaf0] sm:$0xff]
  %v388 = vld [vmem:[%s1 + $0xaf8] sm:$0xff]
  %v389 = vld [vmem:[%s1 + $0xb00] sm:$0xff]
  %v390 = vld [vmem:[%s1 + $0xb08] sm:$0xff]
  %v391 = vld [vmem:[%s1 + $0xb10] sm:$0xff]
  %v392 = vld [vmem:[%s1 + $0xb18] sm:$0xff]
  %v393 = vld [vmem:[%s1 + $0xb20] sm:$0xff]
  %v394 = vld [vmem:[%s1 + $0xb28] sm:$0xff]
  %v395 = vld [vmem:[%s1 + $0xb30] sm:$0xff]
  %v396 = vld [vmem:[%s1 + $0xb38] sm:$0xff]
  %v397 = vld [vmem:[%s1 + $0xb40] sm:$0xff]
  %v398 = vld [vmem:[%s1 + $0xb48] sm:$0xff]
  %v399 = vld [vmem:[%s1 + $0xb50] sm:$0xff]
  %v400 = vld [vmem:[%s1 + $0xb58] sm:$0xff]
  %v401 = vld [vmem:[%s1 + $0xb60] sm:$0xff]
  %v402 = vld [vmem:[%s1 + $0xb68] sm:$0xff]
  %v403 = vld [vmem:[%s1 + $0xb70] sm:$0xff]
  %v404 = vld [vmem:[%s1 + $0xb78] sm:$0xff]
  %v405 = vld [vmem:[%s1 + $0xb80] sm:$0xff]
  %v406 = vld [vmem:[%s1 + $0xb88] sm:$0xff]
  %v407 = vld [vmem:[%s1 + $0xb90] sm:$0xff]
  %v408 = vld [vmem:[%s1 + $0xb98] sm:$0xff]
  %v409 = vld [vmem:[%s1 + $0xba0] sm:$0xff]
  %v410 = vld [vmem:[%s1 + $0xba8] sm:$0xff]
  %v411 = vld [vmem:[%s1 + $0xbb0] sm:$0xff]
  %v412 = vld [vmem:[%s1 + $0xbb8] sm:$0xff]
  %v413 = vld [vmem:[%s1 + $0xbc0] sm:$0xff]
  %v414 = vld [vmem:[%s1 + $0xbc8] sm:$0xff]
  %v415 = vld [vmem:[%s1 + $0xbd0] sm:$0xff]
  %v416 = vld [vmem:[%s1 + $0xbd8] sm:$0xff]
  %v417 = vld [vmem:[%s1 + $0xbe0] sm:$0xff]
  %v418 = vld [vmem:[%s1 + $0xbe8] sm:$0xff]
  %v419 = vld [vmem:[%s1 + $0xbf0] sm:$0xff]
  %v420 = vld [vmem:[%s1 + $0xbf8] sm:$0xff]
  %v421 = vld [vmem:[%s1 + $0xc00] sm:$0xff]
  %v422 = vld [vmem:[%s1 + $0xc08] sm:$0xff]
  %v423 = vld [vmem:[%s1 + $0xc10] sm:$0xff]
  %v424 = vld [vmem:[%s1 + $0xc18] sm:$0xff]
  %v425 = vld [vmem:[%s1 + $0xc20] sm:$0xff]
  %v426 = vld [vmem:[%s1 + $0xc28] sm:$0xff]
  %v427 = vld [vmem:[%s1 + $0xc30] sm:$0xff]
  %v428 = vld [vmem:[%s1 + $0xc38] sm:$0xff]
  %v429 = vld [vmem:[%s1 + $0xc40] sm:$0xff]
  %v430 = vld [vmem:[%s1 + $0xc48] sm:$0xff]
  %v431 = vld [vmem:[%s1 + $0xc50] sm:$0xff]
  %v432 = vld [vmem:[%s1 + $0xc58] sm:$0xff]
  %v433 = vld [vmem:[%s1 + $0xc60] sm:$0xff]
  %v434 = vld [vmem:[%s1 + $0xc68] sm:$0xff]
  %v435 = vld [vmem:[%s1 + $0xc70] sm:$0xff]
  %v436 = vld [vmem:[%s1 + $0xc78] sm:$0xff]
  %v437 = vld [vmem:[%s1 + $0xc80] sm:$0xff]
  %v438 = vld [vmem:[%s1 + $0xc88] sm:$0xff]
  %v439 = vld [vmem:[%s1 + $0xc90] sm:$0xff]
  %v440 = vld [vmem:[%s1 + $0xc98] sm:$0xff]
  %v441 = vld [vmem:[%s1 + $0xca0] sm:$0xff]
  %v442 = vld [vmem:[%s1 + $0xca8] sm:$0xff]
  %v443 = vld [vmem:[%s1 + $0xcb0] sm:$0xff]
  %v444 = vld [vmem:[%s1 + $0xcb8] sm:$0xff]
  %v445 = vld [vmem:[%s1 + $0xcc0] sm:$0xff]
  %v446 = vld [vmem:[%s1 + $0xcc8] sm:$0xff]
  %v447 = vld [vmem:[%s1 + $0xcd0] sm:$0xff]
  %v448 = vld [vmem:[%s1 + $0xcd8] sm:$0xff]
  %v449 = vld [vmem:[%s1 + $0xce0] sm:$0xff]
  %v450 = vld [vmem:[%s1 + $0xce8] sm:$0xff]
  %v451 = vld [vmem:[%s1 + $0xcf0] sm:$0xff]
  %v452 = vld [vmem:[%s1 + $0xcf8] sm:$0xff]
  %v453 = vld [vmem:[%s1 + $0xd00] sm:$0xff]
  %v454 = vld [vmem:[%s1 + $0xd08] sm:$0xff]
  %v455 = vld [vmem:[%s1 + $0xd10] sm:$0xff]
  %v456 = vld [vmem:[%s1 + $0xd18] sm:$0xff]
  %v457 = vld [vmem:[%s1 + $0xd20] sm:$0xff]
  %v458 = vld [vmem:[%s1 + $0xd28] sm:$0xff]
  %v459 = vld [vmem:[%s1 + $0xd30] sm:$0xff]
  %v460 = vld [vmem:[%s1 + $0xd38] sm:$0xff]
  %v461 = vld [vmem:[%s1 + $0xd40] sm:$0xff]
  %v462 = vld [vmem:[%s1 + $0xd48] sm:$0xff]
  %v463 = vld [vmem:[%s1 + $0xd50] sm:$0xff]
  %v464 = vld [vmem:[%s1 + $0xd58] sm:$0xff]
  %v465 = vld [vmem:[%s1 + $0xd60] sm:$0xff]
  %v466 = vld [vmem:[%s1 + $0xd68] sm:$0xff]
  %v467 = vld [vmem:[%s1 + $0xd70] sm:$0xff]
  %v468 = vld [vmem:[%s1 + $0xd78] sm:$0xff]
  %v469 = vld [vmem:[%s1 + $0xd80] sm:$0xff]
  %v470 = vld [vmem:[%s1 + $0xd88] sm:$0xff]
  %v471 = vld [vmem:[%s1 + $0xd90] sm:$0xff]
  %v472 = vld [vmem:[%s1 + $0xd98] sm:$0xff]
  %v473 = vld [vmem:[%s1 + $0xda0] sm:$0xff]
  %v474 = vld [vmem:[%s1 + $0xda8] sm:$0xff]
  %v475 = vld [vmem:[%s1 + $0xdb0] sm:$0xff]
  %v476 = vld [vmem:[%s1 + $0xdb8] sm:$0xff]
  %v477 = vld [vmem:[%s1 + $0xdc0] sm:$0xff]
  %v478 = vld [vmem:[%s1 + $0xdc8] sm:$0xff]
  %v479 = vld [vmem:[%s1 + $0xdd0] sm:$0xff]
  %v480 = vld [vmem:[%s1 + $0xdd8] sm:$0xff]
  %v481 = vld [vmem:[%s1 + $0xde0] sm:$0xff]
  %v482 = vld [vmem:[%s1 + $0xde8] sm:$0xff]
  %v483 = vld [vmem:[%s1 + $0xdf0] sm:$0xff]
  %v484 = vld [vmem:[%s1 + $0xdf8] sm:$0xff]
  %v485 = vld [vmem:[%s1 + $0xe00] sm:$0xff]
  %v486 = vld [vmem:[%s1 + $0xe08] sm:$0xff]
  %v487 = vld [vmem:[%s1 + $0xe10] sm:$0xff]
  %v488 = vld [vmem:[%s1 + $0xe18] sm:$0xff]
  %v489 = vld [vmem:[%s1 + $0xe20] sm:$0xff]
  %v490 = vld [vmem:[%s1 + $0xe28] sm:$0xff]
  %v491 = vld [vmem:[%s1 + $0xe30] sm:$0xff]
  %v492 = vld [vmem:[%s1 + $0xe38] sm:$0xff]
  %v493 = vld [vmem:[%s1 + $0xe40] sm:$0xff]
  %v494 = vld [vmem:[%s1 + $0xe48] sm:$0xff]
  %v495 = vld [vmem:[%s1 + $0xe50] sm:$0xff]
  %v496 = vld [vmem:[%s1 + $0xe58] sm:$0xff]
  %v497 = vld [vmem:[%s1 + $0xe60] sm:$0xff]
  %v498 = vld [vmem:[%s1 + $0xe68] sm:$0xff]
  %v499 = vld [vmem:[%s1 + $0xe70] sm:$0xff]
  %v500 = vld [vmem:[%s1 + $0xe78] sm:$0xff]
  %v501 = vld [vmem:[%s1 + $0xe80] sm:$0xff]
  %v502 = vld [vmem:[%s1 + $0xe88] sm:$0xff]
  %v503 = vld [vmem:[%s1 + $0xe90] sm:$0xff]
  %v504 = vld [vmem:[%s1 + $0xe98] sm:$0xff]
  %v505 = vld [vmem:[%s1 + $0xea0] sm:$0xff]
  %v506 = vld [vmem:[%s1 + $0xea8] sm:$0xff]
  %v507 = vld [vmem:[%s1 + $0xeb0] sm:$0xff]
  %v508 = vld [vmem:[%s1 + $0xeb8] sm:$0xff]
  %v509 = vld [vmem:[%s1 + $0xec0] sm:$0xff]
  %v510 = vld [vmem:[%s1 + $0xec8] sm:$0xff]
  %v511 = vld [vmem:[%s1 + $0xed0] sm:$0xff]
  %v512 = vld [vmem:[%s1 + $0xed8] sm:$0xff]
  %v513 = vld [vmem:[%s1 + $0xee0] sm:$0xff]
  %v514 = vld [vmem:[%s1 + $0xee8] sm:$0xff]
  %v515 = vld [vmem:[%s1 + $0xef0] sm:$0xff]
  %v516 = vld [vmem:[%s1 + $0xef8] sm:$0xff]
  %v517 = vld [vmem:[%s1 + $0xf00] sm:$0xff]
  %v518 = vld [vmem:[%s1 + $0xf08] sm:$0xff]
  %v519 = vld [vmem:[%s1 + $0xf10] sm:$0xff]
  %v520 = vld [vmem:[%s1 + $0xf18] sm:$0xff]
  %v521 = vld [vmem:[%s1 + $0xf20] sm:$0xff]
  %v522 = vld [vmem:[%s1 + $0xf28] sm:$0xff]
  %v523 = vld [vmem:[%s1 + $0xf30] sm:$0xff]
  %v524 = vld [vmem:[%s1 + $0xf38] sm:$0xff]
  %v525 = vld [vmem:[%s1 + $0xf40] sm:$0xff]
  %v526 = vld [vmem:[%s1 + $0xf48] sm:$0xff]
  %v527 = vld [vmem:[%s1 + $0xf50] sm:$0xff]
  %v528 = vld [vmem:[%s1 + $0xf58] sm:$0xff]
  %v529 = vld [vmem:[%s1 + $0xf60] sm:$0xff]
  %v530 = vld [vmem:[%s1 + $0xf68] sm:$0xff]
  %v531 = vld [vmem:[%s1 + $0xf70] sm:$0xff]
  %v532 = vld [vmem:[%s1 + $0xf78] sm:$0xff]
  %v533 = vld [vmem:[%s1 + $0xf80] sm:$0xff]
  %v534 = vld [vmem:[%s1 + $0xf88] sm:$0xff]
  %v535 = vld [vmem:[%s1 + $0xf90] sm:$0xff]
  %v536 = vld [vmem:[%s1 + $0xf98] sm:$0xff]
  %v537 = vld [vmem:[%s1 + $0xfa0] sm:$0xff]
  %v538 = vld [vmem:[%s1 + $0xfa8] sm:$0xff]
  %v539 = vld [vmem:[%s1 + $0xfb0] sm:$0xff]
  %v540 = vld [vmem:[%s1 + $0xfb8] sm:$0xff]
  %v541 = vld [vmem:[%s1 + $0xfc0] sm:$0xff]
  %v542 = vld [vmem:[%s1 + $0xfc8] sm:$0xff]
  %v543 = vld [vmem:[%s1 + $0xfd0] sm:$0xff]
  %v544 = vld [vmem:[%s1 + $0xfd8] sm:$0xff]
  %v545 = vld [vmem:[%s1 + $0xfe0] sm:$0xff]
  %v546 = vld [vmem:[%s1 + $0xfe8] sm:$0xff]
  %v547 = vld [vmem:[%s1 + $0xff0] sm:$0xff]
  %v548 = vld [vmem:[%s1 + $0xff8] sm:$0xff]
  %v549 = vld [vmem:[%s1 + $0x1000] sm:$0xff]
  %v550 = vld [vmem:[%s1 + $0x1008] sm:$0xff]
  %v551 = vld [vmem:[%s1 + $0x1010] sm:$0xff]
  %v552 = vld [vmem:[%s1 + $0x1018] sm:$0xff]
  %v553 = vld [vmem:[%s1 + $0x1020] sm:$0xff]
  %v554 = vld [vmem:[%s1 + $0x1028] sm:$0xff]
  %v555 = vld [vmem:[%s1 + $0x1030] sm:$0xff]
  %v556 = vld [vmem:[%s1 + $0x1038] sm:$0xff]
  %v557 = vld [vmem:[%s1 + $0x1040] sm:$0xff]
  %v558 = vld [vmem:[%s1 + $0x1048] sm:$0xff]
  %v559 = vld [vmem:[%s1 + $0x1050] sm:$0xff]
  %v560 = vld [vmem:[%s1 + $0x1058] sm:$0xff]
  %v561 = vld [vmem:[%s1 + $0x1060] sm:$0xff]
  %v562 = vld [vmem:[%s1 + $0x1068] sm:$0xff]
  %v563 = vld [vmem:[%s1 + $0x1070] sm:$0xff]
  %v564 = vld [vmem:[%s1 + $0x1078] sm:$0xff]
  %v565 = vld [vmem:[%s1 + $0x1080] sm:$0xff]
  %v566 = vld [vmem:[%s1 + $0x1088] sm:$0xff]
  %v567 = vld [vmem:[%s1 + $0x1090] sm:$0xff]
  %v568 = vld [vmem:[%s1 + $0x1098] sm:$0xff]
  %v569 = vld [vmem:[%s1 + $0x10a0] sm:$0xff]
  %v570 = vld [vmem:[%s1 + $0x10a8] sm:$0xff]
  %v571 = vld [vmem:[%s1 + $0x10b0] sm:$0xff]
  %v572 = vld [vmem:[%s1 + $0x10b8] sm:$0xff]
  %v573 = vld [vmem:[%s1 + $0x10c0] sm:$0xff]
  %v574 = vld [vmem:[%s1 + $0x10c8] sm:$0xff]
  %v575 = vld [vmem:[%s1 + $0x10d0] sm:$0xff]
  %v576 = vld [vmem:[%s1 + $0x10d8] sm:$0xff]
  %v577 = vld [vmem:[%s1 + $0x10e0] sm:$0xff]
  %v578 = vld [vmem:[%s1 + $0x10e8] sm:$0xff]
  %v579 = vld [vmem:[%s1 + $0x10f0] sm:$0xff]
  %v580 = vld [vmem:[%s1 + $0x10f8] sm:$0xff]
  %v581 = vld [vmem:[%s1 + $0x1100] sm:$0xff]
  %v582 = vld [vmem:[%s1 + $0x1108] sm:$0xff]
  %v583 = vld [vmem:[%s1 + $0x1110] sm:$0xff]
  %v584 = vld [vmem:[%s1 + $0x1118] sm:$0xff]
  %v585 = vld [vmem:[%s1 + $0x1120] sm:$0xff]
  %v586 = vld [vmem:[%s1 + $0x1128] sm:$0xff]
  %v587 = vld [vmem:[%s1 + $0x1130] sm:$0xff]
  %v588 = vld [vmem:[%s1 + $0x1138] sm:$0xff]
  %v589 = vld [vmem:[%s1 + $0x1140] sm:$0xff]
  %v590 = vld [vmem:[%s1 + $0x1148] sm:$0xff]
  %v591 = vld [vmem:[%s1 + $0x1150] sm:$0xff]
  %v592 = vld [vmem:[%s1 + $0x1158] sm:$0xff]
  %v593 = vld [vmem:[%s1 + $0x1160] sm:$0xff]
  %v594 = vld [vmem:[%s1 + $0x1168] sm:$0xff]
  %v595 = vld [vmem:[%s1 + $0x1170] sm:$0xff]
  %v596 = vld [vmem:[%s1 + $0x1178] sm:$0xff]
  %v597 = vld [vmem:[%s1 + $0x1180] sm:$0xff]
  %v598 = vld [vmem:[%s1 + $0x1188] sm:$0xff]
  %v599 = vld [vmem:[%s1 + $0x1190] sm:$0xff]
  %v600 = vld [vmem:[%s1 + $0x1198] sm:$0xff]
  %v601 = vld [vmem:[%s1 + $0x11a0] sm:$0xff]
  %v602 = vld [vmem:[%s1 + $0x11a8] sm:$0xff]
  %v603 = vld [vmem:[%s1 + $0x11b0] sm:$0xff]
  %v604 = vld [vmem:[%s1 + $0x11b8] sm:$0xff]
  %v605 = vld [vmem:[%s1 + $0x11c0] sm:$0xff]
  %v606 = vld [vmem:[%s1 + $0x11c8] sm:$0xff]
  %v607 = vld [vmem:[%s1 + $0x11d0] sm:$0xff]
  %v608 = vld [vmem:[%s1 + $0x11d8] sm:$0xff]
  %v609 = vld [vmem:[%s1 + $0x11e0] sm:$0xff]
  %v610 = vld [vmem:[%s1 + $0x11e8] sm:$0xff]
  %v611 = vld [vmem:[%s1 + $0x11f0] sm:$0xff]
  %v612 = vld [vmem:[%s1 + $0x11f8] sm:$0xff]
  %v613 = vld [vmem:[%s1 + $0x1200] sm:$0xff]
  %v614 = vld [vmem:[%s1 + $0x1208] sm:$0xff]
  %v615 = vld [vmem:[%s1 + $0x1210] sm:$0xff]
  %v616 = vld [vmem:[%s1 + $0x1218] sm:$0xff]
  %v617 = vld [vmem:[%s1 + $0x1220] sm:$0xff]
  %v618 = vld [vmem:[%s1 + $0x1228] sm:$0xff]
  %v619 = vld [vmem:[%s1 + $0x1230] sm:$0xff]
  %v620 = vld [vmem:[%s1 + $0x1238] sm:$0xff]
  %v621 = vld [vmem:[%s1 + $0x1240] sm:$0xff]
  %v622 = vld [vmem:[%s1 + $0x1248] sm:$0xff]
  %v623 = vld [vmem:[%s1 + $0x1250] sm:$0xff]
  %v624 = vld [vmem:[%s1 + $0x1258] sm:$0xff]
  %v625 = vld [vmem:[%s1 + $0x1260] sm:$0xff]
  %v626 = vld [vmem:[%s1 + $0x1268] sm:$0xff]
  %v627 = vld [vmem:[%s1 + $0x1270] sm:$0xff]
  %v628 = vld [vmem:[%s1 + $0x1278] sm:$0xff]
  %v629 = vld [vmem:[%s1 + $0x1280] sm:$0xff]
  %v630 = vld [vmem:[%s1 + $0x1288] sm:$0xff]
  %v631 = vld [vmem:[%s1 + $0x1290] sm:$0xff]
  %v632 = vld [vmem:[%s1 + $0x1298] sm:$0xff]
  %v633 = vld [vmem:[%s1 + $0x12a0] sm:$0xff]
  %v634 = vld [vmem:[%s1 + $0x12a8] sm:$0xff]
  %v635 = vld [vmem:[%s1 + $0x12b0] sm:$0xff]
  %v636 = vld [vmem:[%s1 + $0x12b8] sm:$0xff]
  %v637 = vld [vmem:[%s1 + $0x12c0] sm:$0xff]
  %v638 = vld [vmem:[%s1 + $0x12c8] sm:$0xff]
  %v639 = vld [vmem:[%s1 + $0x12d0] sm:$0xff]
  %v640 = vld [vmem:[%s1 + $0x12d8] sm:$0xff]
  %v641 = vld [vmem:[%s1 + $0x12e0] sm:$0xff]
  %v642 = vld [vmem:[%s1 + $0x12e8] sm:$0xff]
  %v643 = vld [vmem:[%s1 + $0x12f0] sm:$0xff]
  %v644 = vld [vmem:[%s1 + $0x12f8] sm:$0xff]
  %v645 = vld [vmem:[%s1 + $0x1300] sm:$0xff]
  %v646 = vld [vmem:[%s1 + $0x1308] sm:$0xff]
  %v647 = vld [vmem:[%s1 + $0x1310] sm:$0xff]
  %v648 = vld [vmem:[%s1 + $0x1318] sm:$0xff]
  %v649 = vld [vmem:[%s1 + $0x1320] sm:$0xff]
  %v650 = vld [vmem:[%s1 + $0x1328] sm:$0xff]
  %v651 = vld [vmem:[%s1 + $0x1330] sm:$0xff]
  %v652 = vld [vmem:[%s1 + $0x1338] sm:$0xff]
  %v653 = vld [vmem:[%s1 + $0x1340] sm:$0xff]
  %v654 = vld [vmem:[%s1 + $0x1348] sm:$0xff]
  %v655 = vld [vmem:[%s1 + $0x1350] sm:$0xff]
  %v656 = vld [vmem:[%s1 + $0x1358] sm:$0xff]
  %v657 = vld [vmem:[%s1 + $0x1360] sm:$0xff]
  %v658 = vld [vmem:[%s1 + $0x1368] sm:$0xff]
  %v659 = vld [vmem:[%s1 + $0x1370] sm:$0xff]
  %v660 = vld [vmem:[%s1 + $0x1378] sm:$0xff]
  %v661 = vld [vmem:[%s2] sm:$0xf]
  %v663 = vlaneseq
  %v664 = vshrl.u32 %v663, 7
  %v665 = vsub.s32 0, %v664
  %v666 = vrot.slane %v661, %v665
  %v667 = vlaneseq
  %v668 = vshrl.u32 %v667, 7
  %v669 = vsub.s32 1, %v668
  %v670 = vrot.slane %v661, %v669
  %v671 = vlaneseq
  %v672 = vshrl.u32 %v671, 7
  %v673 = vsub.s32 2, %v672
  %v674 = vrot.slane %v661, %v673
  %v675 = vlaneseq
  %v676 = vshrl.u32 %v675, 7
  %v677 = vsub.s32 3, %v676
  %v678 = vrot.slane %v661, %v677
  %v693 = vunpack.c.l.b16 %v27
  %v694 = vunpack.c.h.b16 %v27
  %v695 = vunpack.c.l.b16 %v28
  %v696 = vunpack.c.h.b16 %v28
  %v697 = vunpack.c.l.b16 %v29
  %v698 = vunpack.c.h.b16 %v29
  %v699 = vunpack.c.l.b16 %v30
  %v700 = vunpack.c.h.b16 %v30
  %v701 = vunpack.c.l.b16 %v31
  %v702 = vunpack.c.h.b16 %v31
  %v703 = vunpack.c.l.b16 %v32
  %v704 = vunpack.c.h.b16 %v32
  %v705 = vunpack.c.l.b16 %v33
  %v706 = vunpack.c.h.b16 %v33
  %v707 = vunpack.c.l.b16 %v34
  %v708 = vunpack.c.h.b16 %v34
  %v709 = vunpack.c.l.b16 %v35
  %v710 = vunpack.c.h.b16 %v35
  %v711 = vunpack.c.l.b16 %v36
  %v712 = vunpack.c.h.b16 %v36
  %v713 = vpack.c.b16 %v693, %v693
  %v714 = vpack.c.b16 %v694, %v694
  %v715 = vpack.c.b16 %v695, %v695
  %v716 = vpack.c.b16 %v696, %v696
  %v717 = vpack.c.b16 %v697, %v697
  %v718 = vpack.c.b16 %v698, %v698
  %v719 = vpack.c.b16 %v699, %v699
  %v720 = vpack.c.b16 %v700, %v700
  %v721 = vpack.c.b16 %v701, %v701
  %v722 = vpack.c.b16 %v702, %v702
  %v723 = vpack.c.b16 %v703, %v703
  %v724 = vpack.c.b16 %v704, %v704
  %v725 = vpack.c.b16 %v705, %v705
  %v726 = vpack.c.b16 %v706, %v706
  %v727 = vpack.c.b16 %v707, %v707
  %v728 = vpack.c.b16 %v708, %v708
  %v729 = vpack.c.b16 %v709, %v709
  %v730 = vpack.c.b16 %v710, %v710
  %v731 = vpack.c.b16 %v711, %v711
  %v732 = vpack.c.b16 %v712, %v712
  %v1376 = vunpack.c.l.b16 %v37
  %v1377 = vunpack.c.h.b16 %v37
  %v1378 = vunpack.c.l.b16 %v38
  %v1379 = vunpack.c.h.b16 %v38
  %v1380 = vunpack.c.l.b16 %v39
  %v1381 = vunpack.c.h.b16 %v39
  %v1382 = vunpack.c.l.b16 %v40
  %v1383 = vunpack.c.h.b16 %v40
  %v1384 = vunpack.c.l.b16 %v41
  %v1385 = vunpack.c.h.b16 %v41
  %v1386 = vunpack.c.l.b16 %v42
  %v1387 = vunpack.c.h.b16 %v42
  %v1388 = vunpack.c.l.b16 %v43
  %v1389 = vunpack.c.h.b16 %v43
  %v1390 = vunpack.c.l.b16 %v44
  %v1391 = vunpack.c.h.b16 %v44
  %v1392 = vunpack.c.l.b16 %v45
  %v1393 = vunpack.c.h.b16 %v45
  %v1394 = vunpack.c.l.b16 %v46
  %v1395 = vunpack.c.h.b16 %v46
  %v1396 = vunpack.c.l.b16 %v47
  %v1397 = vunpack.c.h.b16 %v47
  %v1398 = vunpack.c.l.b16 %v48
  %v1399 = vunpack.c.h.b16 %v48
  %v1400 = vunpack.c.l.b16 %v49
  %v1401 = vunpack.c.h.b16 %v49
  %v1402 = vunpack.c.l.b16 %v50
  %v1403 = vunpack.c.h.b16 %v50
  %v1404 = vunpack.c.l.b16 %v51
  %v1405 = vunpack.c.h.b16 %v51
  %v1406 = vunpack.c.l.b16 %v52
  %v1407 = vunpack.c.h.b16 %v52
  %v1408 = vunpack.c.l.b16 %v53
  %v1409 = vunpack.c.h.b16 %v53
  %v1410 = vunpack.c.l.b16 %v54
  %v1411 = vunpack.c.h.b16 %v54
  %v1412 = vunpack.c.l.b16 %v55
  %v1413 = vunpack.c.h.b16 %v55
  %v1414 = vunpack.c.l.b16 %v56
  %v1415 = vunpack.c.h.b16 %v56
  %v1416 = vunpack.c.l.b16 %v57
  %v1417 = vunpack.c.h.b16 %v57
  %v1418 = vunpack.c.l.b16 %v58
  %v1419 = vunpack.c.h.b16 %v58
  %v1420 = vunpack.c.l.b16 %v59
  %v1421 = vunpack.c.h.b16 %v59
  %v1422 = vunpack.c.l.b16 %v60
  %v1423 = vunpack.c.h.b16 %v60
  %v1424 = vunpack.c.l.b16 %v61
  %v1425 = vunpack.c.h.b16 %v61
  %v1426 = vunpack.c.l.b16 %v62
  %v1427 = vunpack.c.h.b16 %v62
  %v1428 = vunpack.c.l.b16 %v63
  %v1429 = vunpack.c.h.b16 %v63
  %v1430 = vunpack.c.l.b16 %v64
  %v1431 = vunpack.c.h.b16 %v64
  %v1432 = vunpack.c.l.b16 %v65
  %v1433 = vunpack.c.h.b16 %v65
  %v1434 = vunpack.c.l.b16 %v66
  %v1435 = vunpack.c.h.b16 %v66
  %v1436 = vunpack.c.l.b16 %v67
  %v1437 = vunpack.c.h.b16 %v67
  %v1438 = vunpack.c.l.b16 %v68
  %v1439 = vunpack.c.h.b16 %v68
  %v1440 = vunpack.c.l.b16 %v69
  %v1441 = vunpack.c.h.b16 %v69
  %v1442 = vunpack.c.l.b16 %v70
  %v1443 = vunpack.c.h.b16 %v70
  %v1444 = vunpack.c.l.b16 %v71
  %v1445 = vunpack.c.h.b16 %v71
  %v1446 = vunpack.c.l.b16 %v72
  %v1447 = vunpack.c.h.b16 %v72
  %v1448 = vunpack.c.l.b16 %v73
  %v1449 = vunpack.c.h.b16 %v73
  %v1450 = vunpack.c.l.b16 %v74
  %v1451 = vunpack.c.h.b16 %v74
  %v1452 = vunpack.c.l.b16 %v75
  %v1453 = vunpack.c.h.b16 %v75
  %v1454 = vunpack.c.l.b16 %v76
  %v1455 = vunpack.c.h.b16 %v76
  %v1456 = vunpack.c.l.b16 %v77
  %v1457 = vunpack.c.h.b16 %v77
  %v1458 = vunpack.c.l.b16 %v78
  %v1459 = vunpack.c.h.b16 %v78
  %v1460 = vunpack.c.l.b16 %v79
  %v1461 = vunpack.c.h.b16 %v79
  %v1462 = vunpack.c.l.b16 %v80
  %v1463 = vunpack.c.h.b16 %v80
  %v1464 = vunpack.c.l.b16 %v81
  %v1465 = vunpack.c.h.b16 %v81
  %v1466 = vunpack.c.l.b16 %v82
  %v1467 = vunpack.c.h.b16 %v82
  %v1468 = vunpack.c.l.b16 %v83
  %v1469 = vunpack.c.h.b16 %v83
  %v1470 = vunpack.c.l.b16 %v84
  %v1471 = vunpack.c.h.b16 %v84
  %v1472 = vunpack.c.l.b16 %v85
  %v1473 = vunpack.c.h.b16 %v85
  %v1474 = vunpack.c.l.b16 %v86
  %v1475 = vunpack.c.h.b16 %v86
  %v1476 = vunpack.c.l.b16 %v87
  %v1477 = vunpack.c.h.b16 %v87
  %v1478 = vunpack.c.l.b16 %v88
  %v1479 = vunpack.c.h.b16 %v88
  %v1480 = vunpack.c.l.b16 %v89
  %v1481 = vunpack.c.h.b16 %v89
  %v1482 = vunpack.c.l.b16 %v90
  %v1483 = vunpack.c.h.b16 %v90
  %v1484 = vunpack.c.l.b16 %v91
  %v1485 = vunpack.c.h.b16 %v91
  %v1486 = vunpack.c.l.b16 %v92
  %v1487 = vunpack.c.h.b16 %v92
  %v1488 = vunpack.c.l.b16 %v93
  %v1489 = vunpack.c.h.b16 %v93
  %v1490 = vunpack.c.l.b16 %v94
  %v1491 = vunpack.c.h.b16 %v94
  %v1492 = vunpack.c.l.b16 %v95
  %v1493 = vunpack.c.h.b16 %v95
  %v1494 = vunpack.c.l.b16 %v96
  %v1495 = vunpack.c.h.b16 %v96
  %v1496 = vunpack.c.l.b16 %v97
  %v1497 = vunpack.c.h.b16 %v97
  %v1498 = vunpack.c.l.b16 %v98
  %v1499 = vunpack.c.h.b16 %v98
  %v1500 = vunpack.c.l.b16 %v99
  %v1501 = vunpack.c.h.b16 %v99
  %v1502 = vunpack.c.l.b16 %v100
  %v1503 = vunpack.c.h.b16 %v100
  %v1504 = vunpack.c.l.b16 %v101
  %v1505 = vunpack.c.h.b16 %v101
  %v1506 = vunpack.c.l.b16 %v102
  %v1507 = vunpack.c.h.b16 %v102
  %v1508 = vunpack.c.l.b16 %v103
  %v1509 = vunpack.c.h.b16 %v103
  %v1510 = vunpack.c.l.b16 %v104
  %v1511 = vunpack.c.h.b16 %v104
  %v1512 = vunpack.c.l.b16 %v105
  %v1513 = vunpack.c.h.b16 %v105
  %v1514 = vunpack.c.l.b16 %v106
  %v1515 = vunpack.c.h.b16 %v106
  %v1516 = vunpack.c.l.b16 %v107
  %v1517 = vunpack.c.h.b16 %v107
  %v1518 = vunpack.c.l.b16 %v108
  %v1519 = vunpack.c.h.b16 %v108
  %v1520 = vunpack.c.l.b16 %v109
  %v1521 = vunpack.c.h.b16 %v109
  %v1522 = vunpack.c.l.b16 %v110
  %v1523 = vunpack.c.h.b16 %v110
  %v1524 = vunpack.c.l.b16 %v111
  %v1525 = vunpack.c.h.b16 %v111
  %v1526 = vunpack.c.l.b16 %v112
  %v1527 = vunpack.c.h.b16 %v112
  %v1528 = vunpack.c.l.b16 %v113
  %v1529 = vunpack.c.h.b16 %v113
  %v1530 = vunpack.c.l.b16 %v114
  %v1531 = vunpack.c.h.b16 %v114
  %v1532 = vunpack.c.l.b16 %v115
  %v1533 = vunpack.c.h.b16 %v115
  %v1534 = vunpack.c.l.b16 %v116
  %v1535 = vunpack.c.h.b16 %v116
  %v1536 = vunpack.c.l.b16 %v117
  %v1537 = vunpack.c.h.b16 %v117
  %v1538 = vunpack.c.l.b16 %v118
  %v1539 = vunpack.c.h.b16 %v118
  %v1540 = vunpack.c.l.b16 %v119
  %v1541 = vunpack.c.h.b16 %v119
  %v1542 = vunpack.c.l.b16 %v120
  %v1543 = vunpack.c.h.b16 %v120
  %v1544 = vunpack.c.l.b16 %v121
  %v1545 = vunpack.c.h.b16 %v121
  %v1546 = vunpack.c.l.b16 %v122
  %v1547 = vunpack.c.h.b16 %v122
  %v1548 = vunpack.c.l.b16 %v123
  %v1549 = vunpack.c.h.b16 %v123
  %v1550 = vunpack.c.l.b16 %v124
  %v1551 = vunpack.c.h.b16 %v124
  %v1552 = vunpack.c.l.b16 %v125
  %v1553 = vunpack.c.h.b16 %v125
  %v1554 = vunpack.c.l.b16 %v126
  %v1555 = vunpack.c.h.b16 %v126
  %v1556 = vunpack.c.l.b16 %v127
  %v1557 = vunpack.c.h.b16 %v127
  %v1558 = vunpack.c.l.b16 %v128
  %v1559 = vunpack.c.h.b16 %v128
  %v1560 = vunpack.c.l.b16 %v129
  %v1561 = vunpack.c.h.b16 %v129
  %v1562 = vunpack.c.l.b16 %v130
  %v1563 = vunpack.c.h.b16 %v130
  %v1564 = vunpack.c.l.b16 %v131
  %v1565 = vunpack.c.h.b16 %v131
  %v1566 = vunpack.c.l.b16 %v132
  %v1567 = vunpack.c.h.b16 %v132
  %v1568 = vunpack.c.l.b16 %v133
  %v1569 = vunpack.c.h.b16 %v133
  %v1570 = vunpack.c.l.b16 %v134
  %v1571 = vunpack.c.h.b16 %v134
  %v1572 = vunpack.c.l.b16 %v135
  %v1573 = vunpack.c.h.b16 %v135
  %v1574 = vunpack.c.l.b16 %v136
  %v1575 = vunpack.c.h.b16 %v136
  %v1576 = vunpack.c.l.b16 %v137
  %v1577 = vunpack.c.h.b16 %v137
  %v1578 = vunpack.c.l.b16 %v138
  %v1579 = vunpack.c.h.b16 %v138
  %v1580 = vunpack.c.l.b16 %v139
  %v1581 = vunpack.c.h.b16 %v139
  %v1582 = vunpack.c.l.b16 %v140
  %v1583 = vunpack.c.h.b16 %v140
  %v1584 = vunpack.c.l.b16 %v141
  %v1585 = vunpack.c.h.b16 %v141
  %v1586 = vunpack.c.l.b16 %v142
  %v1587 = vunpack.c.h.b16 %v142
  %v1588 = vunpack.c.l.b16 %v143
  %v1589 = vunpack.c.h.b16 %v143
  %v1590 = vunpack.c.l.b16 %v144
  %v1591 = vunpack.c.h.b16 %v144
  %v1592 = vunpack.c.l.b16 %v145
  %v1593 = vunpack.c.h.b16 %v145
  %v1594 = vunpack.c.l.b16 %v146
  %v1595 = vunpack.c.h.b16 %v146
  %v1596 = vunpack.c.l.b16 %v147
  %v1597 = vunpack.c.h.b16 %v147
  %v1598 = vunpack.c.l.b16 %v148
  %v1599 = vunpack.c.h.b16 %v148
  %v1600 = vunpack.c.l.b16 %v149
  %v1601 = vunpack.c.h.b16 %v149
  %v1602 = vunpack.c.l.b16 %v150
  %v1603 = vunpack.c.h.b16 %v150
  %v1604 = vunpack.c.l.b16 %v151
  %v1605 = vunpack.c.h.b16 %v151
  %v1606 = vunpack.c.l.b16 %v152
  %v1607 = vunpack.c.h.b16 %v152
  %v1608 = vunpack.c.l.b16 %v153
  %v1609 = vunpack.c.h.b16 %v153
  %v1610 = vunpack.c.l.b16 %v154
  %v1611 = vunpack.c.h.b16 %v154
  %v1612 = vunpack.c.l.b16 %v155
  %v1613 = vunpack.c.h.b16 %v155
  %v1614 = vunpack.c.l.b16 %v156
  %v1615 = vunpack.c.h.b16 %v156
  %v1616 = vunpack.c.l.b16 %v157
  %v1617 = vunpack.c.h.b16 %v157
  %v1618 = vunpack.c.l.b16 %v158
  %v1619 = vunpack.c.h.b16 %v158
  %v1620 = vunpack.c.l.b16 %v159
  %v1621 = vunpack.c.h.b16 %v159
  %v1622 = vunpack.c.l.b16 %v160
  %v1623 = vunpack.c.h.b16 %v160
  %v1624 = vunpack.c.l.b16 %v161
  %v1625 = vunpack.c.h.b16 %v161
  %v1626 = vunpack.c.l.b16 %v162
  %v1627 = vunpack.c.h.b16 %v162
  %v1628 = vunpack.c.l.b16 %v163
  %v1629 = vunpack.c.h.b16 %v163
  %v1630 = vunpack.c.l.b16 %v164
  %v1631 = vunpack.c.h.b16 %v164
  %v1632 = vunpack.c.l.b16 %v165
  %v1633 = vunpack.c.h.b16 %v165
  %v1634 = vunpack.c.l.b16 %v166
  %v1635 = vunpack.c.h.b16 %v166
  %v1636 = vunpack.c.l.b16 %v167
  %v1637 = vunpack.c.h.b16 %v167
  %v1638 = vunpack.c.l.b16 %v168
  %v1639 = vunpack.c.h.b16 %v168
  %v1640 = vunpack.c.l.b16 %v169
  %v1641 = vunpack.c.h.b16 %v169
  %v1642 = vunpack.c.l.b16 %v170
  %v1643 = vunpack.c.h.b16 %v170
  %v1644 = vunpack.c.l.b16 %v171
  %v1645 = vunpack.c.h.b16 %v171
  %v1646 = vunpack.c.l.b16 %v172
  %v1647 = vunpack.c.h.b16 %v172
  %v1648 = vunpack.c.l.b16 %v173
  %v1649 = vunpack.c.h.b16 %v173
  %v1650 = vunpack.c.l.b16 %v174
  %v1651 = vunpack.c.h.b16 %v174
  %v1652 = vunpack.c.l.b16 %v175
  %v1653 = vunpack.c.h.b16 %v175
  %v1654 = vunpack.c.l.b16 %v176
  %v1655 = vunpack.c.h.b16 %v176
  %v1656 = vunpack.c.l.b16 %v177
  %v1657 = vunpack.c.h.b16 %v177
  %v1658 = vunpack.c.l.b16 %v178
  %v1659 = vunpack.c.h.b16 %v178
  %v1660 = vunpack.c.l.b16 %v179
  %v1661 = vunpack.c.h.b16 %v179
  %v1662 = vunpack.c.l.b16 %v180
  %v1663 = vunpack.c.h.b16 %v180
  %v1664 = vunpack.c.l.b16 %v181
  %v1665 = vunpack.c.h.b16 %v181
  %v1666 = vunpack.c.l.b16 %v182
  %v1667 = vunpack.c.h.b16 %v182
  %v1668 = vunpack.c.l.b16 %v183
  %v1669 = vunpack.c.h.b16 %v183
  %v1670 = vunpack.c.l.b16 %v184
  %v1671 = vunpack.c.h.b16 %v184
  %v1672 = vunpack.c.l.b16 %v185
  %v1673 = vunpack.c.h.b16 %v185
  %v1674 = vunpack.c.l.b16 %v186
  %v1675 = vunpack.c.h.b16 %v186
  %v1676 = vunpack.c.l.b16 %v187
  %v1677 = vunpack.c.h.b16 %v187
  %v1678 = vunpack.c.l.b16 %v188
  %v1679 = vunpack.c.h.b16 %v188
  %v1680 = vunpack.c.l.b16 %v189
  %v1681 = vunpack.c.h.b16 %v189
  %v1682 = vunpack.c.l.b16 %v190
  %v1683 = vunpack.c.h.b16 %v190
  %v1684 = vunpack.c.l.b16 %v191
  %v1685 = vunpack.c.h.b16 %v191
  %v1686 = vunpack.c.l.b16 %v192
  %v1687 = vunpack.c.h.b16 %v192
  %v1688 = vunpack.c.l.b16 %v193
  %v1689 = vunpack.c.h.b16 %v193
  %v1690 = vunpack.c.l.b16 %v194
  %v1691 = vunpack.c.h.b16 %v194
  %v1692 = vunpack.c.l.b16 %v195
  %v1693 = vunpack.c.h.b16 %v195
  %v1694 = vunpack.c.l.b16 %v196
  %v1695 = vunpack.c.h.b16 %v196
  %v1696 = vunpack.c.l.b16 %v197
  %v1697 = vunpack.c.h.b16 %v197
  %v1698 = vunpack.c.l.b16 %v198
  %v1699 = vunpack.c.h.b16 %v198
  %v1700 = vunpack.c.l.b16 %v199
  %v1701 = vunpack.c.h.b16 %v199
  %v1702 = vunpack.c.l.b16 %v200
  %v1703 = vunpack.c.h.b16 %v200
  %v1704 = vunpack.c.l.b16 %v201
  %v1705 = vunpack.c.h.b16 %v201
  %v1706 = vunpack.c.l.b16 %v202
  %v1707 = vunpack.c.h.b16 %v202
  %v1708 = vunpack.c.l.b16 %v203
  %v1709 = vunpack.c.h.b16 %v203
  %v1710 = vunpack.c.l.b16 %v204
  %v1711 = vunpack.c.h.b16 %v204
  %v1712 = vunpack.c.l.b16 %v205
  %v1713 = vunpack.c.h.b16 %v205
  %v1714 = vunpack.c.l.b16 %v206
  %v1715 = vunpack.c.h.b16 %v206
  %v1716 = vunpack.c.l.b16 %v207
  %v1717 = vunpack.c.h.b16 %v207
  %v1718 = vunpack.c.l.b16 %v208
  %v1719 = vunpack.c.h.b16 %v208
  %v1720 = vunpack.c.l.b16 %v209
  %v1721 = vunpack.c.h.b16 %v209
  %v1722 = vunpack.c.l.b16 %v210
  %v1723 = vunpack.c.h.b16 %v210
  %v1724 = vunpack.c.l.b16 %v211
  %v1725 = vunpack.c.h.b16 %v211
  %v1726 = vunpack.c.l.b16 %v212
  %v1727 = vunpack.c.h.b16 %v212
  %v1728 = vunpack.c.l.b16 %v213
  %v1729 = vunpack.c.h.b16 %v213
  %v1730 = vunpack.c.l.b16 %v214
  %v1731 = vunpack.c.h.b16 %v214
  %v1732 = vunpack.c.l.b16 %v215
  %v1733 = vunpack.c.h.b16 %v215
  %v1734 = vunpack.c.l.b16 %v216
  %v1735 = vunpack.c.h.b16 %v216
  %v1736 = vunpack.c.l.b16 %v217
  %v1737 = vunpack.c.h.b16 %v217
  %v1738 = vunpack.c.l.b16 %v218
  %v1739 = vunpack.c.h.b16 %v218
  %v1740 = vunpack.c.l.b16 %v219
  %v1741 = vunpack.c.h.b16 %v219
  %v1742 = vunpack.c.l.b16 %v220
  %v1743 = vunpack.c.h.b16 %v220
  %v1744 = vunpack.c.l.b16 %v221
  %v1745 = vunpack.c.h.b16 %v221
  %v1746 = vunpack.c.l.b16 %v222
  %v1747 = vunpack.c.h.b16 %v222
  %v1748 = vunpack.c.l.b16 %v223
  %v1749 = vunpack.c.h.b16 %v223
  %v1750 = vunpack.c.l.b16 %v224
  %v1751 = vunpack.c.h.b16 %v224
  %v1752 = vunpack.c.l.b16 %v225
  %v1753 = vunpack.c.h.b16 %v225
  %v1754 = vunpack.c.l.b16 %v226
  %v1755 = vunpack.c.h.b16 %v226
  %v1756 = vunpack.c.l.b16 %v227
  %v1757 = vunpack.c.h.b16 %v227
  %v1758 = vunpack.c.l.b16 %v228
  %v1759 = vunpack.c.h.b16 %v228
  %v1760 = vunpack.c.l.b16 %v229
  %v1761 = vunpack.c.h.b16 %v229
  %v1762 = vunpack.c.l.b16 %v230
  %v1763 = vunpack.c.h.b16 %v230
  %v1764 = vunpack.c.l.b16 %v231
  %v1765 = vunpack.c.h.b16 %v231
  %v1766 = vunpack.c.l.b16 %v232
  %v1767 = vunpack.c.h.b16 %v232
  %v1768 = vunpack.c.l.b16 %v233
  %v1769 = vunpack.c.h.b16 %v233
  %v1770 = vunpack.c.l.b16 %v234
  %v1771 = vunpack.c.h.b16 %v234
  %v1772 = vunpack.c.l.b16 %v235
  %v1773 = vunpack.c.h.b16 %v235
  %v1774 = vunpack.c.l.b16 %v236
  %v1775 = vunpack.c.h.b16 %v236
  %v1776 = vunpack.c.l.b16 %v237
  %v1777 = vunpack.c.h.b16 %v237
  %v1778 = vunpack.c.l.b16 %v238
  %v1779 = vunpack.c.h.b16 %v238
  %v1780 = vunpack.c.l.b16 %v239
  %v1781 = vunpack.c.h.b16 %v239
  %v1782 = vunpack.c.l.b16 %v240
  %v1783 = vunpack.c.h.b16 %v240
  %v1784 = vunpack.c.l.b16 %v241
  %v1785 = vunpack.c.h.b16 %v241
  %v1786 = vunpack.c.l.b16 %v242
  %v1787 = vunpack.c.h.b16 %v242
  %v1788 = vunpack.c.l.b16 %v243
  %v1789 = vunpack.c.h.b16 %v243
  %v1790 = vunpack.c.l.b16 %v244
  %v1791 = vunpack.c.h.b16 %v244
  %v1792 = vunpack.c.l.b16 %v245
  %v1793 = vunpack.c.h.b16 %v245
  %v1794 = vunpack.c.l.b16 %v246
  %v1795 = vunpack.c.h.b16 %v246
  %v1796 = vunpack.c.l.b16 %v247
  %v1797 = vunpack.c.h.b16 %v247
  %v1798 = vunpack.c.l.b16 %v248
  %v1799 = vunpack.c.h.b16 %v248
  %v1800 = vunpack.c.l.b16 %v249
  %v1801 = vunpack.c.h.b16 %v249
  %v1802 = vunpack.c.l.b16 %v250
  %v1803 = vunpack.c.h.b16 %v250
  %v1804 = vunpack.c.l.b16 %v251
  %v1805 = vunpack.c.h.b16 %v251
  %v1806 = vunpack.c.l.b16 %v252
  %v1807 = vunpack.c.h.b16 %v252
  %v1808 = vunpack.c.l.b16 %v253
  %v1809 = vunpack.c.h.b16 %v253
  %v1810 = vunpack.c.l.b16 %v254
  %v1811 = vunpack.c.h.b16 %v254
  %v1812 = vunpack.c.l.b16 %v255
  %v1813 = vunpack.c.h.b16 %v255
  %v1814 = vunpack.c.l.b16 %v256
  %v1815 = vunpack.c.h.b16 %v256
  %v1816 = vunpack.c.l.b16 %v257
  %v1817 = vunpack.c.h.b16 %v257
  %v1818 = vunpack.c.l.b16 %v258
  %v1819 = vunpack.c.h.b16 %v258
  %v1820 = vunpack.c.l.b16 %v259
  %v1821 = vunpack.c.h.b16 %v259
  %v1822 = vunpack.c.l.b16 %v260
  %v1823 = vunpack.c.h.b16 %v260
  %v1824 = vunpack.c.l.b16 %v261
  %v1825 = vunpack.c.h.b16 %v261
  %v1826 = vunpack.c.l.b16 %v262
  %v1827 = vunpack.c.h.b16 %v262
  %v1828 = vunpack.c.l.b16 %v263
  %v1829 = vunpack.c.h.b16 %v263
  %v1830 = vunpack.c.l.b16 %v264
  %v1831 = vunpack.c.h.b16 %v264
  %v1832 = vunpack.c.l.b16 %v265
  %v1833 = vunpack.c.h.b16 %v265
  %v1834 = vunpack.c.l.b16 %v266
  %v1835 = vunpack.c.h.b16 %v266
  %v1836 = vunpack.c.l.b16 %v267
  %v1837 = vunpack.c.h.b16 %v267
  %v1838 = vunpack.c.l.b16 %v268
  %v1839 = vunpack.c.h.b16 %v268
  %v1840 = vunpack.c.l.b16 %v269
  %v1841 = vunpack.c.h.b16 %v269
  %v1842 = vunpack.c.l.b16 %v270
  %v1843 = vunpack.c.h.b16 %v270
  %v1844 = vunpack.c.l.b16 %v271
  %v1845 = vunpack.c.h.b16 %v271
  %v1846 = vunpack.c.l.b16 %v272
  %v1847 = vunpack.c.h.b16 %v272
  %v1848 = vunpack.c.l.b16 %v273
  %v1849 = vunpack.c.h.b16 %v273
  %v1850 = vunpack.c.l.b16 %v274
  %v1851 = vunpack.c.h.b16 %v274
  %v1852 = vunpack.c.l.b16 %v275
  %v1853 = vunpack.c.h.b16 %v275
  %v1854 = vunpack.c.l.b16 %v276
  %v1855 = vunpack.c.h.b16 %v276
  %v1856 = vunpack.c.l.b16 %v277
  %v1857 = vunpack.c.h.b16 %v277
  %v1858 = vunpack.c.l.b16 %v278
  %v1859 = vunpack.c.h.b16 %v278
  %v1860 = vunpack.c.l.b16 %v279
  %v1861 = vunpack.c.h.b16 %v279
  %v1862 = vunpack.c.l.b16 %v280
  %v1863 = vunpack.c.h.b16 %v280
  %v1864 = vunpack.c.l.b16 %v281
  %v1865 = vunpack.c.h.b16 %v281
  %v1866 = vunpack.c.l.b16 %v282
  %v1867 = vunpack.c.h.b16 %v282
  %v1868 = vunpack.c.l.b16 %v283
  %v1869 = vunpack.c.h.b16 %v283
  %v1870 = vunpack.c.l.b16 %v284
  %v1871 = vunpack.c.h.b16 %v284
  %v1872 = vunpack.c.l.b16 %v285
  %v1873 = vunpack.c.h.b16 %v285
  %v1874 = vunpack.c.l.b16 %v286
  %v1875 = vunpack.c.h.b16 %v286
  %v1876 = vunpack.c.l.b16 %v287
  %v1877 = vunpack.c.h.b16 %v287
  %v1878 = vunpack.c.l.b16 %v288
  %v1879 = vunpack.c.h.b16 %v288
  %v1880 = vunpack.c.l.b16 %v289
  %v1881 = vunpack.c.h.b16 %v289
  %v1882 = vunpack.c.l.b16 %v290
  %v1883 = vunpack.c.h.b16 %v290
  %v1884 = vunpack.c.l.b16 %v291
  %v1885 = vunpack.c.h.b16 %v291
  %v1886 = vunpack.c.l.b16 %v292
  %v1887 = vunpack.c.h.b16 %v292
  %v1888 = vunpack.c.l.b16 %v293
  %v1889 = vunpack.c.h.b16 %v293
  %v1890 = vunpack.c.l.b16 %v294
  %v1891 = vunpack.c.h.b16 %v294
  %v1892 = vunpack.c.l.b16 %v295
  %v1893 = vunpack.c.h.b16 %v295
  %v1894 = vunpack.c.l.b16 %v296
  %v1895 = vunpack.c.h.b16 %v296
  %v1896 = vunpack.c.l.b16 %v297
  %v1897 = vunpack.c.h.b16 %v297
  %v1898 = vunpack.c.l.b16 %v298
  %v1899 = vunpack.c.h.b16 %v298
  %v1900 = vunpack.c.l.b16 %v299
  %v1901 = vunpack.c.h.b16 %v299
  %v1902 = vunpack.c.l.b16 %v300
  %v1903 = vunpack.c.h.b16 %v300
  %v1904 = vunpack.c.l.b16 %v301
  %v1905 = vunpack.c.h.b16 %v301
  %v1906 = vunpack.c.l.b16 %v302
  %v1907 = vunpack.c.h.b16 %v302
  %v1908 = vunpack.c.l.b16 %v303
  %v1909 = vunpack.c.h.b16 %v303
  %v1910 = vunpack.c.l.b16 %v304
  %v1911 = vunpack.c.h.b16 %v304
  %v1912 = vunpack.c.l.b16 %v305
  %v1913 = vunpack.c.h.b16 %v305
  %v1914 = vunpack.c.l.b16 %v306
  %v1915 = vunpack.c.h.b16 %v306
  %v1916 = vunpack.c.l.b16 %v307
  %v1917 = vunpack.c.h.b16 %v307
  %v1918 = vunpack.c.l.b16 %v308
  %v1919 = vunpack.c.h.b16 %v308
  %v1920 = vunpack.c.l.b16 %v309
  %v1921 = vunpack.c.h.b16 %v309
  %v1922 = vunpack.c.l.b16 %v310
  %v1923 = vunpack.c.h.b16 %v310
  %v1924 = vunpack.c.l.b16 %v311
  %v1925 = vunpack.c.h.b16 %v311
  %v1926 = vunpack.c.l.b16 %v312
  %v1927 = vunpack.c.h.b16 %v312
  %v1928 = vunpack.c.l.b16 %v313
  %v1929 = vunpack.c.h.b16 %v313
  %v1930 = vunpack.c.l.b16 %v314
  %v1931 = vunpack.c.h.b16 %v314
  %v1932 = vunpack.c.l.b16 %v315
  %v1933 = vunpack.c.h.b16 %v315
  %v1934 = vunpack.c.l.b16 %v316
  %v1935 = vunpack.c.h.b16 %v316
  %v1936 = vunpack.c.l.b16 %v317
  %v1937 = vunpack.c.h.b16 %v317
  %v1938 = vunpack.c.l.b16 %v318
  %v1939 = vunpack.c.h.b16 %v318
  %v1940 = vunpack.c.l.b16 %v319
  %v1941 = vunpack.c.h.b16 %v319
  %v1942 = vunpack.c.l.b16 %v320
  %v1943 = vunpack.c.h.b16 %v320
  %v1944 = vunpack.c.l.b16 %v321
  %v1945 = vunpack.c.h.b16 %v321
  %v1946 = vunpack.c.l.b16 %v322
  %v1947 = vunpack.c.h.b16 %v322
  %v1948 = vunpack.c.l.b16 %v323
  %v1949 = vunpack.c.h.b16 %v323
  %v1950 = vunpack.c.l.b16 %v324
  %v1951 = vunpack.c.h.b16 %v324
  %v1952 = vunpack.c.l.b16 %v325
  %v1953 = vunpack.c.h.b16 %v325
  %v1954 = vunpack.c.l.b16 %v326
  %v1955 = vunpack.c.h.b16 %v326
  %v1956 = vunpack.c.l.b16 %v327
  %v1957 = vunpack.c.h.b16 %v327
  %v1958 = vunpack.c.l.b16 %v328
  %v1959 = vunpack.c.h.b16 %v328
  %v1960 = vunpack.c.l.b16 %v329
  %v1961 = vunpack.c.h.b16 %v329
  %v1962 = vunpack.c.l.b16 %v330
  %v1963 = vunpack.c.h.b16 %v330
  %v1964 = vunpack.c.l.b16 %v331
  %v1965 = vunpack.c.h.b16 %v331
  %v1966 = vunpack.c.l.b16 %v332
  %v1967 = vunpack.c.h.b16 %v332
  %v1968 = vunpack.c.l.b16 %v333
  %v1969 = vunpack.c.h.b16 %v333
  %v1970 = vunpack.c.l.b16 %v334
  %v1971 = vunpack.c.h.b16 %v334
  %v1972 = vunpack.c.l.b16 %v335
  %v1973 = vunpack.c.h.b16 %v335
  %v1974 = vunpack.c.l.b16 %v336
  %v1975 = vunpack.c.h.b16 %v336
  %v1976 = vunpack.c.l.b16 %v337
  %v1977 = vunpack.c.h.b16 %v337
  %v1978 = vunpack.c.l.b16 %v338
  %v1979 = vunpack.c.h.b16 %v338
  %v1980 = vunpack.c.l.b16 %v339
  %v1981 = vunpack.c.h.b16 %v339
  %v1982 = vunpack.c.l.b16 %v340
  %v1983 = vunpack.c.h.b16 %v340
  %v1984 = vunpack.c.l.b16 %v341
  %v1985 = vunpack.c.h.b16 %v341
  %v1986 = vunpack.c.l.b16 %v342
  %v1987 = vunpack.c.h.b16 %v342
  %v1988 = vunpack.c.l.b16 %v343
  %v1989 = vunpack.c.h.b16 %v343
  %v1990 = vunpack.c.l.b16 %v344
  %v1991 = vunpack.c.h.b16 %v344
  %v1992 = vunpack.c.l.b16 %v345
  %v1993 = vunpack.c.h.b16 %v345
  %v1994 = vunpack.c.l.b16 %v346
  %v1995 = vunpack.c.h.b16 %v346
  %v1996 = vunpack.c.l.b16 %v347
  %v1997 = vunpack.c.h.b16 %v347
  %v1998 = vunpack.c.l.b16 %v348
  %v1999 = vunpack.c.h.b16 %v348
  %v2000 = vunpack.c.l.b16 %v349
  %v2001 = vunpack.c.h.b16 %v349
  %v2002 = vunpack.c.l.b16 %v350
  %v2003 = vunpack.c.h.b16 %v350
  %v2004 = vunpack.c.l.b16 %v351
  %v2005 = vunpack.c.h.b16 %v351
  %v2006 = vunpack.c.l.b16 %v352
  %v2007 = vunpack.c.h.b16 %v352
  %v2008 = vunpack.c.l.b16 %v353
  %v2009 = vunpack.c.h.b16 %v353
  %v2010 = vunpack.c.l.b16 %v354
  %v2011 = vunpack.c.h.b16 %v354
  %v2012 = vunpack.c.l.b16 %v355
  %v2013 = vunpack.c.h.b16 %v355
  %v2014 = vunpack.c.l.b16 %v356
  %v2015 = vunpack.c.h.b16 %v356
  %v2016 = vunpack.c.l.b16 %v357
  %v2017 = vunpack.c.h.b16 %v357
  %v2018 = vunpack.c.l.b16 %v358
  %v2019 = vunpack.c.h.b16 %v358
  %v2020 = vunpack.c.l.b16 %v359
  %v2021 = vunpack.c.h.b16 %v359
  %v2022 = vunpack.c.l.b16 %v360
  %v2023 = vunpack.c.h.b16 %v360
  %v2024 = vunpack.c.l.b16 %v361
  %v2025 = vunpack.c.h.b16 %v361
  %v2026 = vunpack.c.l.b16 %v362
  %v2027 = vunpack.c.h.b16 %v362
  %v2028 = vunpack.c.l.b16 %v363
  %v2029 = vunpack.c.h.b16 %v363
  %v2030 = vunpack.c.l.b16 %v364
  %v2031 = vunpack.c.h.b16 %v364
  %v2032 = vunpack.c.l.b16 %v365
  %v2033 = vunpack.c.h.b16 %v365
  %v2034 = vunpack.c.l.b16 %v366
  %v2035 = vunpack.c.h.b16 %v366
  %v2036 = vunpack.c.l.b16 %v367
  %v2037 = vunpack.c.h.b16 %v367
  %v2038 = vunpack.c.l.b16 %v368
  %v2039 = vunpack.c.h.b16 %v368
  %v2040 = vunpack.c.l.b16 %v369
  %v2041 = vunpack.c.h.b16 %v369
  %v2042 = vunpack.c.l.b16 %v370
  %v2043 = vunpack.c.h.b16 %v370
  %v2044 = vunpack.c.l.b16 %v371
  %v2045 = vunpack.c.h.b16 %v371
  %v2046 = vunpack.c.l.b16 %v372
  %v2047 = vunpack.c.h.b16 %v372
  %v2048 = vunpack.c.l.b16 %v373
  %v2049 = vunpack.c.h.b16 %v373
  %v2050 = vunpack.c.l.b16 %v374
  %v2051 = vunpack.c.h.b16 %v374
  %v2052 = vunpack.c.l.b16 %v375
  %v2053 = vunpack.c.h.b16 %v375
  %v2054 = vunpack.c.l.b16 %v376
  %v2055 = vunpack.c.h.b16 %v376
  %v2056 = vunpack.c.l.b16 %v377
  %v2057 = vunpack.c.h.b16 %v377
  %v2058 = vunpack.c.l.b16 %v378
  %v2059 = vunpack.c.h.b16 %v378
  %v2060 = vunpack.c.l.b16 %v379
  %v2061 = vunpack.c.h.b16 %v379
  %v2062 = vunpack.c.l.b16 %v380
  %v2063 = vunpack.c.h.b16 %v380
  %v2064 = vunpack.c.l.b16 %v381
  %v2065 = vunpack.c.h.b16 %v381
  %v2066 = vunpack.c.l.b16 %v382
  %v2067 = vunpack.c.h.b16 %v382
  %v2068 = vunpack.c.l.b16 %v383
  %v2069 = vunpack.c.h.b16 %v383
  %v2070 = vunpack.c.l.b16 %v384
  %v2071 = vunpack.c.h.b16 %v384
  %v2072 = vunpack.c.l.b16 %v385
  %v2073 = vunpack.c.h.b16 %v385
  %v2074 = vunpack.c.l.b16 %v386
  %v2075 = vunpack.c.h.b16 %v386
  %v2076 = vunpack.c.l.b16 %v387
  %v2077 = vunpack.c.h.b16 %v387
  %v2078 = vunpack.c.l.b16 %v388
  %v2079 = vunpack.c.h.b16 %v388
  %v2080 = vunpack.c.l.b16 %v389
  %v2081 = vunpack.c.h.b16 %v389
  %v2082 = vunpack.c.l.b16 %v390
  %v2083 = vunpack.c.h.b16 %v390
  %v2084 = vunpack.c.l.b16 %v391
  %v2085 = vunpack.c.h.b16 %v391
  %v2086 = vunpack.c.l.b16 %v392
  %v2087 = vunpack.c.h.b16 %v392
  %v2088 = vunpack.c.l.b16 %v393
  %v2089 = vunpack.c.h.b16 %v393
  %v2090 = vunpack.c.l.b16 %v394
  %v2091 = vunpack.c.h.b16 %v394
  %v2092 = vunpack.c.l.b16 %v395
  %v2093 = vunpack.c.h.b16 %v395
  %v2094 = vunpack.c.l.b16 %v396
  %v2095 = vunpack.c.h.b16 %v396
  %v2096 = vunpack.c.l.b16 %v397
  %v2097 = vunpack.c.h.b16 %v397
  %v2098 = vunpack.c.l.b16 %v398
  %v2099 = vunpack.c.h.b16 %v398
  %v2100 = vunpack.c.l.b16 %v399
  %v2101 = vunpack.c.h.b16 %v399
  %v2102 = vunpack.c.l.b16 %v400
  %v2103 = vunpack.c.h.b16 %v400
  %v2104 = vunpack.c.l.b16 %v401
  %v2105 = vunpack.c.h.b16 %v401
  %v2106 = vunpack.c.l.b16 %v402
  %v2107 = vunpack.c.h.b16 %v402
  %v2108 = vunpack.c.l.b16 %v403
  %v2109 = vunpack.c.h.b16 %v403
  %v2110 = vunpack.c.l.b16 %v404
  %v2111 = vunpack.c.h.b16 %v404
  %v2112 = vunpack.c.l.b16 %v405
  %v2113 = vunpack.c.h.b16 %v405
  %v2114 = vunpack.c.l.b16 %v406
  %v2115 = vunpack.c.h.b16 %v406
  %v2116 = vunpack.c.l.b16 %v407
  %v2117 = vunpack.c.h.b16 %v407
  %v2118 = vunpack.c.l.b16 %v408
  %v2119 = vunpack.c.h.b16 %v408
  %v2120 = vunpack.c.l.b16 %v409
  %v2121 = vunpack.c.h.b16 %v409
  %v2122 = vunpack.c.l.b16 %v410
  %v2123 = vunpack.c.h.b16 %v410
  %v2124 = vunpack.c.l.b16 %v411
  %v2125 = vunpack.c.h.b16 %v411
  %v2126 = vunpack.c.l.b16 %v412
  %v2127 = vunpack.c.h.b16 %v412
  %v2128 = vunpack.c.l.b16 %v413
  %v2129 = vunpack.c.h.b16 %v413
  %v2130 = vunpack.c.l.b16 %v414
  %v2131 = vunpack.c.h.b16 %v414
  %v2132 = vunpack.c.l.b16 %v415
  %v2133 = vunpack.c.h.b16 %v415
  %v2134 = vunpack.c.l.b16 %v416
  %v2135 = vunpack.c.h.b16 %v416
  %v2136 = vunpack.c.l.b16 %v417
  %v2137 = vunpack.c.h.b16 %v417
  %v2138 = vunpack.c.l.b16 %v418
  %v2139 = vunpack.c.h.b16 %v418
  %v2140 = vunpack.c.l.b16 %v419
  %v2141 = vunpack.c.h.b16 %v419
  %v2142 = vunpack.c.l.b16 %v420
  %v2143 = vunpack.c.h.b16 %v420
  %v2144 = vunpack.c.l.b16 %v421
  %v2145 = vunpack.c.h.b16 %v421
  %v2146 = vunpack.c.l.b16 %v422
  %v2147 = vunpack.c.h.b16 %v422
  %v2148 = vunpack.c.l.b16 %v423
  %v2149 = vunpack.c.h.b16 %v423
  %v2150 = vunpack.c.l.b16 %v424
  %v2151 = vunpack.c.h.b16 %v424
  %v2152 = vunpack.c.l.b16 %v425
  %v2153 = vunpack.c.h.b16 %v425
  %v2154 = vunpack.c.l.b16 %v426
  %v2155 = vunpack.c.h.b16 %v426
  %v2156 = vunpack.c.l.b16 %v427
  %v2157 = vunpack.c.h.b16 %v427
  %v2158 = vunpack.c.l.b16 %v428
  %v2159 = vunpack.c.h.b16 %v428
  %v2160 = vunpack.c.l.b16 %v429
  %v2161 = vunpack.c.h.b16 %v429
  %v2162 = vunpack.c.l.b16 %v430
  %v2163 = vunpack.c.h.b16 %v430
  %v2164 = vunpack.c.l.b16 %v431
  %v2165 = vunpack.c.h.b16 %v431
  %v2166 = vunpack.c.l.b16 %v432
  %v2167 = vunpack.c.h.b16 %v432
  %v2168 = vunpack.c.l.b16 %v433
  %v2169 = vunpack.c.h.b16 %v433
  %v2170 = vunpack.c.l.b16 %v434
  %v2171 = vunpack.c.h.b16 %v434
  %v2172 = vunpack.c.l.b16 %v435
  %v2173 = vunpack.c.h.b16 %v435
  %v2174 = vunpack.c.l.b16 %v436
  %v2175 = vunpack.c.h.b16 %v436
  %v2176 = vunpack.c.l.b16 %v437
  %v2177 = vunpack.c.h.b16 %v437
  %v2178 = vunpack.c.l.b16 %v438
  %v2179 = vunpack.c.h.b16 %v438
  %v2180 = vunpack.c.l.b16 %v439
  %v2181 = vunpack.c.h.b16 %v439
  %v2182 = vunpack.c.l.b16 %v440
  %v2183 = vunpack.c.h.b16 %v440
  %v2184 = vunpack.c.l.b16 %v441
  %v2185 = vunpack.c.h.b16 %v441
  %v2186 = vunpack.c.l.b16 %v442
  %v2187 = vunpack.c.h.b16 %v442
  %v2188 = vunpack.c.l.b16 %v443
  %v2189 = vunpack.c.h.b16 %v443
  %v2190 = vunpack.c.l.b16 %v444
  %v2191 = vunpack.c.h.b16 %v444
  %v2192 = vunpack.c.l.b16 %v445
  %v2193 = vunpack.c.h.b16 %v445
  %v2194 = vunpack.c.l.b16 %v446
  %v2195 = vunpack.c.h.b16 %v446
  %v2196 = vunpack.c.l.b16 %v447
  %v2197 = vunpack.c.h.b16 %v447
  %v2198 = vunpack.c.l.b16 %v448
  %v2199 = vunpack.c.h.b16 %v448
  %v2200 = vunpack.c.l.b16 %v449
  %v2201 = vunpack.c.h.b16 %v449
  %v2202 = vunpack.c.l.b16 %v450
  %v2203 = vunpack.c.h.b16 %v450
  %v2204 = vunpack.c.l.b16 %v451
  %v2205 = vunpack.c.h.b16 %v451
  %v2206 = vunpack.c.l.b16 %v452
  %v2207 = vunpack.c.h.b16 %v452
  %v2208 = vunpack.c.l.b16 %v453
  %v2209 = vunpack.c.h.b16 %v453
  %v2210 = vunpack.c.l.b16 %v454
  %v2211 = vunpack.c.h.b16 %v454
  %v2212 = vunpack.c.l.b16 %v455
  %v2213 = vunpack.c.h.b16 %v455
  %v2214 = vunpack.c.l.b16 %v456
  %v2215 = vunpack.c.h.b16 %v456
  %v2216 = vunpack.c.l.b16 %v457
  %v2217 = vunpack.c.h.b16 %v457
  %v2218 = vunpack.c.l.b16 %v458
  %v2219 = vunpack.c.h.b16 %v458
  %v2220 = vunpack.c.l.b16 %v459
  %v2221 = vunpack.c.h.b16 %v459
  %v2222 = vunpack.c.l.b16 %v460
  %v2223 = vunpack.c.h.b16 %v460
  %v2224 = vunpack.c.l.b16 %v461
  %v2225 = vunpack.c.h.b16 %v461
  %v2226 = vunpack.c.l.b16 %v462
  %v2227 = vunpack.c.h.b16 %v462
  %v2228 = vunpack.c.l.b16 %v463
  %v2229 = vunpack.c.h.b16 %v463
  %v2230 = vunpack.c.l.b16 %v464
  %v2231 = vunpack.c.h.b16 %v464
  %v2232 = vunpack.c.l.b16 %v465
  %v2233 = vunpack.c.h.b16 %v465
  %v2234 = vunpack.c.l.b16 %v466
  %v2235 = vunpack.c.h.b16 %v466
  %v2236 = vunpack.c.l.b16 %v467
  %v2237 = vunpack.c.h.b16 %v467
  %v2238 = vunpack.c.l.b16 %v468
  %v2239 = vunpack.c.h.b16 %v468
  %v2240 = vunpack.c.l.b16 %v469
  %v2241 = vunpack.c.h.b16 %v469
  %v2242 = vunpack.c.l.b16 %v470
  %v2243 = vunpack.c.h.b16 %v470
  %v2244 = vunpack.c.l.b16 %v471
  %v2245 = vunpack.c.h.b16 %v471
  %v2246 = vunpack.c.l.b16 %v472
  %v2247 = vunpack.c.h.b16 %v472
  %v2248 = vunpack.c.l.b16 %v473
  %v2249 = vunpack.c.h.b16 %v473
  %v2250 = vunpack.c.l.b16 %v474
  %v2251 = vunpack.c.h.b16 %v474
  %v2252 = vunpack.c.l.b16 %v475
  %v2253 = vunpack.c.h.b16 %v475
  %v2254 = vunpack.c.l.b16 %v476
  %v2255 = vunpack.c.h.b16 %v476
  %v2256 = vunpack.c.l.b16 %v477
  %v2257 = vunpack.c.h.b16 %v477
  %v2258 = vunpack.c.l.b16 %v478
  %v2259 = vunpack.c.h.b16 %v478
  %v2260 = vunpack.c.l.b16 %v479
  %v2261 = vunpack.c.h.b16 %v479
  %v2262 = vunpack.c.l.b16 %v480
  %v2263 = vunpack.c.h.b16 %v480
  %v2264 = vunpack.c.l.b16 %v481
  %v2265 = vunpack.c.h.b16 %v481
  %v2266 = vunpack.c.l.b16 %v482
  %v2267 = vunpack.c.h.b16 %v482
  %v2268 = vunpack.c.l.b16 %v483
  %v2269 = vunpack.c.h.b16 %v483
  %v2270 = vunpack.c.l.b16 %v484
  %v2271 = vunpack.c.h.b16 %v484
  %v2272 = vunpack.c.l.b16 %v485
  %v2273 = vunpack.c.h.b16 %v485
  %v2274 = vunpack.c.l.b16 %v486
  %v2275 = vunpack.c.h.b16 %v486
  %v2276 = vunpack.c.l.b16 %v487
  %v2277 = vunpack.c.h.b16 %v487
  %v2278 = vunpack.c.l.b16 %v488
  %v2279 = vunpack.c.h.b16 %v488
  %v2280 = vunpack.c.l.b16 %v489
  %v2281 = vunpack.c.h.b16 %v489
  %v2282 = vunpack.c.l.b16 %v490
  %v2283 = vunpack.c.h.b16 %v490
  %v2284 = vunpack.c.l.b16 %v491
  %v2285 = vunpack.c.h.b16 %v491
  %v2286 = vunpack.c.l.b16 %v492
  %v2287 = vunpack.c.h.b16 %v492
  %v2288 = vunpack.c.l.b16 %v493
  %v2289 = vunpack.c.h.b16 %v493
  %v2290 = vunpack.c.l.b16 %v494
  %v2291 = vunpack.c.h.b16 %v494
  %v2292 = vunpack.c.l.b16 %v495
  %v2293 = vunpack.c.h.b16 %v495
  %v2294 = vunpack.c.l.b16 %v496
  %v2295 = vunpack.c.h.b16 %v496
  %v2296 = vunpack.c.l.b16 %v497
  %v2297 = vunpack.c.h.b16 %v497
  %v2298 = vunpack.c.l.b16 %v498
  %v2299 = vunpack.c.h.b16 %v498
  %v2300 = vunpack.c.l.b16 %v499
  %v2301 = vunpack.c.h.b16 %v499
  %v2302 = vunpack.c.l.b16 %v500
  %v2303 = vunpack.c.h.b16 %v500
  %v2304 = vunpack.c.l.b16 %v501
  %v2305 = vunpack.c.h.b16 %v501
  %v2306 = vunpack.c.l.b16 %v502
  %v2307 = vunpack.c.h.b16 %v502
  %v2308 = vunpack.c.l.b16 %v503
  %v2309 = vunpack.c.h.b16 %v503
  %v2310 = vunpack.c.l.b16 %v504
  %v2311 = vunpack.c.h.b16 %v504
  %v2312 = vunpack.c.l.b16 %v505
  %v2313 = vunpack.c.h.b16 %v505
  %v2314 = vunpack.c.l.b16 %v506
  %v2315 = vunpack.c.h.b16 %v506
  %v2316 = vunpack.c.l.b16 %v507
  %v2317 = vunpack.c.h.b16 %v507
  %v2318 = vunpack.c.l.b16 %v508
  %v2319 = vunpack.c.h.b16 %v508
  %v2320 = vunpack.c.l.b16 %v509
  %v2321 = vunpack.c.h.b16 %v509
  %v2322 = vunpack.c.l.b16 %v510
  %v2323 = vunpack.c.h.b16 %v510
  %v2324 = vunpack.c.l.b16 %v511
  %v2325 = vunpack.c.h.b16 %v511
  %v2326 = vunpack.c.l.b16 %v512
  %v2327 = vunpack.c.h.b16 %v512
  %v2328 = vunpack.c.l.b16 %v513
  %v2329 = vunpack.c.h.b16 %v513
  %v2330 = vunpack.c.l.b16 %v514
  %v2331 = vunpack.c.h.b16 %v514
  %v2332 = vunpack.c.l.b16 %v515
  %v2333 = vunpack.c.h.b16 %v515
  %v2334 = vunpack.c.l.b16 %v516
  %v2335 = vunpack.c.h.b16 %v516
  %v2336 = vunpack.c.l.b16 %v517
  %v2337 = vunpack.c.h.b16 %v517
  %v2338 = vunpack.c.l.b16 %v518
  %v2339 = vunpack.c.h.b16 %v518
  %v2340 = vunpack.c.l.b16 %v519
  %v2341 = vunpack.c.h.b16 %v519
  %v2342 = vunpack.c.l.b16 %v520
  %v2343 = vunpack.c.h.b16 %v520
  %v2344 = vunpack.c.l.b16 %v521
  %v2345 = vunpack.c.h.b16 %v521
  %v2346 = vunpack.c.l.b16 %v522
  %v2347 = vunpack.c.h.b16 %v522
  %v2348 = vunpack.c.l.b16 %v523
  %v2349 = vunpack.c.h.b16 %v523
  %v2350 = vunpack.c.l.b16 %v524
  %v2351 = vunpack.c.h.b16 %v524
  %v2352 = vunpack.c.l.b16 %v525
  %v2353 = vunpack.c.h.b16 %v525
  %v2354 = vunpack.c.l.b16 %v526
  %v2355 = vunpack.c.h.b16 %v526
  %v2356 = vunpack.c.l.b16 %v527
  %v2357 = vunpack.c.h.b16 %v527
  %v2358 = vunpack.c.l.b16 %v528
  %v2359 = vunpack.c.h.b16 %v528
  %v2360 = vunpack.c.l.b16 %v529
  %v2361 = vunpack.c.h.b16 %v529
  %v2362 = vunpack.c.l.b16 %v530
  %v2363 = vunpack.c.h.b16 %v530
  %v2364 = vunpack.c.l.b16 %v531
  %v2365 = vunpack.c.h.b16 %v531
  %v2366 = vunpack.c.l.b16 %v532
  %v2367 = vunpack.c.h.b16 %v532
  %v2368 = vunpack.c.l.b16 %v533
  %v2369 = vunpack.c.h.b16 %v533
  %v2370 = vunpack.c.l.b16 %v534
  %v2371 = vunpack.c.h.b16 %v534
  %v2372 = vunpack.c.l.b16 %v535
  %v2373 = vunpack.c.h.b16 %v535
  %v2374 = vunpack.c.l.b16 %v536
  %v2375 = vunpack.c.h.b16 %v536
  %v2376 = vunpack.c.l.b16 %v537
  %v2377 = vunpack.c.h.b16 %v537
  %v2378 = vunpack.c.l.b16 %v538
  %v2379 = vunpack.c.h.b16 %v538
  %v2380 = vunpack.c.l.b16 %v539
  %v2381 = vunpack.c.h.b16 %v539
  %v2382 = vunpack.c.l.b16 %v540
  %v2383 = vunpack.c.h.b16 %v540
  %v2384 = vunpack.c.l.b16 %v541
  %v2385 = vunpack.c.h.b16 %v541
  %v2386 = vunpack.c.l.b16 %v542
  %v2387 = vunpack.c.h.b16 %v542
  %v2388 = vunpack.c.l.b16 %v543
  %v2389 = vunpack.c.h.b16 %v543
  %v2390 = vunpack.c.l.b16 %v544
  %v2391 = vunpack.c.h.b16 %v544
  %v2392 = vunpack.c.l.b16 %v545
  %v2393 = vunpack.c.h.b16 %v545
  %v2394 = vunpack.c.l.b16 %v546
  %v2395 = vunpack.c.h.b16 %v546
  %v2396 = vunpack.c.l.b16 %v547
  %v2397 = vunpack.c.h.b16 %v547
  %v2398 = vunpack.c.l.b16 %v548
  %v2399 = vunpack.c.h.b16 %v548
  %v2400 = vunpack.c.l.b16 %v549
  %v2401 = vunpack.c.h.b16 %v549
  %v2402 = vunpack.c.l.b16 %v550
  %v2403 = vunpack.c.h.b16 %v550
  %v2404 = vunpack.c.l.b16 %v551
  %v2405 = vunpack.c.h.b16 %v551
  %v2406 = vunpack.c.l.b16 %v552
  %v2407 = vunpack.c.h.b16 %v552
  %v2408 = vunpack.c.l.b16 %v553
  %v2409 = vunpack.c.h.b16 %v553
  %v2410 = vunpack.c.l.b16 %v554
  %v2411 = vunpack.c.h.b16 %v554
  %v2412 = vunpack.c.l.b16 %v555
  %v2413 = vunpack.c.h.b16 %v555
  %v2414 = vunpack.c.l.b16 %v556
  %v2415 = vunpack.c.h.b16 %v556
  %v2416 = vunpack.c.l.b16 %v557
  %v2417 = vunpack.c.h.b16 %v557
  %v2418 = vunpack.c.l.b16 %v558
  %v2419 = vunpack.c.h.b16 %v558
  %v2420 = vunpack.c.l.b16 %v559
  %v2421 = vunpack.c.h.b16 %v559
  %v2422 = vunpack.c.l.b16 %v560
  %v2423 = vunpack.c.h.b16 %v560
  %v2424 = vunpack.c.l.b16 %v561
  %v2425 = vunpack.c.h.b16 %v561
  %v2426 = vunpack.c.l.b16 %v562
  %v2427 = vunpack.c.h.b16 %v562
  %v2428 = vunpack.c.l.b16 %v563
  %v2429 = vunpack.c.h.b16 %v563
  %v2430 = vunpack.c.l.b16 %v564
  %v2431 = vunpack.c.h.b16 %v564
  %v2432 = vunpack.c.l.b16 %v565
  %v2433 = vunpack.c.h.b16 %v565
  %v2434 = vunpack.c.l.b16 %v566
  %v2435 = vunpack.c.h.b16 %v566
  %v2436 = vunpack.c.l.b16 %v567
  %v2437 = vunpack.c.h.b16 %v567
  %v2438 = vunpack.c.l.b16 %v568
  %v2439 = vunpack.c.h.b16 %v568
  %v2440 = vunpack.c.l.b16 %v569
  %v2441 = vunpack.c.h.b16 %v569
  %v2442 = vunpack.c.l.b16 %v570
  %v2443 = vunpack.c.h.b16 %v570
  %v2444 = vunpack.c.l.b16 %v571
  %v2445 = vunpack.c.h.b16 %v571
  %v2446 = vunpack.c.l.b16 %v572
  %v2447 = vunpack.c.h.b16 %v572
  %v2448 = vunpack.c.l.b16 %v573
  %v2449 = vunpack.c.h.b16 %v573
  %v2450 = vunpack.c.l.b16 %v574
  %v2451 = vunpack.c.h.b16 %v574
  %v2452 = vunpack.c.l.b16 %v575
  %v2453 = vunpack.c.h.b16 %v575
  %v2454 = vunpack.c.l.b16 %v576
  %v2455 = vunpack.c.h.b16 %v576
  %v2456 = vunpack.c.l.b16 %v577
  %v2457 = vunpack.c.h.b16 %v577
  %v2458 = vunpack.c.l.b16 %v578
  %v2459 = vunpack.c.h.b16 %v578
  %v2460 = vunpack.c.l.b16 %v579
  %v2461 = vunpack.c.h.b16 %v579
  %v2462 = vunpack.c.l.b16 %v580
  %v2463 = vunpack.c.h.b16 %v580
  %v2464 = vunpack.c.l.b16 %v581
  %v2465 = vunpack.c.h.b16 %v581
  %v2466 = vunpack.c.l.b16 %v582
  %v2467 = vunpack.c.h.b16 %v582
  %v2468 = vunpack.c.l.b16 %v583
  %v2469 = vunpack.c.h.b16 %v583
  %v2470 = vunpack.c.l.b16 %v584
  %v2471 = vunpack.c.h.b16 %v584
  %v2472 = vunpack.c.l.b16 %v585
  %v2473 = vunpack.c.h.b16 %v585
  %v2474 = vunpack.c.l.b16 %v586
  %v2475 = vunpack.c.h.b16 %v586
  %v2476 = vunpack.c.l.b16 %v587
  %v2477 = vunpack.c.h.b16 %v587
  %v2478 = vunpack.c.l.b16 %v588
  %v2479 = vunpack.c.h.b16 %v588
  %v2480 = vunpack.c.l.b16 %v589
  %v2481 = vunpack.c.h.b16 %v589
  %v2482 = vunpack.c.l.b16 %v590
  %v2483 = vunpack.c.h.b16 %v590
  %v2484 = vunpack.c.l.b16 %v591
  %v2485 = vunpack.c.h.b16 %v591
  %v2486 = vunpack.c.l.b16 %v592
  %v2487 = vunpack.c.h.b16 %v592
  %v2488 = vunpack.c.l.b16 %v593
  %v2489 = vunpack.c.h.b16 %v593
  %v2490 = vunpack.c.l.b16 %v594
  %v2491 = vunpack.c.h.b16 %v594
  %v2492 = vunpack.c.l.b16 %v595
  %v2493 = vunpack.c.h.b16 %v595
  %v2494 = vunpack.c.l.b16 %v596
  %v2495 = vunpack.c.h.b16 %v596
  %v2496 = vunpack.c.l.b16 %v597
  %v2497 = vunpack.c.h.b16 %v597
  %v2498 = vunpack.c.l.b16 %v598
  %v2499 = vunpack.c.h.b16 %v598
  %v2500 = vunpack.c.l.b16 %v599
  %v2501 = vunpack.c.h.b16 %v599
  %v2502 = vunpack.c.l.b16 %v600
  %v2503 = vunpack.c.h.b16 %v600
  %v2504 = vunpack.c.l.b16 %v601
  %v2505 = vunpack.c.h.b16 %v601
  %v2506 = vunpack.c.l.b16 %v602
  %v2507 = vunpack.c.h.b16 %v602
  %v2508 = vunpack.c.l.b16 %v603
  %v2509 = vunpack.c.h.b16 %v603
  %v2510 = vunpack.c.l.b16 %v604
  %v2511 = vunpack.c.h.b16 %v604
  %v2512 = vunpack.c.l.b16 %v605
  %v2513 = vunpack.c.h.b16 %v605
  %v2514 = vunpack.c.l.b16 %v606
  %v2515 = vunpack.c.h.b16 %v606
  %v2516 = vunpack.c.l.b16 %v607
  %v2517 = vunpack.c.h.b16 %v607
  %v2518 = vunpack.c.l.b16 %v608
  %v2519 = vunpack.c.h.b16 %v608
  %v2520 = vunpack.c.l.b16 %v609
  %v2521 = vunpack.c.h.b16 %v609
  %v2522 = vunpack.c.l.b16 %v610
  %v2523 = vunpack.c.h.b16 %v610
  %v2524 = vunpack.c.l.b16 %v611
  %v2525 = vunpack.c.h.b16 %v611
  %v2526 = vunpack.c.l.b16 %v612
  %v2527 = vunpack.c.h.b16 %v612
  %v2528 = vunpack.c.l.b16 %v613
  %v2529 = vunpack.c.h.b16 %v613
  %v2530 = vunpack.c.l.b16 %v614
  %v2531 = vunpack.c.h.b16 %v614
  %v2532 = vunpack.c.l.b16 %v615
  %v2533 = vunpack.c.h.b16 %v615
  %v2534 = vunpack.c.l.b16 %v616
  %v2535 = vunpack.c.h.b16 %v616
  %v2536 = vunpack.c.l.b16 %v617
  %v2537 = vunpack.c.h.b16 %v617
  %v2538 = vunpack.c.l.b16 %v618
  %v2539 = vunpack.c.h.b16 %v618
  %v2540 = vunpack.c.l.b16 %v619
  %v2541 = vunpack.c.h.b16 %v619
  %v2542 = vunpack.c.l.b16 %v620
  %v2543 = vunpack.c.h.b16 %v620
  %v2544 = vunpack.c.l.b16 %v621
  %v2545 = vunpack.c.h.b16 %v621
  %v2546 = vunpack.c.l.b16 %v622
  %v2547 = vunpack.c.h.b16 %v622
  %v2548 = vunpack.c.l.b16 %v623
  %v2549 = vunpack.c.h.b16 %v623
  %v2550 = vunpack.c.l.b16 %v624
  %v2551 = vunpack.c.h.b16 %v624
  %v2552 = vunpack.c.l.b16 %v625
  %v2553 = vunpack.c.h.b16 %v625
  %v2554 = vunpack.c.l.b16 %v626
  %v2555 = vunpack.c.h.b16 %v626
  %v2556 = vunpack.c.l.b16 %v627
  %v2557 = vunpack.c.h.b16 %v627
  %v2558 = vunpack.c.l.b16 %v628
  %v2559 = vunpack.c.h.b16 %v628
  %v2560 = vunpack.c.l.b16 %v629
  %v2561 = vunpack.c.h.b16 %v629
  %v2562 = vunpack.c.l.b16 %v630
  %v2563 = vunpack.c.h.b16 %v630
  %v2564 = vunpack.c.l.b16 %v631
  %v2565 = vunpack.c.h.b16 %v631
  %v2566 = vunpack.c.l.b16 %v632
  %v2567 = vunpack.c.h.b16 %v632
  %v2568 = vunpack.c.l.b16 %v633
  %v2569 = vunpack.c.h.b16 %v633
  %v2570 = vunpack.c.l.b16 %v634
  %v2571 = vunpack.c.h.b16 %v634
  %v2572 = vunpack.c.l.b16 %v635
  %v2573 = vunpack.c.h.b16 %v635
  %v2574 = vunpack.c.l.b16 %v636
  %v2575 = vunpack.c.h.b16 %v636
  %v2576 = vunpack.c.l.b16 %v637
  %v2577 = vunpack.c.h.b16 %v637
  %v2578 = vunpack.c.l.b16 %v638
  %v2579 = vunpack.c.h.b16 %v638
  %v2580 = vunpack.c.l.b16 %v639
  %v2581 = vunpack.c.h.b16 %v639
  %v2582 = vunpack.c.l.b16 %v640
  %v2583 = vunpack.c.h.b16 %v640
  %v2584 = vunpack.c.l.b16 %v641
  %v2585 = vunpack.c.h.b16 %v641
  %v2586 = vunpack.c.l.b16 %v642
  %v2587 = vunpack.c.h.b16 %v642
  %v2588 = vunpack.c.l.b16 %v643
  %v2589 = vunpack.c.h.b16 %v643
  %v2590 = vunpack.c.l.b16 %v644
  %v2591 = vunpack.c.h.b16 %v644
  %v2592 = vunpack.c.l.b16 %v645
  %v2593 = vunpack.c.h.b16 %v645
  %v2594 = vunpack.c.l.b16 %v646
  %v2595 = vunpack.c.h.b16 %v646
  %v2596 = vunpack.c.l.b16 %v647
  %v2597 = vunpack.c.h.b16 %v647
  %v2598 = vunpack.c.l.b16 %v648
  %v2599 = vunpack.c.h.b16 %v648
  %v2600 = vunpack.c.l.b16 %v649
  %v2601 = vunpack.c.h.b16 %v649
  %v2602 = vunpack.c.l.b16 %v650
  %v2603 = vunpack.c.h.b16 %v650
  %v2604 = vunpack.c.l.b16 %v651
  %v2605 = vunpack.c.h.b16 %v651
  %v2606 = vunpack.c.l.b16 %v652
  %v2607 = vunpack.c.h.b16 %v652
  %v2608 = vunpack.c.l.b16 %v653
  %v2609 = vunpack.c.h.b16 %v653
  %v2610 = vunpack.c.l.b16 %v654
  %v2611 = vunpack.c.h.b16 %v654
  %v2612 = vunpack.c.l.b16 %v655
  %v2613 = vunpack.c.h.b16 %v655
  %v2614 = vunpack.c.l.b16 %v656
  %v2615 = vunpack.c.h.b16 %v656
  %v2616 = vunpack.c.l.b16 %v657
  %v2617 = vunpack.c.h.b16 %v657
  %v2618 = vunpack.c.l.b16 %v658
  %v2619 = vunpack.c.h.b16 %v658
  %v2620 = vunpack.c.l.b16 %v659
  %v2621 = vunpack.c.h.b16 %v659
  %v2622 = vunpack.c.l.b16 %v660
  %v2623 = vunpack.c.h.b16 %v660
  %v2624 = vpack.c.b16 %v1380, %v1376
  %v2625 = vpack.c.b16 %v1381, %v1377
  %v2626 = vpack.c.b16 %v1382, %v1378
  %v2627 = vpack.c.b16 %v1383, %v1379
  %v2628 = vpack.c.b16 %v1388, %v1384
  %v2629 = vpack.c.b16 %v1389, %v1385
  %v2630 = vpack.c.b16 %v1390, %v1386
  %v2631 = vpack.c.b16 %v1391, %v1387
  %v2632 = vpack.c.b16 %v1396, %v1392
  %v2633 = vpack.c.b16 %v1397, %v1393
  %v2634 = vpack.c.b16 %v1398, %v1394
  %v2635 = vpack.c.b16 %v1399, %v1395
  %v2636 = vpack.c.b16 %v1404, %v1400
  %v2637 = vpack.c.b16 %v1405, %v1401
  %v2638 = vpack.c.b16 %v1406, %v1402
  %v2639 = vpack.c.b16 %v1407, %v1403
  %v2640 = vpack.c.b16 %v1412, %v1408
  %v2641 = vpack.c.b16 %v1413, %v1409
  %v2642 = vpack.c.b16 %v1414, %v1410
  %v2643 = vpack.c.b16 %v1415, %v1411
  %v2644 = vpack.c.b16 %v1420, %v1416
  %v2645 = vpack.c.b16 %v1421, %v1417
  %v2646 = vpack.c.b16 %v1422, %v1418
  %v2647 = vpack.c.b16 %v1423, %v1419
  %v2648 = vpack.c.b16 %v1428, %v1424
  %v2649 = vpack.c.b16 %v1429, %v1425
  %v2650 = vpack.c.b16 %v1430, %v1426
  %v2651 = vpack.c.b16 %v1431, %v1427
  %v2652 = vpack.c.b16 %v1436, %v1432
  %v2653 = vpack.c.b16 %v1437, %v1433
  %v2654 = vpack.c.b16 %v1438, %v1434
  %v2655 = vpack.c.b16 %v1439, %v1435
  %v2656 = vpack.c.b16 %v1444, %v1440
  %v2657 = vpack.c.b16 %v1445, %v1441
  %v2658 = vpack.c.b16 %v1446, %v1442
  %v2659 = vpack.c.b16 %v1447, %v1443
  %v2660 = vpack.c.b16 %v1452, %v1448
  %v2661 = vpack.c.b16 %v1453, %v1449
  %v2662 = vpack.c.b16 %v1454, %v1450
  %v2663 = vpack.c.b16 %v1455, %v1451
  %v2664 = vpack.c.b16 %v1460, %v1456
  %v2665 = vpack.c.b16 %v1461, %v1457
  %v2666 = vpack.c.b16 %v1462, %v1458
  %v2667 = vpack.c.b16 %v1463, %v1459
  %v2668 = vpack.c.b16 %v1468, %v1464
  %v2669 = vpack.c.b16 %v1469, %v1465
  %v2670 = vpack.c.b16 %v1470, %v1466
  %v2671 = vpack.c.b16 %v1471, %v1467
  %v2672 = vpack.c.b16 %v1476, %v1472
  %v2673 = vpack.c.b16 %v1477, %v1473
  %v2674 = vpack.c.b16 %v1478, %v1474
  %v2675 = vpack.c.b16 %v1479, %v1475
  %v2676 = vpack.c.b16 %v1484, %v1480
  %v2677 = vpack.c.b16 %v1485, %v1481
  %v2678 = vpack.c.b16 %v1486, %v1482
  %v2679 = vpack.c.b16 %v1487, %v1483
  %v2680 = vpack.c.b16 %v1492, %v1488
  %v2681 = vpack.c.b16 %v1493, %v1489
  %v2682 = vpack.c.b16 %v1494, %v1490
  %v2683 = vpack.c.b16 %v1495, %v1491
  %v2684 = vpack.c.b16 %v1500, %v1496
  %v2685 = vpack.c.b16 %v1501, %v1497
  %v2686 = vpack.c.b16 %v1502, %v1498
  %v2687 = vpack.c.b16 %v1503, %v1499
  %v2688 = vpack.c.b16 %v1508, %v1504
  %v2689 = vpack.c.b16 %v1509, %v1505
  %v2690 = vpack.c.b16 %v1510, %v1506
  %v2691 = vpack.c.b16 %v1511, %v1507
  %v2692 = vpack.c.b16 %v1516, %v1512
  %v2693 = vpack.c.b16 %v1517, %v1513
  %v2694 = vpack.c.b16 %v1518, %v1514
  %v2695 = vpack.c.b16 %v1519, %v1515
  %v2696 = vpack.c.b16 %v1524, %v1520
  %v2697 = vpack.c.b16 %v1525, %v1521
  %v2698 = vpack.c.b16 %v1526, %v1522
  %v2699 = vpack.c.b16 %v1527, %v1523
  %v2700 = vpack.c.b16 %v1532, %v1528
  %v2701 = vpack.c.b16 %v1533, %v1529
  %v2702 = vpack.c.b16 %v1534, %v1530
  %v2703 = vpack.c.b16 %v1535, %v1531
  %v2704 = vpack.c.b16 %v1540, %v1536
  %v2705 = vpack.c.b16 %v1541, %v1537
  %v2706 = vpack.c.b16 %v1542, %v1538
  %v2707 = vpack.c.b16 %v1543, %v1539
  %v2708 = vpack.c.b16 %v1548, %v1544
  %v2709 = vpack.c.b16 %v1549, %v1545
  %v2710 = vpack.c.b16 %v1550, %v1546
  %v2711 = vpack.c.b16 %v1551, %v1547
  %v2712 = vpack.c.b16 %v1556, %v1552
  %v2713 = vpack.c.b16 %v1557, %v1553
  %v2714 = vpack.c.b16 %v1558, %v1554
  %v2715 = vpack.c.b16 %v1559, %v1555
  %v2716 = vpack.c.b16 %v1564, %v1560
  %v2717 = vpack.c.b16 %v1565, %v1561
  %v2718 = vpack.c.b16 %v1566, %v1562
  %v2719 = vpack.c.b16 %v1567, %v1563
  %v2720 = vpack.c.b16 %v1572, %v1568
  %v2721 = vpack.c.b16 %v1573, %v1569
  %v2722 = vpack.c.b16 %v1574, %v1570
  %v2723 = vpack.c.b16 %v1575, %v1571
  %v2724 = vpack.c.b16 %v1580, %v1576
  %v2725 = vpack.c.b16 %v1581, %v1577
  %v2726 = vpack.c.b16 %v1582, %v1578
  %v2727 = vpack.c.b16 %v1583, %v1579
  %v2728 = vpack.c.b16 %v1588, %v1584
  %v2729 = vpack.c.b16 %v1589, %v1585
  %v2730 = vpack.c.b16 %v1590, %v1586
  %v2731 = vpack.c.b16 %v1591, %v1587
  %v2732 = vpack.c.b16 %v1596, %v1592
  %v2733 = vpack.c.b16 %v1597, %v1593
  %v2734 = vpack.c.b16 %v1598, %v1594
  %v2735 = vpack.c.b16 %v1599, %v1595
  %v2736 = vpack.c.b16 %v1604, %v1600
  %v2737 = vpack.c.b16 %v1605, %v1601
  %v2738 = vpack.c.b16 %v1606, %v1602
  %v2739 = vpack.c.b16 %v1607, %v1603
  %v2740 = vpack.c.b16 %v1612, %v1608
  %v2741 = vpack.c.b16 %v1613, %v1609
  %v2742 = vpack.c.b16 %v1614, %v1610
  %v2743 = vpack.c.b16 %v1615, %v1611
  %v2744 = vpack.c.b16 %v1620, %v1616
  %v2745 = vpack.c.b16 %v1621, %v1617
  %v2746 = vpack.c.b16 %v1622, %v1618
  %v2747 = vpack.c.b16 %v1623, %v1619
  %v2748 = vpack.c.b16 %v1628, %v1624
  %v2749 = vpack.c.b16 %v1629, %v1625
  %v2750 = vpack.c.b16 %v1630, %v1626
  %v2751 = vpack.c.b16 %v1631, %v1627
  %v2752 = vpack.c.b16 %v1636, %v1632
  %v2753 = vpack.c.b16 %v1637, %v1633
  %v2754 = vpack.c.b16 %v1638, %v1634
  %v2755 = vpack.c.b16 %v1639, %v1635
  %v2756 = vpack.c.b16 %v1644, %v1640
  %v2757 = vpack.c.b16 %v1645, %v1641
  %v2758 = vpack.c.b16 %v1646, %v1642
  %v2759 = vpack.c.b16 %v1647, %v1643
  %v2760 = vpack.c.b16 %v1652, %v1648
  %v2761 = vpack.c.b16 %v1653, %v1649
  %v2762 = vpack.c.b16 %v1654, %v1650
  %v2763 = vpack.c.b16 %v1655, %v1651
  %v2764 = vpack.c.b16 %v1660, %v1656
  %v2765 = vpack.c.b16 %v1661, %v1657
  %v2766 = vpack.c.b16 %v1662, %v1658
  %v2767 = vpack.c.b16 %v1663, %v1659
  %v2768 = vpack.c.b16 %v1668, %v1664
  %v2769 = vpack.c.b16 %v1669, %v1665
  %v2770 = vpack.c.b16 %v1670, %v1666
  %v2771 = vpack.c.b16 %v1671, %v1667
  %v2772 = vpack.c.b16 %v1676, %v1672
  %v2773 = vpack.c.b16 %v1677, %v1673
  %v2774 = vpack.c.b16 %v1678, %v1674
  %v2775 = vpack.c.b16 %v1679, %v1675
  %v2776 = vpack.c.b16 %v1684, %v1680
  %v2777 = vpack.c.b16 %v1685, %v1681
  %v2778 = vpack.c.b16 %v1686, %v1682
  %v2779 = vpack.c.b16 %v1687, %v1683
  %v2780 = vpack.c.b16 %v1692, %v1688
  %v2781 = vpack.c.b16 %v1693, %v1689
  %v2782 = vpack.c.b16 %v1694, %v1690
  %v2783 = vpack.c.b16 %v1695, %v1691
  %v2784 = vpack.c.b16 %v1700, %v1696
  %v2785 = vpack.c.b16 %v1701, %v1697
  %v2786 = vpack.c.b16 %v1702, %v1698
  %v2787 = vpack.c.b16 %v1703, %v1699
  %v2788 = vpack.c.b16 %v1708, %v1704
  %v2789 = vpack.c.b16 %v1709, %v1705
  %v2790 = vpack.c.b16 %v1710, %v1706
  %v2791 = vpack.c.b16 %v1711, %v1707
  %v2792 = vpack.c.b16 %v1716, %v1712
  %v2793 = vpack.c.b16 %v1717, %v1713
  %v2794 = vpack.c.b16 %v1718, %v1714
  %v2795 = vpack.c.b16 %v1719, %v1715
  %v2796 = vpack.c.b16 %v1724, %v1720
  %v2797 = vpack.c.b16 %v1725, %v1721
  %v2798 = vpack.c.b16 %v1726, %v1722
  %v2799 = vpack.c.b16 %v1727, %v1723
  %v2800 = vpack.c.b16 %v1732, %v1728
  %v2801 = vpack.c.b16 %v1733, %v1729
  %v2802 = vpack.c.b16 %v1734, %v1730
  %v2803 = vpack.c.b16 %v1735, %v1731
  %v2804 = vpack.c.b16 %v1740, %v1736
  %v2805 = vpack.c.b16 %v1741, %v1737
  %v2806 = vpack.c.b16 %v1742, %v1738
  %v2807 = vpack.c.b16 %v1743, %v1739
  %v2808 = vpack.c.b16 %v1748, %v1744
  %v2809 = vpack.c.b16 %v1749, %v1745
  %v2810 = vpack.c.b16 %v1750, %v1746
  %v2811 = vpack.c.b16 %v1751, %v1747
  %v2812 = vpack.c.b16 %v1756, %v1752
  %v2813 = vpack.c.b16 %v1757, %v1753
  %v2814 = vpack.c.b16 %v1758, %v1754
  %v2815 = vpack.c.b16 %v1759, %v1755
  %v2816 = vpack.c.b16 %v1764, %v1760
  %v2817 = vpack.c.b16 %v1765, %v1761
  %v2818 = vpack.c.b16 %v1766, %v1762
  %v2819 = vpack.c.b16 %v1767, %v1763
  %v2820 = vpack.c.b16 %v1772, %v1768
  %v2821 = vpack.c.b16 %v1773, %v1769
  %v2822 = vpack.c.b16 %v1774, %v1770
  %v2823 = vpack.c.b16 %v1775, %v1771
  %v2824 = vpack.c.b16 %v1780, %v1776
  %v2825 = vpack.c.b16 %v1781, %v1777
  %v2826 = vpack.c.b16 %v1782, %v1778
  %v2827 = vpack.c.b16 %v1783, %v1779
  %v2828 = vpack.c.b16 %v1788, %v1784
  %v2829 = vpack.c.b16 %v1789, %v1785
  %v2830 = vpack.c.b16 %v1790, %v1786
  %v2831 = vpack.c.b16 %v1791, %v1787
  %v2832 = vpack.c.b16 %v1796, %v1792
  %v2833 = vpack.c.b16 %v1797, %v1793
  %v2834 = vpack.c.b16 %v1798, %v1794
  %v2835 = vpack.c.b16 %v1799, %v1795
  %v2836 = vpack.c.b16 %v1804, %v1800
  %v2837 = vpack.c.b16 %v1805, %v1801
  %v2838 = vpack.c.b16 %v1806, %v1802
  %v2839 = vpack.c.b16 %v1807, %v1803
  %v2840 = vpack.c.b16 %v1812, %v1808
  %v2841 = vpack.c.b16 %v1813, %v1809
  %v2842 = vpack.c.b16 %v1814, %v1810
  %v2843 = vpack.c.b16 %v1815, %v1811
  %v2844 = vpack.c.b16 %v1820, %v1816
  %v2845 = vpack.c.b16 %v1821, %v1817
  %v2846 = vpack.c.b16 %v1822, %v1818
  %v2847 = vpack.c.b16 %v1823, %v1819
  %v2848 = vpack.c.b16 %v1828, %v1824
  %v2849 = vpack.c.b16 %v1829, %v1825
  %v2850 = vpack.c.b16 %v1830, %v1826
  %v2851 = vpack.c.b16 %v1831, %v1827
  %v2852 = vpack.c.b16 %v1836, %v1832
  %v2853 = vpack.c.b16 %v1837, %v1833
  %v2854 = vpack.c.b16 %v1838, %v1834
  %v2855 = vpack.c.b16 %v1839, %v1835
  %v2856 = vpack.c.b16 %v1844, %v1840
  %v2857 = vpack.c.b16 %v1845, %v1841
  %v2858 = vpack.c.b16 %v1846, %v1842
  %v2859 = vpack.c.b16 %v1847, %v1843
  %v2860 = vpack.c.b16 %v1852, %v1848
  %v2861 = vpack.c.b16 %v1853, %v1849
  %v2862 = vpack.c.b16 %v1854, %v1850
  %v2863 = vpack.c.b16 %v1855, %v1851
  %v2864 = vpack.c.b16 %v1860, %v1856
  %v2865 = vpack.c.b16 %v1861, %v1857
  %v2866 = vpack.c.b16 %v1862, %v1858
  %v2867 = vpack.c.b16 %v1863, %v1859
  %v2868 = vpack.c.b16 %v1868, %v1864
  %v2869 = vpack.c.b16 %v1869, %v1865
  %v2870 = vpack.c.b16 %v1870, %v1866
  %v2871 = vpack.c.b16 %v1871, %v1867
  %v2872 = vpack.c.b16 %v1876, %v1872
  %v2873 = vpack.c.b16 %v1877, %v1873
  %v2874 = vpack.c.b16 %v1878, %v1874
  %v2875 = vpack.c.b16 %v1879, %v1875
  %v2876 = vpack.c.b16 %v1884, %v1880
  %v2877 = vpack.c.b16 %v1885, %v1881
  %v2878 = vpack.c.b16 %v1886, %v1882
  %v2879 = vpack.c.b16 %v1887, %v1883
  %v2880 = vpack.c.b16 %v1892, %v1888
  %v2881 = vpack.c.b16 %v1893, %v1889
  %v2882 = vpack.c.b16 %v1894, %v1890
  %v2883 = vpack.c.b16 %v1895, %v1891
  %v2884 = vpack.c.b16 %v1900, %v1896
  %v2885 = vpack.c.b16 %v1901, %v1897
  %v2886 = vpack.c.b16 %v1902, %v1898
  %v2887 = vpack.c.b16 %v1903, %v1899
  %v2888 = vpack.c.b16 %v1908, %v1904
  %v2889 = vpack.c.b16 %v1909, %v1905
  %v2890 = vpack.c.b16 %v1910, %v1906
  %v2891 = vpack.c.b16 %v1911, %v1907
  %v2892 = vpack.c.b16 %v1916, %v1912
  %v2893 = vpack.c.b16 %v1917, %v1913
  %v2894 = vpack.c.b16 %v1918, %v1914
  %v2895 = vpack.c.b16 %v1919, %v1915
  %v2896 = vpack.c.b16 %v1924, %v1920
  %v2897 = vpack.c.b16 %v1925, %v1921
  %v2898 = vpack.c.b16 %v1926, %v1922
  %v2899 = vpack.c.b16 %v1927, %v1923
  %v2900 = vpack.c.b16 %v1932, %v1928
  %v2901 = vpack.c.b16 %v1933, %v1929
  %v2902 = vpack.c.b16 %v1934, %v1930
  %v2903 = vpack.c.b16 %v1935, %v1931
  %v2904 = vpack.c.b16 %v1940, %v1936
  %v2905 = vpack.c.b16 %v1941, %v1937
  %v2906 = vpack.c.b16 %v1942, %v1938
  %v2907 = vpack.c.b16 %v1943, %v1939
  %v2908 = vpack.c.b16 %v1948, %v1944
  %v2909 = vpack.c.b16 %v1949, %v1945
  %v2910 = vpack.c.b16 %v1950, %v1946
  %v2911 = vpack.c.b16 %v1951, %v1947
  %v2912 = vpack.c.b16 %v1956, %v1952
  %v2913 = vpack.c.b16 %v1957, %v1953
  %v2914 = vpack.c.b16 %v1958, %v1954
  %v2915 = vpack.c.b16 %v1959, %v1955
  %v2916 = vpack.c.b16 %v1964, %v1960
  %v2917 = vpack.c.b16 %v1965, %v1961
  %v2918 = vpack.c.b16 %v1966, %v1962
  %v2919 = vpack.c.b16 %v1967, %v1963
  %v2920 = vpack.c.b16 %v1972, %v1968
  %v2921 = vpack.c.b16 %v1973, %v1969
  %v2922 = vpack.c.b16 %v1974, %v1970
  %v2923 = vpack.c.b16 %v1975, %v1971
  %v2924 = vpack.c.b16 %v1980, %v1976
  %v2925 = vpack.c.b16 %v1981, %v1977
  %v2926 = vpack.c.b16 %v1982, %v1978
  %v2927 = vpack.c.b16 %v1983, %v1979
  %v2928 = vpack.c.b16 %v1988, %v1984
  %v2929 = vpack.c.b16 %v1989, %v1985
  %v2930 = vpack.c.b16 %v1990, %v1986
  %v2931 = vpack.c.b16 %v1991, %v1987
  %v2932 = vpack.c.b16 %v1996, %v1992
  %v2933 = vpack.c.b16 %v1997, %v1993
  %v2934 = vpack.c.b16 %v1998, %v1994
  %v2935 = vpack.c.b16 %v1999, %v1995
  %v2936 = vpack.c.b16 %v2004, %v2000
  %v2937 = vpack.c.b16 %v2005, %v2001
  %v2938 = vpack.c.b16 %v2006, %v2002
  %v2939 = vpack.c.b16 %v2007, %v2003
  %v2940 = vpack.c.b16 %v2012, %v2008
  %v2941 = vpack.c.b16 %v2013, %v2009
  %v2942 = vpack.c.b16 %v2014, %v2010
  %v2943 = vpack.c.b16 %v2015, %v2011
  %v2944 = vpack.c.b16 %v2020, %v2016
  %v2945 = vpack.c.b16 %v2021, %v2017
  %v2946 = vpack.c.b16 %v2022, %v2018
  %v2947 = vpack.c.b16 %v2023, %v2019
  %v2948 = vpack.c.b16 %v2028, %v2024
  %v2949 = vpack.c.b16 %v2029, %v2025
  %v2950 = vpack.c.b16 %v2030, %v2026
  %v2951 = vpack.c.b16 %v2031, %v2027
  %v2952 = vpack.c.b16 %v2036, %v2032
  %v2953 = vpack.c.b16 %v2037, %v2033
  %v2954 = vpack.c.b16 %v2038, %v2034
  %v2955 = vpack.c.b16 %v2039, %v2035
  %v2956 = vpack.c.b16 %v2044, %v2040
  %v2957 = vpack.c.b16 %v2045, %v2041
  %v2958 = vpack.c.b16 %v2046, %v2042
  %v2959 = vpack.c.b16 %v2047, %v2043
  %v2960 = vpack.c.b16 %v2052, %v2048
  %v2961 = vpack.c.b16 %v2053, %v2049
  %v2962 = vpack.c.b16 %v2054, %v2050
  %v2963 = vpack.c.b16 %v2055, %v2051
  %v2964 = vpack.c.b16 %v2060, %v2056
  %v2965 = vpack.c.b16 %v2061, %v2057
  %v2966 = vpack.c.b16 %v2062, %v2058
  %v2967 = vpack.c.b16 %v2063, %v2059
  %v2968 = vpack.c.b16 %v2068, %v2064
  %v2969 = vpack.c.b16 %v2069, %v2065
  %v2970 = vpack.c.b16 %v2070, %v2066
  %v2971 = vpack.c.b16 %v2071, %v2067
  %v2972 = vpack.c.b16 %v2076, %v2072
  %v2973 = vpack.c.b16 %v2077, %v2073
  %v2974 = vpack.c.b16 %v2078, %v2074
  %v2975 = vpack.c.b16 %v2079, %v2075
  %v2976 = vpack.c.b16 %v2084, %v2080
  %v2977 = vpack.c.b16 %v2085, %v2081
  %v2978 = vpack.c.b16 %v2086, %v2082
  %v2979 = vpack.c.b16 %v2087, %v2083
  %v2980 = vpack.c.b16 %v2092, %v2088
  %v2981 = vpack.c.b16 %v2093, %v2089
  %v2982 = vpack.c.b16 %v2094, %v2090
  %v2983 = vpack.c.b16 %v2095, %v2091
  %v2984 = vpack.c.b16 %v2100, %v2096
  %v2985 = vpack.c.b16 %v2101, %v2097
  %v2986 = vpack.c.b16 %v2102, %v2098
  %v2987 = vpack.c.b16 %v2103, %v2099
  %v2988 = vpack.c.b16 %v2108, %v2104
  %v2989 = vpack.c.b16 %v2109, %v2105
  %v2990 = vpack.c.b16 %v2110, %v2106
  %v2991 = vpack.c.b16 %v2111, %v2107
  %v2992 = vpack.c.b16 %v2116, %v2112
  %v2993 = vpack.c.b16 %v2117, %v2113
  %v2994 = vpack.c.b16 %v2118, %v2114
  %v2995 = vpack.c.b16 %v2119, %v2115
  %v2996 = vpack.c.b16 %v2124, %v2120
  %v2997 = vpack.c.b16 %v2125, %v2121
  %v2998 = vpack.c.b16 %v2126, %v2122
  %v2999 = vpack.c.b16 %v2127, %v2123
  %v3000 = vpack.c.b16 %v2132, %v2128
  %v3001 = vpack.c.b16 %v2133, %v2129
  %v3002 = vpack.c.b16 %v2134, %v2130
  %v3003 = vpack.c.b16 %v2135, %v2131
  %v3004 = vpack.c.b16 %v2140, %v2136
  %v3005 = vpack.c.b16 %v2141, %v2137
  %v3006 = vpack.c.b16 %v2142, %v2138
  %v3007 = vpack.c.b16 %v2143, %v2139
  %v3008 = vpack.c.b16 %v2148, %v2144
  %v3009 = vpack.c.b16 %v2149, %v2145
  %v3010 = vpack.c.b16 %v2150, %v2146
  %v3011 = vpack.c.b16 %v2151, %v2147
  %v3012 = vpack.c.b16 %v2156, %v2152
  %v3013 = vpack.c.b16 %v2157, %v2153
  %v3014 = vpack.c.b16 %v2158, %v2154
  %v3015 = vpack.c.b16 %v2159, %v2155
  %v3016 = vpack.c.b16 %v2164, %v2160
  %v3017 = vpack.c.b16 %v2165, %v2161
  %v3018 = vpack.c.b16 %v2166, %v2162
  %v3019 = vpack.c.b16 %v2167, %v2163
  %v3020 = vpack.c.b16 %v2172, %v2168
  %v3021 = vpack.c.b16 %v2173, %v2169
  %v3022 = vpack.c.b16 %v2174, %v2170
  %v3023 = vpack.c.b16 %v2175, %v2171
  %v3024 = vpack.c.b16 %v2180, %v2176
  %v3025 = vpack.c.b16 %v2181, %v2177
  %v3026 = vpack.c.b16 %v2182, %v2178
  %v3027 = vpack.c.b16 %v2183, %v2179
  %v3028 = vpack.c.b16 %v2188, %v2184
  %v3029 = vpack.c.b16 %v2189, %v2185
  %v3030 = vpack.c.b16 %v2190, %v2186
  %v3031 = vpack.c.b16 %v2191, %v2187
  %v3032 = vpack.c.b16 %v2196, %v2192
  %v3033 = vpack.c.b16 %v2197, %v2193
  %v3034 = vpack.c.b16 %v2198, %v2194
  %v3035 = vpack.c.b16 %v2199, %v2195
  %v3036 = vpack.c.b16 %v2204, %v2200
  %v3037 = vpack.c.b16 %v2205, %v2201
  %v3038 = vpack.c.b16 %v2206, %v2202
  %v3039 = vpack.c.b16 %v2207, %v2203
  %v3040 = vpack.c.b16 %v2212, %v2208
  %v3041 = vpack.c.b16 %v2213, %v2209
  %v3042 = vpack.c.b16 %v2214, %v2210
  %v3043 = vpack.c.b16 %v2215, %v2211
  %v3044 = vpack.c.b16 %v2220, %v2216
  %v3045 = vpack.c.b16 %v2221, %v2217
  %v3046 = vpack.c.b16 %v2222, %v2218
  %v3047 = vpack.c.b16 %v2223, %v2219
  %v3048 = vpack.c.b16 %v2228, %v2224
  %v3049 = vpack.c.b16 %v2229, %v2225
  %v3050 = vpack.c.b16 %v2230, %v2226
  %v3051 = vpack.c.b16 %v2231, %v2227
  %v3052 = vpack.c.b16 %v2236, %v2232
  %v3053 = vpack.c.b16 %v2237, %v2233
  %v3054 = vpack.c.b16 %v2238, %v2234
  %v3055 = vpack.c.b16 %v2239, %v2235
  %v3056 = vpack.c.b16 %v2244, %v2240
  %v3057 = vpack.c.b16 %v2245, %v2241
  %v3058 = vpack.c.b16 %v2246, %v2242
  %v3059 = vpack.c.b16 %v2247, %v2243
  %v3060 = vpack.c.b16 %v2252, %v2248
  %v3061 = vpack.c.b16 %v2253, %v2249
  %v3062 = vpack.c.b16 %v2254, %v2250
  %v3063 = vpack.c.b16 %v2255, %v2251
  %v3064 = vpack.c.b16 %v2260, %v2256
  %v3065 = vpack.c.b16 %v2261, %v2257
  %v3066 = vpack.c.b16 %v2262, %v2258
  %v3067 = vpack.c.b16 %v2263, %v2259
  %v3068 = vpack.c.b16 %v2268, %v2264
  %v3069 = vpack.c.b16 %v2269, %v2265
  %v3070 = vpack.c.b16 %v2270, %v2266
  %v3071 = vpack.c.b16 %v2271, %v2267
  %v3072 = vpack.c.b16 %v2276, %v2272
  %v3073 = vpack.c.b16 %v2277, %v2273
  %v3074 = vpack.c.b16 %v2278, %v2274
  %v3075 = vpack.c.b16 %v2279, %v2275
  %v3076 = vpack.c.b16 %v2284, %v2280
  %v3077 = vpack.c.b16 %v2285, %v2281
  %v3078 = vpack.c.b16 %v2286, %v2282
  %v3079 = vpack.c.b16 %v2287, %v2283
  %v3080 = vpack.c.b16 %v2292, %v2288
  %v3081 = vpack.c.b16 %v2293, %v2289
  %v3082 = vpack.c.b16 %v2294, %v2290
  %v3083 = vpack.c.b16 %v2295, %v2291
  %v3084 = vpack.c.b16 %v2300, %v2296
  %v3085 = vpack.c.b16 %v2301, %v2297
  %v3086 = vpack.c.b16 %v2302, %v2298
  %v3087 = vpack.c.b16 %v2303, %v2299
  %v3088 = vpack.c.b16 %v2308, %v2304
  %v3089 = vpack.c.b16 %v2309, %v2305
  %v3090 = vpack.c.b16 %v2310, %v2306
  %v3091 = vpack.c.b16 %v2311, %v2307
  %v3092 = vpack.c.b16 %v2316, %v2312
  %v3093 = vpack.c.b16 %v2317, %v2313
  %v3094 = vpack.c.b16 %v2318, %v2314
  %v3095 = vpack.c.b16 %v2319, %v2315
  %v3096 = vpack.c.b16 %v2324, %v2320
  %v3097 = vpack.c.b16 %v2325, %v2321
  %v3098 = vpack.c.b16 %v2326, %v2322
  %v3099 = vpack.c.b16 %v2327, %v2323
  %v3100 = vpack.c.b16 %v2332, %v2328
  %v3101 = vpack.c.b16 %v2333, %v2329
  %v3102 = vpack.c.b16 %v2334, %v2330
  %v3103 = vpack.c.b16 %v2335, %v2331
  %v3104 = vpack.c.b16 %v2340, %v2336
  %v3105 = vpack.c.b16 %v2341, %v2337
  %v3106 = vpack.c.b16 %v2342, %v2338
  %v3107 = vpack.c.b16 %v2343, %v2339
  %v3108 = vpack.c.b16 %v2348, %v2344
  %v3109 = vpack.c.b16 %v2349, %v2345
  %v3110 = vpack.c.b16 %v2350, %v2346
  %v3111 = vpack.c.b16 %v2351, %v2347
  %v3112 = vpack.c.b16 %v2356, %v2352
  %v3113 = vpack.c.b16 %v2357, %v2353
  %v3114 = vpack.c.b16 %v2358, %v2354
  %v3115 = vpack.c.b16 %v2359, %v2355
  %v3116 = vpack.c.b16 %v2364, %v2360
  %v3117 = vpack.c.b16 %v2365, %v2361
  %v3118 = vpack.c.b16 %v2366, %v2362
  %v3119 = vpack.c.b16 %v2367, %v2363
  %v3120 = vpack.c.b16 %v2372, %v2368
  %v3121 = vpack.c.b16 %v2373, %v2369
  %v3122 = vpack.c.b16 %v2374, %v2370
  %v3123 = vpack.c.b16 %v2375, %v2371
  %v3124 = vpack.c.b16 %v2380, %v2376
  %v3125 = vpack.c.b16 %v2381, %v2377
  %v3126 = vpack.c.b16 %v2382, %v2378
  %v3127 = vpack.c.b16 %v2383, %v2379
  %v3128 = vpack.c.b16 %v2388, %v2384
  %v3129 = vpack.c.b16 %v2389, %v2385
  %v3130 = vpack.c.b16 %v2390, %v2386
  %v3131 = vpack.c.b16 %v2391, %v2387
  %v3132 = vpack.c.b16 %v2396, %v2392
  %v3133 = vpack.c.b16 %v2397, %v2393
  %v3134 = vpack.c.b16 %v2398, %v2394
  %v3135 = vpack.c.b16 %v2399, %v2395
  %v3136 = vpack.c.b16 %v2404, %v2400
  %v3137 = vpack.c.b16 %v2405, %v2401
  %v3138 = vpack.c.b16 %v2406, %v2402
  %v3139 = vpack.c.b16 %v2407, %v2403
  %v3140 = vpack.c.b16 %v2412, %v2408
  %v3141 = vpack.c.b16 %v2413, %v2409
  %v3142 = vpack.c.b16 %v2414, %v2410
  %v3143 = vpack.c.b16 %v2415, %v2411
  %v3144 = vpack.c.b16 %v2420, %v2416
  %v3145 = vpack.c.b16 %v2421, %v2417
  %v3146 = vpack.c.b16 %v2422, %v2418
  %v3147 = vpack.c.b16 %v2423, %v2419
  %v3148 = vpack.c.b16 %v2428, %v2424
  %v3149 = vpack.c.b16 %v2429, %v2425
  %v3150 = vpack.c.b16 %v2430, %v2426
  %v3151 = vpack.c.b16 %v2431, %v2427
  %v3152 = vpack.c.b16 %v2436, %v2432
  %v3153 = vpack.c.b16 %v2437, %v2433
  %v3154 = vpack.c.b16 %v2438, %v2434
  %v3155 = vpack.c.b16 %v2439, %v2435
  %v3156 = vpack.c.b16 %v2444, %v2440
  %v3157 = vpack.c.b16 %v2445, %v2441
  %v3158 = vpack.c.b16 %v2446, %v2442
  %v3159 = vpack.c.b16 %v2447, %v2443
  %v3160 = vpack.c.b16 %v2452, %v2448
  %v3161 = vpack.c.b16 %v2453, %v2449
  %v3162 = vpack.c.b16 %v2454, %v2450
  %v3163 = vpack.c.b16 %v2455, %v2451
  %v3164 = vpack.c.b16 %v2460, %v2456
  %v3165 = vpack.c.b16 %v2461, %v2457
  %v3166 = vpack.c.b16 %v2462, %v2458
  %v3167 = vpack.c.b16 %v2463, %v2459
  %v3168 = vpack.c.b16 %v2468, %v2464
  %v3169 = vpack.c.b16 %v2469, %v2465
  %v3170 = vpack.c.b16 %v2470, %v2466
  %v3171 = vpack.c.b16 %v2471, %v2467
  %v3172 = vpack.c.b16 %v2476, %v2472
  %v3173 = vpack.c.b16 %v2477, %v2473
  %v3174 = vpack.c.b16 %v2478, %v2474
  %v3175 = vpack.c.b16 %v2479, %v2475
  %v3176 = vpack.c.b16 %v2484, %v2480
  %v3177 = vpack.c.b16 %v2485, %v2481
  %v3178 = vpack.c.b16 %v2486, %v2482
  %v3179 = vpack.c.b16 %v2487, %v2483
  %v3180 = vpack.c.b16 %v2492, %v2488
  %v3181 = vpack.c.b16 %v2493, %v2489
  %v3182 = vpack.c.b16 %v2494, %v2490
  %v3183 = vpack.c.b16 %v2495, %v2491
  %v3184 = vpack.c.b16 %v2500, %v2496
  %v3185 = vpack.c.b16 %v2501, %v2497
  %v3186 = vpack.c.b16 %v2502, %v2498
  %v3187 = vpack.c.b16 %v2503, %v2499
  %v3188 = vpack.c.b16 %v2508, %v2504
  %v3189 = vpack.c.b16 %v2509, %v2505
  %v3190 = vpack.c.b16 %v2510, %v2506
  %v3191 = vpack.c.b16 %v2511, %v2507
  %v3192 = vpack.c.b16 %v2516, %v2512
  %v3193 = vpack.c.b16 %v2517, %v2513
  %v3194 = vpack.c.b16 %v2518, %v2514
  %v3195 = vpack.c.b16 %v2519, %v2515
  %v3196 = vpack.c.b16 %v2524, %v2520
  %v3197 = vpack.c.b16 %v2525, %v2521
  %v3198 = vpack.c.b16 %v2526, %v2522
  %v3199 = vpack.c.b16 %v2527, %v2523
  %v3200 = vpack.c.b16 %v2532, %v2528
  %v3201 = vpack.c.b16 %v2533, %v2529
  %v3202 = vpack.c.b16 %v2534, %v2530
  %v3203 = vpack.c.b16 %v2535, %v2531
  %v3204 = vpack.c.b16 %v2540, %v2536
  %v3205 = vpack.c.b16 %v2541, %v2537
  %v3206 = vpack.c.b16 %v2542, %v2538
  %v3207 = vpack.c.b16 %v2543, %v2539
  %v3208 = vpack.c.b16 %v2548, %v2544
  %v3209 = vpack.c.b16 %v2549, %v2545
  %v3210 = vpack.c.b16 %v2550, %v2546
  %v3211 = vpack.c.b16 %v2551, %v2547
  %v3212 = vpack.c.b16 %v2556, %v2552
  %v3213 = vpack.c.b16 %v2557, %v2553
  %v3214 = vpack.c.b16 %v2558, %v2554
  %v3215 = vpack.c.b16 %v2559, %v2555
  %v3216 = vpack.c.b16 %v2564, %v2560
  %v3217 = vpack.c.b16 %v2565, %v2561
  %v3218 = vpack.c.b16 %v2566, %v2562
  %v3219 = vpack.c.b16 %v2567, %v2563
  %v3220 = vpack.c.b16 %v2572, %v2568
  %v3221 = vpack.c.b16 %v2573, %v2569
  %v3222 = vpack.c.b16 %v2574, %v2570
  %v3223 = vpack.c.b16 %v2575, %v2571
  %v3224 = vpack.c.b16 %v2580, %v2576
  %v3225 = vpack.c.b16 %v2581, %v2577
  %v3226 = vpack.c.b16 %v2582, %v2578
  %v3227 = vpack.c.b16 %v2583, %v2579
  %v3228 = vpack.c.b16 %v2588, %v2584
  %v3229 = vpack.c.b16 %v2589, %v2585
  %v3230 = vpack.c.b16 %v2590, %v2586
  %v3231 = vpack.c.b16 %v2591, %v2587
  %v3232 = vpack.c.b16 %v2596, %v2592
  %v3233 = vpack.c.b16 %v2597, %v2593
  %v3234 = vpack.c.b16 %v2598, %v2594
  %v3235 = vpack.c.b16 %v2599, %v2595
  %v3236 = vpack.c.b16 %v2604, %v2600
  %v3237 = vpack.c.b16 %v2605, %v2601
  %v3238 = vpack.c.b16 %v2606, %v2602
  %v3239 = vpack.c.b16 %v2607, %v2603
  %v3240 = vpack.c.b16 %v2612, %v2608
  %v3241 = vpack.c.b16 %v2613, %v2609
  %v3242 = vpack.c.b16 %v2614, %v2610
  %v3243 = vpack.c.b16 %v2615, %v2611
  %v3244 = vpack.c.b16 %v2620, %v2616
  %v3245 = vpack.c.b16 %v2621, %v2617
  %v3246 = vpack.c.b16 %v2622, %v2618
  %v3247 = vpack.c.b16 %v2623, %v2619
  %vm3872 = vcmask 523264
  %v3874 = vsel %vm3872, %v732, 0
  %3876 = vmatprep.subr.bf16.mxu0 %v2625
  %3877 = vmatpush1.bf16.msra.mxu0 %v2624
  %3878 = vmatprep.subr.bf16.mxu0 %v2629
  %3879 = vmatpush1.bf16.msra.mxu0 %v2628
  %3880 = vmatprep.subr.bf16.mxu0 %v2633
  %3881 = vmatpush1.bf16.msra.mxu0 %v2632
  %3882 = vmatprep.subr.bf16.mxu0 %v2637
  %3883 = vmatpush1.bf16.msra.mxu0 %v2636
  %3884 = vmatprep.subr.bf16.mxu0 %v2641
  %3885 = vmatpush1.bf16.msra.mxu0 %v2640
  %3886 = vmatprep.subr.bf16.mxu0 %v2645
  %3887 = vmatpush1.bf16.msra.mxu0 %v2644
  %3888 = vmatprep.subr.bf16.mxu0 %v2649
  %3889 = vmatpush1.bf16.msra.mxu0 %v2648
  %3890 = vmatprep.subr.bf16.mxu0 %v2653
  %3891 = vmatpush1.bf16.msra.mxu0 %v2652
  %3892 = vmatprep.subr.bf16.mxu0 %v2657
  %3893 = vmatpush1.bf16.msra.mxu0 %v2656
  %3894 = vmatprep.subr.bf16.mxu0 %v2661
  %3895 = vmatpush1.bf16.msra.mxu0 %v2660
  %3896 = vmatprep.subr.bf16.mxu0 %v2665
  %3897 = vmatpush1.bf16.msra.mxu0 %v2664
  %3898 = vmatprep.subr.bf16.mxu0 %v2669
  %3899 = vmatpush1.bf16.msra.mxu0 %v2668
  %3900 = vmatprep.subr.bf16.mxu0 %v2673
  %3901 = vmatpush1.bf16.msra.mxu0 %v2672
  %3902 = vmatprep.subr.bf16.mxu0 %v2677
  %3903 = vmatpush1.bf16.msra.mxu0 %v2676
  %3904 = vmatprep.subr.bf16.mxu0 %v2681
  %3905 = vmatpush1.bf16.msra.mxu0 %v2680
  %3906 = vmatprep.subr.bf16.mxu0 %v2685
  %3907 = vmatpush1.bf16.msra.mxu0 %v2684
  %3908 = vmatprep.mubr.bf16.mxu0 %v714
  %3909 = vmatmul.mubr.bf16.gmra.mrb[0].mxu0 %v713
  %v3910 = vpop.f32.mrb[0].mxu0
  %v3911 = vadd.f32 %v666, %v3910
  %v3912 = vpop.f32.mrb[0].mxu0
  %v3913 = vadd.f32 %v670, %v3912
  %v3914 = vpop.f32.mrb[0].mxu0
  %v3915 = vpop.f32.mrb[0].mxu0
  %3916 = vdwg.mxu0
  %3917 = vmatprep.subr.bf16.mxu0 %v2689
  %3918 = vmatpush1.bf16.msra.mxu0 %v2688
  %3919 = vmatprep.subr.bf16.mxu0 %v2693
  %3920 = vmatpush1.bf16.msra.mxu0 %v2692
  %3921 = vmatprep.subr.bf16.mxu0 %v2697
  %3922 = vmatpush1.bf16.msra.mxu0 %v2696
  %3923 = vmatprep.subr.bf16.mxu0 %v2701
  %3924 = vmatpush1.bf16.msra.mxu0 %v2700
  %3925 = vmatprep.subr.bf16.mxu0 %v2705
  %3926 = vmatpush1.bf16.msra.mxu0 %v2704
  %3927 = vmatprep.subr.bf16.mxu0 %v2709
  %3928 = vmatpush1.bf16.msra.mxu0 %v2708
  %3929 = vmatprep.subr.bf16.mxu0 %v2713
  %3930 = vmatpush1.bf16.msra.mxu0 %v2712
  %3931 = vmatprep.subr.bf16.mxu0 %v2717
  %3932 = vmatpush1.bf16.msra.mxu0 %v2716
  %3933 = vmatprep.subr.bf16.mxu0 %v2721
  %3934 = vmatpush1.bf16.msra.mxu0 %v2720
  %3935 = vmatprep.subr.bf16.mxu0 %v2725
  %3936 = vmatpush1.bf16.msra.mxu0 %v2724
  %3937 = vmatprep.subr.bf16.mxu0 %v2729
  %3938 = vmatpush1.bf16.msra.mxu0 %v2728
  %3939 = vmatprep.subr.bf16.mxu0 %v2733
  %3940 = vmatpush1.bf16.msra.mxu0 %v2732
  %3941 = vmatprep.subr.bf16.mxu0 %v2737
  %3942 = vmatpush1.bf16.msra.mxu0 %v2736
  %3943 = vmatprep.subr.bf16.mxu0 %v2741
  %3944 = vmatpush1.bf16.msra.mxu0 %v2740
  %3945 = vmatprep.subr.bf16.mxu0 %v2745
  %3946 = vmatpush1.bf16.msra.mxu0 %v2744
  %3947 = vmatprep.subr.bf16.mxu0 %v2749
  %3948 = vmatpush1.bf16.msra.mxu0 %v2748
  %3949 = vmatprep.mubr.bf16.mxu0 %v716
  %3950 = vmatmul.mubr.bf16.gmra.mrb[0].mxu0 %v715
  %v3951 = vpop.f32.mrb[0].mxu0
  %v3952 = vadd.f32 %v3911, %v3951
  %v3953 = vpop.f32.mrb[0].mxu0
  %v3954 = vadd.f32 %v3913, %v3953
  %v3955 = vpop.f32.mrb[0].mxu0
  %v3956 = vpop.f32.mrb[0].mxu0
  %3957 = vdwg.mxu0
  %3958 = vmatprep.subr.bf16.mxu0 %v2753
  %3959 = vmatpush1.bf16.msra.mxu0 %v2752
  %3960 = vmatprep.subr.bf16.mxu0 %v2757
  %3961 = vmatpush1.bf16.msra.mxu0 %v2756
  %3962 = vmatprep.subr.bf16.mxu0 %v2761
  %3963 = vmatpush1.bf16.msra.mxu0 %v2760
  %3964 = vmatprep.subr.bf16.mxu0 %v2765
  %3965 = vmatpush1.bf16.msra.mxu0 %v2764
  %3966 = vmatprep.subr.bf16.mxu0 %v2769
  %3967 = vmatpush1.bf16.msra.mxu0 %v2768
  %3968 = vmatprep.subr.bf16.mxu0 %v2773
  %3969 = vmatpush1.bf16.msra.mxu0 %v2772
  %3970 = vmatprep.subr.bf16.mxu0 %v2777
  %3971 = vmatpush1.bf16.msra.mxu0 %v2776
  %3972 = vmatprep.subr.bf16.mxu0 %v2781
  %3973 = vmatpush1.bf16.msra.mxu0 %v2780
  %3974 = vmatprep.subr.bf16.mxu0 %v2785
  %3975 = vmatpush1.bf16.msra.mxu0 %v2784
  %3976 = vmatprep.subr.bf16.mxu0 %v2789
  %3977 = vmatpush1.bf16.msra.mxu0 %v2788
  %3978 = vmatprep.subr.bf16.mxu0 %v2793
  %3979 = vmatpush1.bf16.msra.mxu0 %v2792
  %3980 = vmatprep.subr.bf16.mxu0 %v2797
  %3981 = vmatpush1.bf16.msra.mxu0 %v2796
  %3982 = vmatprep.subr.bf16.mxu0 %v2801
  %3983 = vmatpush1.bf16.msra.mxu0 %v2800
  %3984 = vmatprep.subr.bf16.mxu0 %v2805
  %3985 = vmatpush1.bf16.msra.mxu0 %v2804
  %3986 = vmatprep.subr.bf16.mxu0 %v2809
  %3987 = vmatpush1.bf16.msra.mxu0 %v2808
  %3988 = vmatprep.subr.bf16.mxu0 %v2813
  %3989 = vmatpush1.bf16.msra.mxu0 %v2812
  %3990 = vmatprep.mubr.bf16.mxu0 %v718
  %3991 = vmatmul.mubr.bf16.gmra.mrb[0].mxu0 %v717
  %v3992 = vpop.f32.mrb[0].mxu0
  %v3993 = vadd.f32 %v3952, %v3992
  %v3994 = vpop.f32.mrb[0].mxu0
  %v3995 = vadd.f32 %v3954, %v3994
  %v3996 = vpop.f32.mrb[0].mxu0
  %v3997 = vpop.f32.mrb[0].mxu0
  %3998 = vdwg.mxu0
  %3999 = vmatprep.subr.bf16.mxu0 %v2817
  %4000 = vmatpush1.bf16.msra.mxu0 %v2816
  %4001 = vmatprep.subr.bf16.mxu0 %v2821
  %4002 = vmatpush1.bf16.msra.mxu0 %v2820
  %4003 = vmatprep.subr.bf16.mxu0 %v2825
  %4004 = vmatpush1.bf16.msra.mxu0 %v2824
  %4005 = vmatprep.subr.bf16.mxu0 %v2829
  %4006 = vmatpush1.bf16.msra.mxu0 %v2828
  %4007 = vmatprep.subr.bf16.mxu0 %v2833
  %4008 = vmatpush1.bf16.msra.mxu0 %v2832
  %4009 = vmatprep.subr.bf16.mxu0 %v2837
  %4010 = vmatpush1.bf16.msra.mxu0 %v2836
  %4011 = vmatprep.subr.bf16.mxu0 %v2841
  %4012 = vmatpush1.bf16.msra.mxu0 %v2840
  %4013 = vmatprep.subr.bf16.mxu0 %v2845
  %4014 = vmatpush1.bf16.msra.mxu0 %v2844
  %4015 = vmatprep.subr.bf16.mxu0 %v2849
  %4016 = vmatpush1.bf16.msra.mxu0 %v2848
  %4017 = vmatprep.subr.bf16.mxu0 %v2853
  %4018 = vmatpush1.bf16.msra.mxu0 %v2852
  %4019 = vmatprep.subr.bf16.mxu0 %v2857
  %4020 = vmatpush1.bf16.msra.mxu0 %v2856
  %4021 = vmatprep.subr.bf16.mxu0 %v2861
  %4022 = vmatpush1.bf16.msra.mxu0 %v2860
  %4023 = vmatprep.subr.bf16.mxu0 %v2865
  %4024 = vmatpush1.bf16.msra.mxu0 %v2864
  %4025 = vmatprep.subr.bf16.mxu0 %v2869
  %4026 = vmatpush1.bf16.msra.mxu0 %v2868
  %4027 = vmatprep.subr.bf16.mxu0 %v2873
  %4028 = vmatpush1.bf16.msra.mxu0 %v2872
  %4029 = vmatprep.subr.bf16.mxu0 %v2877
  %4030 = vmatpush1.bf16.msra.mxu0 %v2876
  %4031 = vmatprep.mubr.bf16.mxu0 %v720
  %4032 = vmatmul.mubr.bf16.gmra.mrb[0].mxu0 %v719
  %v4033 = vpop.f32.mrb[0].mxu0
  %v4034 = vadd.f32 %v3993, %v4033
  %v4035 = vpop.f32.mrb[0].mxu0
  %v4036 = vadd.f32 %v3995, %v4035
  %v4037 = vpop.f32.mrb[0].mxu0
  %v4038 = vpop.f32.mrb[0].mxu0
  %4039 = vdwg.mxu0
  %4040 = vmatprep.subr.bf16.mxu0 %v2881
  %4041 = vmatpush1.bf16.msra.mxu0 %v2880
  %4042 = vmatprep.subr.bf16.mxu0 %v2885
  %4043 = vmatpush1.bf16.msra.mxu0 %v2884
  %4044 = vmatprep.subr.bf16.mxu0 %v2889
  %4045 = vmatpush1.bf16.msra.mxu0 %v2888
  %4046 = vmatprep.subr.bf16.mxu0 %v2893
  %4047 = vmatpush1.bf16.msra.mxu0 %v2892
  %4048 = vmatprep.subr.bf16.mxu0 %v2897
  %4049 = vmatpush1.bf16.msra.mxu0 %v2896
  %4050 = vmatprep.subr.bf16.mxu0 %v2901
  %4051 = vmatpush1.bf16.msra.mxu0 %v2900
  %4052 = vmatprep.subr.bf16.mxu0 %v2905
  %4053 = vmatpush1.bf16.msra.mxu0 %v2904
  %4054 = vmatprep.subr.bf16.mxu0 %v2909
  %4055 = vmatpush1.bf16.msra.mxu0 %v2908
  %4056 = vmatprep.subr.bf16.mxu0 %v2913
  %4057 = vmatpush1.bf16.msra.mxu0 %v2912
  %4058 = vmatprep.subr.bf16.mxu0 %v2917
  %4059 = vmatpush1.bf16.msra.mxu0 %v2916
  %4060 = vmatprep.subr.bf16.mxu0 %v2921
  %4061 = vmatpush1.bf16.msra.mxu0 %v2920
  %4062 = vmatprep.subr.bf16.mxu0 %v2925
  %4063 = vmatpush1.bf16.msra.mxu0 %v2924
  %4064 = vmatprep.subr.bf16.mxu0 %v2929
  %4065 = vmatpush1.bf16.msra.mxu0 %v2928
  %4066 = vmatprep.subr.bf16.mxu0 %v2933
  %4067 = vmatpush1.bf16.msra.mxu0 %v2932
  %4068 = vmatprep.subr.bf16.mxu0 %v2937
  %4069 = vmatpush1.bf16.msra.mxu0 %v2936
  %4070 = vmatprep.subr.bf16.mxu0 %v2941
  %4071 = vmatpush1.bf16.msra.mxu0 %v2940
  %4072 = vmatprep.mubr.bf16.mxu0 %v722
  %4073 = vmatmul.mubr.bf16.gmra.mrb[0].mxu0 %v721
  %v4074 = vpop.f32.mrb[0].mxu0
  %v4075 = vadd.f32 %v4034, %v4074
  %v4076 = vpop.f32.mrb[0].mxu0
  %v4077 = vadd.f32 %v4036, %v4076
  %v4078 = vpop.f32.mrb[0].mxu0
  %v4079 = vpop.f32.mrb[0].mxu0
  %4080 = vdwg.mxu0
  %4081 = vmatprep.subr.bf16.mxu0 %v2945
  %4082 = vmatpush1.bf16.msra.mxu0 %v2944
  %4083 = vmatprep.subr.bf16.mxu0 %v2949
  %4084 = vmatpush1.bf16.msra.mxu0 %v2948
  %4085 = vmatprep.subr.bf16.mxu0 %v2953
  %4086 = vmatpush1.bf16.msra.mxu0 %v2952
  %4087 = vmatprep.subr.bf16.mxu0 %v2957
  %4088 = vmatpush1.bf16.msra.mxu0 %v2956
  %4089 = vmatprep.subr.bf16.mxu0 %v2961
  %4090 = vmatpush1.bf16.msra.mxu0 %v2960
  %4091 = vmatprep.subr.bf16.mxu0 %v2965
  %4092 = vmatpush1.bf16.msra.mxu0 %v2964
  %4093 = vmatprep.subr.bf16.mxu0 %v2969
  %4094 = vmatpush1.bf16.msra.mxu0 %v2968
  %4095 = vmatprep.subr.bf16.mxu0 %v2973
  %4096 = vmatpush1.bf16.msra.mxu0 %v2972
  %4097 = vmatprep.subr.bf16.mxu0 %v2977
  %4098 = vmatpush1.bf16.msra.mxu0 %v2976
  %4099 = vmatprep.subr.bf16.mxu0 %v2981
  %4100 = vmatpush1.bf16.msra.mxu0 %v2980
  %4101 = vmatprep.subr.bf16.mxu0 %v2985
  %4102 = vmatpush1.bf16.msra.mxu0 %v2984
  %4103 = vmatprep.subr.bf16.mxu0 %v2989
  %4104 = vmatpush1.bf16.msra.mxu0 %v2988
  %4105 = vmatprep.subr.bf16.mxu0 %v2993
  %4106 = vmatpush1.bf16.msra.mxu0 %v2992
  %4107 = vmatprep.subr.bf16.mxu0 %v2997
  %4108 = vmatpush1.bf16.msra.mxu0 %v2996
  %4109 = vmatprep.subr.bf16.mxu0 %v3001
  %4110 = vmatpush1.bf16.msra.mxu0 %v3000
  %4111 = vmatprep.subr.bf16.mxu0 %v3005
  %4112 = vmatpush1.bf16.msra.mxu0 %v3004
  %4113 = vmatprep.mubr.bf16.mxu0 %v724
  %4114 = vmatmul.mubr.bf16.gmra.mrb[0].mxu0 %v723
  %v4115 = vpop.f32.mrb[0].mxu0
  %v4116 = vadd.f32 %v4075, %v4115
  %v4117 = vpop.f32.mrb[0].mxu0
  %v4118 = vadd.f32 %v4077, %v4117
  %v4119 = vpop.f32.mrb[0].mxu0
  %v4120 = vpop.f32.mrb[0].mxu0
  %4121 = vdwg.mxu0
  %4122 = vmatprep.subr.bf16.mxu0 %v3009
  %4123 = vmatpush1.bf16.msra.mxu0 %v3008
  %4124 = vmatprep.subr.bf16.mxu0 %v3013
  %4125 = vmatpush1.bf16.msra.mxu0 %v3012
  %4126 = vmatprep.subr.bf16.mxu0 %v3017
  %4127 = vmatpush1.bf16.msra.mxu0 %v3016
  %4128 = vmatprep.subr.bf16.mxu0 %v3021
  %4129 = vmatpush1.bf16.msra.mxu0 %v3020
  %4130 = vmatprep.subr.bf16.mxu0 %v3025
  %4131 = vmatpush1.bf16.msra.mxu0 %v3024
  %4132 = vmatprep.subr.bf16.mxu0 %v3029
  %4133 = vmatpush1.bf16.msra.mxu0 %v3028
  %4134 = vmatprep.subr.bf16.mxu0 %v3033
  %4135 = vmatpush1.bf16.msra.mxu0 %v3032
  %4136 = vmatprep.subr.bf16.mxu0 %v3037
  %4137 = vmatpush1.bf16.msra.mxu0 %v3036
  %4138 = vmatprep.subr.bf16.mxu0 %v3041
  %4139 = vmatpush1.bf16.msra.mxu0 %v3040
  %4140 = vmatprep.subr.bf16.mxu0 %v3045
  %4141 = vmatpush1.bf16.msra.mxu0 %v3044
  %4142 = vmatprep.subr.bf16.mxu0 %v3049
  %4143 = vmatpush1.bf16.msra.mxu0 %v3048
  %4144 = vmatprep.subr.bf16.mxu0 %v3053
  %4145 = vmatpush1.bf16.msra.mxu0 %v3052
  %4146 = vmatprep.subr.bf16.mxu0 %v3057
  %4147 = vmatpush1.bf16.msra.mxu0 %v3056
  %4148 = vmatprep.subr.bf16.mxu0 %v3061
  %4149 = vmatpush1.bf16.msra.mxu0 %v3060
  %4150 = vmatprep.subr.bf16.mxu0 %v3065
  %4151 = vmatpush1.bf16.msra.mxu0 %v3064
  %4152 = vmatprep.subr.bf16.mxu0 %v3069
  %4153 = vmatpush1.bf16.msra.mxu0 %v3068
  %4154 = vmatprep.mubr.bf16.mxu0 %v726
  %4155 = vmatmul.mubr.bf16.gmra.mrb[0].mxu0 %v725
  %v4156 = vpop.f32.mrb[0].mxu0
  %v4157 = vadd.f32 %v4116, %v4156
  %v4158 = vpop.f32.mrb[0].mxu0
  %v4159 = vadd.f32 %v4118, %v4158
  %v4160 = vpop.f32.mrb[0].mxu0
  %v4161 = vpop.f32.mrb[0].mxu0
  %4162 = vdwg.mxu0
  %4163 = vmatprep.subr.bf16.mxu0 %v3073
  %4164 = vmatpush1.bf16.msra.mxu0 %v3072
  %4165 = vmatprep.subr.bf16.mxu0 %v3077
  %4166 = vmatpush1.bf16.msra.mxu0 %v3076
  %4167 = vmatprep.subr.bf16.mxu0 %v3081
  %4168 = vmatpush1.bf16.msra.mxu0 %v3080
  %4169 = vmatprep.subr.bf16.mxu0 %v3085
  %4170 = vmatpush1.bf16.msra.mxu0 %v3084
  %4171 = vmatprep.subr.bf16.mxu0 %v3089
  %4172 = vmatpush1.bf16.msra.mxu0 %v3088
  %4173 = vmatprep.subr.bf16.mxu0 %v3093
  %4174 = vmatpush1.bf16.msra.mxu0 %v3092
  %4175 = vmatprep.subr.bf16.mxu0 %v3097
  %4176 = vmatpush1.bf16.msra.mxu0 %v3096
  %4177 = vmatprep.subr.bf16.mxu0 %v3101
  %4178 = vmatpush1.bf16.msra.mxu0 %v3100
  %4179 = vmatprep.subr.bf16.mxu0 %v3105
  %4180 = vmatpush1.bf16.msra.mxu0 %v3104
  %4181 = vmatprep.subr.bf16.mxu0 %v3109
  %4182 = vmatpush1.bf16.msra.mxu0 %v3108
  %4183 = vmatprep.subr.bf16.mxu0 %v3113
  %4184 = vmatpush1.bf16.msra.mxu0 %v3112
  %4185 = vmatprep.subr.bf16.mxu0 %v3117
  %4186 = vmatpush1.bf16.msra.mxu0 %v3116
  %4187 = vmatprep.subr.bf16.mxu0 %v3121
  %4188 = vmatpush1.bf16.msra.mxu0 %v3120
  %4189 = vmatprep.subr.bf16.mxu0 %v3125
  %4190 = vmatpush1.bf16.msra.mxu0 %v3124
  %4191 = vmatprep.subr.bf16.mxu0 %v3129
  %4192 = vmatpush1.bf16.msra.mxu0 %v3128
  %4193 = vmatprep.subr.bf16.mxu0 %v3133
  %4194 = vmatpush1.bf16.msra.mxu0 %v3132
  %4195 = vmatprep.mubr.bf16.mxu0 %v728
  %4196 = vmatmul.mubr.bf16.gmra.mrb[0].mxu0 %v727
  %v4197 = vpop.f32.mrb[0].mxu0
  %v4198 = vadd.f32 %v4157, %v4197
  %v4199 = vpop.f32.mrb[0].mxu0
  %v4200 = vadd.f32 %v4159, %v4199
  %v4201 = vpop.f32.mrb[0].mxu0
  %v4202 = vpop.f32.mrb[0].mxu0
  %4203 = vdwg.mxu0
  %4204 = vmatprep.subr.bf16.mxu0 %v3137
  %4205 = vmatpush1.bf16.msra.mxu0 %v3136
  %4206 = vmatprep.subr.bf16.mxu0 %v3141
  %4207 = vmatpush1.bf16.msra.mxu0 %v3140
  %4208 = vmatprep.subr.bf16.mxu0 %v3145
  %4209 = vmatpush1.bf16.msra.mxu0 %v3144
  %4210 = vmatprep.subr.bf16.mxu0 %v3149
  %4211 = vmatpush1.bf16.msra.mxu0 %v3148
  %4212 = vmatprep.subr.bf16.mxu0 %v3153
  %4213 = vmatpush1.bf16.msra.mxu0 %v3152
  %4214 = vmatprep.subr.bf16.mxu0 %v3157
  %4215 = vmatpush1.bf16.msra.mxu0 %v3156
  %4216 = vmatprep.subr.bf16.mxu0 %v3161
  %4217 = vmatpush1.bf16.msra.mxu0 %v3160
  %4218 = vmatprep.subr.bf16.mxu0 %v3165
  %4219 = vmatpush1.bf16.msra.mxu0 %v3164
  %4220 = vmatprep.subr.bf16.mxu0 %v3169
  %4221 = vmatpush1.bf16.msra.mxu0 %v3168
  %4222 = vmatprep.subr.bf16.mxu0 %v3173
  %4223 = vmatpush1.bf16.msra.mxu0 %v3172
  %4224 = vmatprep.subr.bf16.mxu0 %v3177
  %4225 = vmatpush1.bf16.msra.mxu0 %v3176
  %4226 = vmatprep.subr.bf16.mxu0 %v3181
  %4227 = vmatpush1.bf16.msra.mxu0 %v3180
  %4228 = vmatprep.subr.bf16.mxu0 %v3185
  %4229 = vmatpush1.bf16.msra.mxu0 %v3184
  %4230 = vmatprep.subr.bf16.mxu0 %v3189
  %4231 = vmatpush1.bf16.msra.mxu0 %v3188
  %4232 = vmatprep.subr.bf16.mxu0 %v3193
  %4233 = vmatpush1.bf16.msra.mxu0 %v3192
  %4234 = vmatprep.subr.bf16.mxu0 %v3197
  %4235 = vmatpush1.bf16.msra.mxu0 %v3196
  %4236 = vmatprep.mubr.bf16.mxu0 %v730
  %4237 = vmatmul.mubr.bf16.gmra.mrb[0].mxu0 %v729
  %v4238 = vpop.f32.mrb[0].mxu0
  %v4239 = vadd.f32 %v4198, %v4238
  %v4240 = vpop.f32.mrb[0].mxu0
  %v4241 = vadd.f32 %v4200, %v4240
  %v4242 = vpop.f32.mrb[0].mxu0
  %v4243 = vpop.f32.mrb[0].mxu0
  %4244 = vdwg.mxu0
  %4245 = vmatprep.subr.bf16.mxu0 %v3201
  %4246 = vmatpush1.bf16.msra.mxu0 %v3200
  %4247 = vmatprep.subr.bf16.mxu0 %v3205
  %4248 = vmatpush1.bf16.msra.mxu0 %v3204
  %4249 = vmatprep.subr.bf16.mxu0 %v3209
  %4250 = vmatpush1.bf16.msra.mxu0 %v3208
  %4251 = vmatprep.subr.bf16.mxu0 %v3213
  %4252 = vmatpush1.bf16.msra.mxu0 %v3212
  %4253 = vmatprep.subr.bf16.mxu0 %v3217
  %4254 = vmatpush1.bf16.msra.mxu0 %v3216
  %4255 = vmatprep.subr.bf16.mxu0 %v3221
  %4256 = vmatpush1.bf16.msra.mxu0 %v3220
  %4257 = vmatprep.subr.bf16.mxu0 %v3225
  %4258 = vmatpush1.bf16.msra.mxu0 %v3224
  %4259 = vmatprep.subr.bf16.mxu0 %v3229
  %4260 = vmatpush1.bf16.msra.mxu0 %v3228
  %4261 = vmatprep.subr.bf16.mxu0 %v3233
  %4262 = vmatpush1.bf16.msra.mxu0 %v3232
  %4263 = vmatprep.subr.bf16.mxu0 %v3237
  %4264 = vmatpush1.bf16.msra.mxu0 %v3236
  %4265 = vmatprep.subr.bf16.mxu0 %v3241
  %4266 = vmatpush1.bf16.msra.mxu0 %v3240
  %4267 = vmatprep.subr.bf16.mxu0 %v3245
  %4268 = vmatpush1.bf16.msra.mxu0 %v3244
  %4269 = vmatprep.subr.bf16.mxu0 0
  %4270 = vmatpush1.bf16.msra.mxu0 0
  %4271 = vmatprep.subr.bf16.mxu0 0
  %4272 = vmatpush1.bf16.msra.mxu0 0
  %4273 = vmatprep.subr.bf16.mxu0 0
  %4274 = vmatpush1.bf16.msra.mxu0 0
  %4275 = vmatprep.subr.bf16.mxu0 0
  %4276 = vmatpush1.bf16.msra.mxu0 0
  %4277 = vmatprep.mubr.bf16.mxu0 %v3874
  %4278 = vmatmul.mubr.bf16.gmra.mrb[0].mxu0 %v731
  %v4279 = vpop.f32.mrb[0].mxu0
  %v4280 = vadd.f32 %v4239, %v4279
  %v4281 = vpop.f32.mrb[0].mxu0
  %v4282 = vadd.f32 %v4241, %v4281
  %v4283 = vpop.f32.mrb[0].mxu0
  %v4284 = vpop.f32.mrb[0].mxu0
  %4285 = vdwg.mxu0
  %4286 = vmatprep.subr.bf16.mxu0 %v2627
  %4287 = vmatpush1.bf16.msra.mxu0 %v2626
  %4288 = vmatprep.subr.bf16.mxu0 %v2631
  %4289 = vmatpush1.bf16.msra.mxu0 %v2630
  %4290 = vmatprep.subr.bf16.mxu0 %v2635
  %4291 = vmatpush1.bf16.msra.mxu0 %v2634
  %4292 = vmatprep.subr.bf16.mxu0 %v2639
  %4293 = vmatpush1.bf16.msra.mxu0 %v2638
  %4294 = vmatprep.subr.bf16.mxu0 %v2643
  %4295 = vmatpush1.bf16.msra.mxu0 %v2642
  %4296 = vmatprep.subr.bf16.mxu0 %v2647
  %4297 = vmatpush1.bf16.msra.mxu0 %v2646
  %4298 = vmatprep.subr.bf16.mxu0 %v2651
  %4299 = vmatpush1.bf16.msra.mxu0 %v2650
  %4300 = vmatprep.subr.bf16.mxu0 %v2655
  %4301 = vmatpush1.bf16.msra.mxu0 %v2654
  %4302 = vmatprep.subr.bf16.mxu0 %v2659
  %4303 = vmatpush1.bf16.msra.mxu0 %v2658
  %4304 = vmatprep.subr.bf16.mxu0 %v2663
  %4305 = vmatpush1.bf16.msra.mxu0 %v2662
  %4306 = vmatprep.subr.bf16.mxu0 %v2667
  %4307 = vmatpush1.bf16.msra.mxu0 %v2666
  %4308 = vmatprep.subr.bf16.mxu0 %v2671
  %4309 = vmatpush1.bf16.msra.mxu0 %v2670
  %4310 = vmatprep.subr.bf16.mxu0 %v2675
  %4311 = vmatpush1.bf16.msra.mxu0 %v2674
  %4312 = vmatprep.subr.bf16.mxu0 %v2679
  %4313 = vmatpush1.bf16.msra.mxu0 %v2678
  %4314 = vmatprep.subr.bf16.mxu0 %v2683
  %4315 = vmatpush1.bf16.msra.mxu0 %v2682
  %4316 = vmatprep.subr.bf16.mxu0 %v2687
  %4317 = vmatpush1.bf16.msra.mxu0 %v2686
  %4318 = vmatprep.mubr.bf16.mxu0 %v714
  %4319 = vmatmul.mubr.bf16.gmra.mrb[0].mxu0 %v713
  %v4320 = vpop.f32.mrb[0].mxu0
  %v4321 = vadd.f32 %v674, %v4320
  %v4322 = vpop.f32.mrb[0].mxu0
  %v4323 = vadd.f32 %v678, %v4322
  %v4324 = vpop.f32.mrb[0].mxu0
  %v4325 = vpop.f32.mrb[0].mxu0
  %4326 = vdwg.mxu0
  %4327 = vmatprep.subr.bf16.mxu0 %v2691
  %4328 = vmatpush1.bf16.msra.mxu0 %v2690
  %4329 = vmatprep.subr.bf16.mxu0 %v2695
  %4330 = vmatpush1.bf16.msra.mxu0 %v2694
  %4331 = vmatprep.subr.bf16.mxu0 %v2699
  %4332 = vmatpush1.bf16.msra.mxu0 %v2698
  %4333 = vmatprep.subr.bf16.mxu0 %v2703
  %4334 = vmatpush1.bf16.msra.mxu0 %v2702
  %4335 = vmatprep.subr.bf16.mxu0 %v2707
  %4336 = vmatpush1.bf16.msra.mxu0 %v2706
  %4337 = vmatprep.subr.bf16.mxu0 %v2711
  %4338 = vmatpush1.bf16.msra.mxu0 %v2710
  %4339 = vmatprep.subr.bf16.mxu0 %v2715
  %4340 = vmatpush1.bf16.msra.mxu0 %v2714
  %4341 = vmatprep.subr.bf16.mxu0 %v2719
  %4342 = vmatpush1.bf16.msra.mxu0 %v2718
  %4343 = vmatprep.subr.bf16.mxu0 %v2723
  %4344 = vmatpush1.bf16.msra.mxu0 %v2722
  %4345 = vmatprep.subr.bf16.mxu0 %v2727
  %4346 = vmatpush1.bf16.msra.mxu0 %v2726
  %4347 = vmatprep.subr.bf16.mxu0 %v2731
  %4348 = vmatpush1.bf16.msra.mxu0 %v2730
  %4349 = vmatprep.subr.bf16.mxu0 %v2735
  %4350 = vmatpush1.bf16.msra.mxu0 %v2734
  %4351 = vmatprep.subr.bf16.mxu0 %v2739
  %4352 = vmatpush1.bf16.msra.mxu0 %v2738
  %4353 = vmatprep.subr.bf16.mxu0 %v2743
  %4354 = vmatpush1.bf16.msra.mxu0 %v2742
  %4355 = vmatprep.subr.bf16.mxu0 %v2747
  %4356 = vmatpush1.bf16.msra.mxu0 %v2746
  %4357 = vmatprep.subr.bf16.mxu0 %v2751
  %4358 = vmatpush1.bf16.msra.mxu0 %v2750
  %4359 = vmatprep.mubr.bf16.mxu0 %v716
  %4360 = vmatmul.mubr.bf16.gmra.mrb[0].mxu0 %v715
  %v4361 = vpop.f32.mrb[0].mxu0
  %v4362 = vadd.f32 %v4321, %v4361
  %v4363 = vpop.f32.mrb[0].mxu0
  %v4364 = vadd.f32 %v4323, %v4363
  %v4365 = vpop.f32.mrb[0].mxu0
  %v4366 = vpop.f32.mrb[0].mxu0
  %4367 = vdwg.mxu0
  %4368 = vmatprep.subr.bf16.mxu0 %v2755
  %4369 = vmatpush1.bf16.msra.mxu0 %v2754
  %4370 = vmatprep.subr.bf16.mxu0 %v2759
  %4371 = vmatpush1.bf16.msra.mxu0 %v2758
  %4372 = vmatprep.subr.bf16.mxu0 %v2763
  %4373 = vmatpush1.bf16.msra.mxu0 %v2762
  %4374 = vmatprep.subr.bf16.mxu0 %v2767
  %4375 = vmatpush1.bf16.msra.mxu0 %v2766
  %4376 = vmatprep.subr.bf16.mxu0 %v2771
  %4377 = vmatpush1.bf16.msra.mxu0 %v2770
  %4378 = vmatprep.subr.bf16.mxu0 %v2775
  %4379 = vmatpush1.bf16.msra.mxu0 %v2774
  %4380 = vmatprep.subr.bf16.mxu0 %v2779
  %4381 = vmatpush1.bf16.msra.mxu0 %v2778
  %4382 = vmatprep.subr.bf16.mxu0 %v2783
  %4383 = vmatpush1.bf16.msra.mxu0 %v2782
  %4384 = vmatprep.subr.bf16.mxu0 %v2787
  %4385 = vmatpush1.bf16.msra.mxu0 %v2786
  %4386 = vmatprep.subr.bf16.mxu0 %v2791
  %4387 = vmatpush1.bf16.msra.mxu0 %v2790
  %4388 = vmatprep.subr.bf16.mxu0 %v2795
  %4389 = vmatpush1.bf16.msra.mxu0 %v2794
  %4390 = vmatprep.subr.bf16.mxu0 %v2799
  %4391 = vmatpush1.bf16.msra.mxu0 %v2798
  %4392 = vmatprep.subr.bf16.mxu0 %v2803
  %4393 = vmatpush1.bf16.msra.mxu0 %v2802
  %4394 = vmatprep.subr.bf16.mxu0 %v2807
  %4395 = vmatpush1.bf16.msra.mxu0 %v2806
  %4396 = vmatprep.subr.bf16.mxu0 %v2811
  %4397 = vmatpush1.bf16.msra.mxu0 %v2810
  %4398 = vmatprep.subr.bf16.mxu0 %v2815
  %4399 = vmatpush1.bf16.msra.mxu0 %v2814
  %4400 = vmatprep.mubr.bf16.mxu0 %v718
  %4401 = vmatmul.mubr.bf16.gmra.mrb[0].mxu0 %v717
  %v4402 = vpop.f32.mrb[0].mxu0
  %v4403 = vadd.f32 %v4362, %v4402
  %v4404 = vpop.f32.mrb[0].mxu0
  %v4405 = vadd.f32 %v4364, %v4404
  %v4406 = vpop.f32.mrb[0].mxu0
  %v4407 = vpop.f32.mrb[0].mxu0
  %4408 = vdwg.mxu0
  %4409 = vmatprep.subr.bf16.mxu0 %v2819
  %4410 = vmatpush1.bf16.msra.mxu0 %v2818
  %4411 = vmatprep.subr.bf16.mxu0 %v2823
  %4412 = vmatpush1.bf16.msra.mxu0 %v2822
  %4413 = vmatprep.subr.bf16.mxu0 %v2827
  %4414 = vmatpush1.bf16.msra.mxu0 %v2826
  %4415 = vmatprep.subr.bf16.mxu0 %v2831
  %4416 = vmatpush1.bf16.msra.mxu0 %v2830
  %4417 = vmatprep.subr.bf16.mxu0 %v2835
  %4418 = vmatpush1.bf16.msra.mxu0 %v2834
  %4419 = vmatprep.subr.bf16.mxu0 %v2839
  %4420 = vmatpush1.bf16.msra.mxu0 %v2838
  %4421 = vmatprep.subr.bf16.mxu0 %v2843
  %4422 = vmatpush1.bf16.msra.mxu0 %v2842
  %4423 = vmatprep.subr.bf16.mxu0 %v2847
  %4424 = vmatpush1.bf16.msra.mxu0 %v2846
  %4425 = vmatprep.subr.bf16.mxu0 %v2851
  %4426 = vmatpush1.bf16.msra.mxu0 %v2850
  %4427 = vmatprep.subr.bf16.mxu0 %v2855
  %4428 = vmatpush1.bf16.msra.mxu0 %v2854
  %4429 = vmatprep.subr.bf16.mxu0 %v2859
  %4430 = vmatpush1.bf16.msra.mxu0 %v2858
  %4431 = vmatprep.subr.bf16.mxu0 %v2863
  %4432 = vmatpush1.bf16.msra.mxu0 %v2862
  %4433 = vmatprep.subr.bf16.mxu0 %v2867
  %4434 = vmatpush1.bf16.msra.mxu0 %v2866
  %4435 = vmatprep.subr.bf16.mxu0 %v2871
  %4436 = vmatpush1.bf16.msra.mxu0 %v2870
  %4437 = vmatprep.subr.bf16.mxu0 %v2875
  %4438 = vmatpush1.bf16.msra.mxu0 %v2874
  %4439 = vmatprep.subr.bf16.mxu0 %v2879
  %4440 = vmatpush1.bf16.msra.mxu0 %v2878
  %4441 = vmatprep.mubr.bf16.mxu0 %v720
  %4442 = vmatmul.mubr.bf16.gmra.mrb[0].mxu0 %v719
  %v4443 = vpop.f32.mrb[0].mxu0
  %v4444 = vadd.f32 %v4403, %v4443
  %v4445 = vpop.f32.mrb[0].mxu0
  %v4446 = vadd.f32 %v4405, %v4445
  %v4447 = vpop.f32.mrb[0].mxu0
  %v4448 = vpop.f32.mrb[0].mxu0
  %4449 = vdwg.mxu0
  %4450 = vmatprep.subr.bf16.mxu0 %v2883
  %4451 = vmatpush1.bf16.msra.mxu0 %v2882
  %4452 = vmatprep.subr.bf16.mxu0 %v2887
  %4453 = vmatpush1.bf16.msra.mxu0 %v2886
  %4454 = vmatprep.subr.bf16.mxu0 %v2891
  %4455 = vmatpush1.bf16.msra.mxu0 %v2890
  %4456 = vmatprep.subr.bf16.mxu0 %v2895
  %4457 = vmatpush1.bf16.msra.mxu0 %v2894
  %4458 = vmatprep.subr.bf16.mxu0 %v2899
  %4459 = vmatpush1.bf16.msra.mxu0 %v2898
  %4460 = vmatprep.subr.bf16.mxu0 %v2903
  %4461 = vmatpush1.bf16.msra.mxu0 %v2902
  %4462 = vmatprep.subr.bf16.mxu0 %v2907
  %4463 = vmatpush1.bf16.msra.mxu0 %v2906
  %4464 = vmatprep.subr.bf16.mxu0 %v2911
  %4465 = vmatpush1.bf16.msra.mxu0 %v2910
  %4466 = vmatprep.subr.bf16.mxu0 %v2915
  %4467 = vmatpush1.bf16.msra.mxu0 %v2914
  %4468 = vmatprep.subr.bf16.mxu0 %v2919
  %4469 = vmatpush1.bf16.msra.mxu0 %v2918
  %4470 = vmatprep.subr.bf16.mxu0 %v2923
  %4471 = vmatpush1.bf16.msra.mxu0 %v2922
  %4472 = vmatprep.subr.bf16.mxu0 %v2927
  %4473 = vmatpush1.bf16.msra.mxu0 %v2926
  %4474 = vmatprep.subr.bf16.mxu0 %v2931
  %4475 = vmatpush1.bf16.msra.mxu0 %v2930
  %4476 = vmatprep.subr.bf16.mxu0 %v2935
  %4477 = vmatpush1.bf16.msra.mxu0 %v2934
  %4478 = vmatprep.subr.bf16.mxu0 %v2939
  %4479 = vmatpush1.bf16.msra.mxu0 %v2938
  %4480 = vmatprep.subr.bf16.mxu0 %v2943
  %4481 = vmatpush1.bf16.msra.mxu0 %v2942
  %4482 = vmatprep.mubr.bf16.mxu0 %v722
  %4483 = vmatmul.mubr.bf16.gmra.mrb[0].mxu0 %v721
  %v4484 = vpop.f32.mrb[0].mxu0
  %v4485 = vadd.f32 %v4444, %v4484
  %v4486 = vpop.f32.mrb[0].mxu0
  %v4487 = vadd.f32 %v4446, %v4486
  %v4488 = vpop.f32.mrb[0].mxu0
  %v4489 = vpop.f32.mrb[0].mxu0
  %4490 = vdwg.mxu0
  %4491 = vmatprep.subr.bf16.mxu0 %v2947
  %4492 = vmatpush1.bf16.msra.mxu0 %v2946
  %4493 = vmatprep.subr.bf16.mxu0 %v2951
  %4494 = vmatpush1.bf16.msra.mxu0 %v2950
  %4495 = vmatprep.subr.bf16.mxu0 %v2955
  %4496 = vmatpush1.bf16.msra.mxu0 %v2954
  %4497 = vmatprep.subr.bf16.mxu0 %v2959
  %4498 = vmatpush1.bf16.msra.mxu0 %v2958
  %4499 = vmatprep.subr.bf16.mxu0 %v2963
  %4500 = vmatpush1.bf16.msra.mxu0 %v2962
  %4501 = vmatprep.subr.bf16.mxu0 %v2967
  %4502 = vmatpush1.bf16.msra.mxu0 %v2966
  %4503 = vmatprep.subr.bf16.mxu0 %v2971
  %4504 = vmatpush1.bf16.msra.mxu0 %v2970
  %4505 = vmatprep.subr.bf16.mxu0 %v2975
  %4506 = vmatpush1.bf16.msra.mxu0 %v2974
  %4507 = vmatprep.subr.bf16.mxu0 %v2979
  %4508 = vmatpush1.bf16.msra.mxu0 %v2978
  %4509 = vmatprep.subr.bf16.mxu0 %v2983
  %4510 = vmatpush1.bf16.msra.mxu0 %v2982
  %4511 = vmatprep.subr.bf16.mxu0 %v2987
  %4512 = vmatpush1.bf16.msra.mxu0 %v2986
  %4513 = vmatprep.subr.bf16.mxu0 %v2991
  %4514 = vmatpush1.bf16.msra.mxu0 %v2990
  %4515 = vmatprep.subr.bf16.mxu0 %v2995
  %4516 = vmatpush1.bf16.msra.mxu0 %v2994
  %4517 = vmatprep.subr.bf16.mxu0 %v2999
  %4518 = vmatpush1.bf16.msra.mxu0 %v2998
  %4519 = vmatprep.subr.bf16.mxu0 %v3003
  %4520 = vmatpush1.bf16.msra.mxu0 %v3002
  %4521 = vmatprep.subr.bf16.mxu0 %v3007
  %4522 = vmatpush1.bf16.msra.mxu0 %v3006
  %4523 = vmatprep.mubr.bf16.mxu0 %v724
  %4524 = vmatmul.mubr.bf16.gmra.mrb[0].mxu0 %v723
  %v4525 = vpop.f32.mrb[0].mxu0
  %v4526 = vadd.f32 %v4485, %v4525
  %v4527 = vpop.f32.mrb[0].mxu0
  %v4528 = vadd.f32 %v4487, %v4527
  %v4529 = vpop.f32.mrb[0].mxu0
  %v4530 = vpop.f32.mrb[0].mxu0
  %4531 = vdwg.mxu0
  %4532 = vmatprep.subr.bf16.mxu0 %v3011
  %4533 = vmatpush1.bf16.msra.mxu0 %v3010
  %4534 = vmatprep.subr.bf16.mxu0 %v3015
  %4535 = vmatpush1.bf16.msra.mxu0 %v3014
  %4536 = vmatprep.subr.bf16.mxu0 %v3019
  %4537 = vmatpush1.bf16.msra.mxu0 %v3018
  %4538 = vmatprep.subr.bf16.mxu0 %v3023
  %4539 = vmatpush1.bf16.msra.mxu0 %v3022
  %4540 = vmatprep.subr.bf16.mxu0 %v3027
  %4541 = vmatpush1.bf16.msra.mxu0 %v3026
  %4542 = vmatprep.subr.bf16.mxu0 %v3031
  %4543 = vmatpush1.bf16.msra.mxu0 %v3030
  %4544 = vmatprep.subr.bf16.mxu0 %v3035
  %4545 = vmatpush1.bf16.msra.mxu0 %v3034
  %4546 = vmatprep.subr.bf16.mxu0 %v3039
  %4547 = vmatpush1.bf16.msra.mxu0 %v3038
  %4548 = vmatprep.subr.bf16.mxu0 %v3043
  %4549 = vmatpush1.bf16.msra.mxu0 %v3042
  %4550 = vmatprep.subr.bf16.mxu0 %v3047
  %4551 = vmatpush1.bf16.msra.mxu0 %v3046
  %4552 = vmatprep.subr.bf16.mxu0 %v3051
  %4553 = vmatpush1.bf16.msra.mxu0 %v3050
  %4554 = vmatprep.subr.bf16.mxu0 %v3055
  %4555 = vmatpush1.bf16.msra.mxu0 %v3054
  %4556 = vmatprep.subr.bf16.mxu0 %v3059
  %4557 = vmatpush1.bf16.msra.mxu0 %v3058
  %4558 = vmatprep.subr.bf16.mxu0 %v3063
  %4559 = vmatpush1.bf16.msra.mxu0 %v3062
  %4560 = vmatprep.subr.bf16.mxu0 %v3067
  %4561 = vmatpush1.bf16.msra.mxu0 %v3066
  %4562 = vmatprep.subr.bf16.mxu0 %v3071
  %4563 = vmatpush1.bf16.msra.mxu0 %v3070
  %4564 = vmatprep.mubr.bf16.mxu0 %v726
  %4565 = vmatmul.mubr.bf16.gmra.mrb[0].mxu0 %v725
  %v4566 = vpop.f32.mrb[0].mxu0
  %v4567 = vadd.f32 %v4526, %v4566
  %v4568 = vpop.f32.mrb[0].mxu0
  %v4569 = vadd.f32 %v4528, %v4568
  %v4570 = vpop.f32.mrb[0].mxu0
  %v4571 = vpop.f32.mrb[0].mxu0
  %4572 = vdwg.mxu0
  %4573 = vmatprep.subr.bf16.mxu0 %v3075
  %4574 = vmatpush1.bf16.msra.mxu0 %v3074
  %4575 = vmatprep.subr.bf16.mxu0 %v3079
  %4576 = vmatpush1.bf16.msra.mxu0 %v3078
  %4577 = vmatprep.subr.bf16.mxu0 %v3083
  %4578 = vmatpush1.bf16.msra.mxu0 %v3082
  %4579 = vmatprep.subr.bf16.mxu0 %v3087
  %4580 = vmatpush1.bf16.msra.mxu0 %v3086
  %4581 = vmatprep.subr.bf16.mxu0 %v3091
  %4582 = vmatpush1.bf16.msra.mxu0 %v3090
  %4583 = vmatprep.subr.bf16.mxu0 %v3095
  %4584 = vmatpush1.bf16.msra.mxu0 %v3094
  %4585 = vmatprep.subr.bf16.mxu0 %v3099
  %4586 = vmatpush1.bf16.msra.mxu0 %v3098
  %4587 = vmatprep.subr.bf16.mxu0 %v3103
  %4588 = vmatpush1.bf16.msra.mxu0 %v3102
  %4589 = vmatprep.subr.bf16.mxu0 %v3107
  %4590 = vmatpush1.bf16.msra.mxu0 %v3106
  %4591 = vmatprep.subr.bf16.mxu0 %v3111
  %4592 = vmatpush1.bf16.msra.mxu0 %v3110
  %4593 = vmatprep.subr.bf16.mxu0 %v3115
  %4594 = vmatpush1.bf16.msra.mxu0 %v3114
  %4595 = vmatprep.subr.bf16.mxu0 %v3119
  %4596 = vmatpush1.bf16.msra.mxu0 %v3118
  %4597 = vmatprep.subr.bf16.mxu0 %v3123
  %4598 = vmatpush1.bf16.msra.mxu0 %v3122
  %4599 = vmatprep.subr.bf16.mxu0 %v3127
  %4600 = vmatpush1.bf16.msra.mxu0 %v3126
  %4601 = vmatprep.subr.bf16.mxu0 %v3131
  %4602 = vmatpush1.bf16.msra.mxu0 %v3130
  %4603 = vmatprep.subr.bf16.mxu0 %v3135
  %4604 = vmatpush1.bf16.msra.mxu0 %v3134
  %4605 = vmatprep.mubr.bf16.mxu0 %v728
  %4606 = vmatmul.mubr.bf16.gmra.mrb[0].mxu0 %v727
  %v4607 = vpop.f32.mrb[0].mxu0
  %v4608 = vadd.f32 %v4567, %v4607
  %v4609 = vpop.f32.mrb[0].mxu0
  %v4610 = vadd.f32 %v4569, %v4609
  %v4611 = vpop.f32.mrb[0].mxu0
  %v4612 = vpop.f32.mrb[0].mxu0
  %4613 = vdwg.mxu0
  %4614 = vmatprep.subr.bf16.mxu0 %v3139
  %4615 = vmatpush1.bf16.msra.mxu0 %v3138
  %4616 = vmatprep.subr.bf16.mxu0 %v3143
  %4617 = vmatpush1.bf16.msra.mxu0 %v3142
  %4618 = vmatprep.subr.bf16.mxu0 %v3147
  %4619 = vmatpush1.bf16.msra.mxu0 %v3146
  %4620 = vmatprep.subr.bf16.mxu0 %v3151
  %4621 = vmatpush1.bf16.msra.mxu0 %v3150
  %4622 = vmatprep.subr.bf16.mxu0 %v3155
  %4623 = vmatpush1.bf16.msra.mxu0 %v3154
  %4624 = vmatprep.subr.bf16.mxu0 %v3159
  %4625 = vmatpush1.bf16.msra.mxu0 %v3158
  %4626 = vmatprep.subr.bf16.mxu0 %v3163
  %4627 = vmatpush1.bf16.msra.mxu0 %v3162
  %4628 = vmatprep.subr.bf16.mxu0 %v3167
  %4629 = vmatpush1.bf16.msra.mxu0 %v3166
  %4630 = vmatprep.subr.bf16.mxu0 %v3171
  %4631 = vmatpush1.bf16.msra.mxu0 %v3170
  %4632 = vmatprep.subr.bf16.mxu0 %v3175
  %4633 = vmatpush1.bf16.msra.mxu0 %v3174
  %4634 = vmatprep.subr.bf16.mxu0 %v3179
  %4635 = vmatpush1.bf16.msra.mxu0 %v3178
  %4636 = vmatprep.subr.bf16.mxu0 %v3183
  %4637 = vmatpush1.bf16.msra.mxu0 %v3182
  %4638 = vmatprep.subr.bf16.mxu0 %v3187
  %4639 = vmatpush1.bf16.msra.mxu0 %v3186
  %4640 = vmatprep.subr.bf16.mxu0 %v3191
  %4641 = vmatpush1.bf16.msra.mxu0 %v3190
  %4642 = vmatprep.subr.bf16.mxu0 %v3195
  %4643 = vmatpush1.bf16.msra.mxu0 %v3194
  %4644 = vmatprep.subr.bf16.mxu0 %v3199
  %4645 = vmatpush1.bf16.msra.mxu0 %v3198
  %4646 = vmatprep.mubr.bf16.mxu0 %v730
  %4647 = vmatmul.mubr.bf16.gmra.mrb[0].mxu0 %v729
  %v4648 = vpop.f32.mrb[0].mxu0
  %v4649 = vadd.f32 %v4608, %v4648
  %v4650 = vpop.f32.mrb[0].mxu0
  %v4651 = vadd.f32 %v4610, %v4650
  %v4652 = vpop.f32.mrb[0].mxu0
  %v4653 = vpop.f32.mrb[0].mxu0
  %4654 = vdwg.mxu0
  %4655 = vmatprep.subr.bf16.mxu0 %v3203
  %4656 = vmatpush1.bf16.msra.mxu0 %v3202
  %4657 = vmatprep.subr.bf16.mxu0 %v3207
  %4658 = vmatpush1.bf16.msra.mxu0 %v3206
  %4659 = vmatprep.subr.bf16.mxu0 %v3211
  %4660 = vmatpush1.bf16.msra.mxu0 %v3210
  %4661 = vmatprep.subr.bf16.mxu0 %v3215
  %4662 = vmatpush1.bf16.msra.mxu0 %v3214
  %4663 = vmatprep.subr.bf16.mxu0 %v3219
  %4664 = vmatpush1.bf16.msra.mxu0 %v3218
  %4665 = vmatprep.subr.bf16.mxu0 %v3223
  %4666 = vmatpush1.bf16.msra.mxu0 %v3222
  %4667 = vmatprep.subr.bf16.mxu0 %v3227
  %4668 = vmatpush1.bf16.msra.mxu0 %v3226
  %4669 = vmatprep.subr.bf16.mxu0 %v3231
  %4670 = vmatpush1.bf16.msra.mxu0 %v3230
  %4671 = vmatprep.subr.bf16.mxu0 %v3235
  %4672 = vmatpush1.bf16.msra.mxu0 %v3234
  %4673 = vmatprep.subr.bf16.mxu0 %v3239
  %4674 = vmatpush1.bf16.msra.mxu0 %v3238
  %4675 = vmatprep.subr.bf16.mxu0 %v3243
  %4676 = vmatpush1.bf16.msra.mxu0 %v3242
  %4677 = vmatprep.subr.bf16.mxu0 %v3247
  %4678 = vmatpush1.bf16.msra.mxu0 %v3246
  %4679 = vmatprep.subr.bf16.mxu0 0
  %4680 = vmatpush1.bf16.msra.mxu0 0
  %4681 = vmatprep.subr.bf16.mxu0 0
  %4682 = vmatpush1.bf16.msra.mxu0 0
  %4683 = vmatprep.subr.bf16.mxu0 0
  %4684 = vmatpush1.bf16.msra.mxu0 0
  %4685 = vmatprep.subr.bf16.mxu0 0
  %4686 = vmatpush1.bf16.msra.mxu0 0
  %4687 = vmatprep.mubr.bf16.mxu0 %v3874
  %4688 = vmatmul.mubr.bf16.gmra.mrb[0].mxu0 %v731
  %v4689 = vpop.f32.mrb[0].mxu0
  %v4690 = vadd.f32 %v4649, %v4689
  %v4691 = vpop.f32.mrb[0].mxu0
  %v4692 = vadd.f32 %v4651, %v4691
  %v4693 = vpop.f32.mrb[0].mxu0
  %v4694 = vpop.f32.mrb[0].mxu0
  %4695 = vdwg.mxu0
  %v4696 = vmax.f32 %v4280, 0.0
  %v4697 = vmax.f32 %v4282, 0.0
  %v4698 = vmax.f32 %v4690, 0.0
  %v4699 = vmax.f32 %v4692, 0.0
  %v4700 = vpack.c.bf16 %v4696, %v4696
  %v4701 = vpack.c.bf16 %v4697, %v4697
  %v4702 = vpack.c.bf16 %v4698, %v4698
  %v4703 = vpack.c.bf16 %v4699, %v4699
  %v4704 = vld [vmem:[%s3] sm:$0xff]
  %v4705 = vld [vmem:[%s3 + $0x8] sm:$0xff]
  %v4706 = vld [vmem:[%s3 + $0x10] sm:$0xff]
  %v4707 = vld [vmem:[%s3 + $0x18] sm:$0xff]
  %v4708 = vld [vmem:[%s3 + $0x20] sm:$0xff]
  %v4709 = vld [vmem:[%s3 + $0x28] sm:$0xff]
  %v4710 = vld [vmem:[%s3 + $0x30] sm:$0xff]
  %v4711 = vld [vmem:[%s3 + $0x38] sm:$0xff]
  %v4712 = vld [vmem:[%s3 + $0x40] sm:$0xff]
  %v4713 = vld [vmem:[%s3 + $0x48] sm:$0xff]
  %v4714 = vld [vmem:[%s3 + $0x50] sm:$0xff]
  %v4715 = vld [vmem:[%s3 + $0x58] sm:$0xff]
  %v4716 = vld [vmem:[%s3 + $0x60] sm:$0xff]
  %v4717 = vld [vmem:[%s3 + $0x68] sm:$0xff]
  %v4718 = vld [vmem:[%s3 + $0x70] sm:$0xff]
  %v4719 = vld [vmem:[%s3 + $0x78] sm:$0xff]
  %v4720 = vld [vmem:[%s3 + $0x80] sm:$0xff]
  %v4721 = vld [vmem:[%s3 + $0x88] sm:$0xff]
  %v4722 = vld [vmem:[%s3 + $0x90] sm:$0xff]
  %v4723 = vld [vmem:[%s3 + $0x98] sm:$0xff]
  %v4724 = vld [vmem:[%s3 + $0xa0] sm:$0xff]
  %v4725 = vld [vmem:[%s3 + $0xa8] sm:$0xff]
  %v4726 = vld [vmem:[%s3 + $0xb0] sm:$0xff]
  %v4727 = vld [vmem:[%s3 + $0xb8] sm:$0xff]
  %v4728 = vld [vmem:[%s3 + $0xc0] sm:$0xff]
  %v4729 = vld [vmem:[%s3 + $0xc8] sm:$0xff]
  %v4730 = vld [vmem:[%s3 + $0xd0] sm:$0xff]
  %v4731 = vld [vmem:[%s3 + $0xd8] sm:$0xff]
  %v4732 = vld [vmem:[%s3 + $0xe0] sm:$0xff]
  %v4733 = vld [vmem:[%s3 + $0xe8] sm:$0xff]
  %v4734 = vld [vmem:[%s3 + $0xf0] sm:$0xff]
  %v4735 = vld [vmem:[%s3 + $0xf8] sm:$0xff]
  %v4736 = vld [vmem:[%s3 + $0x100] sm:$0xff]
  %v4737 = vld [vmem:[%s3 + $0x108] sm:$0xff]
  %v4738 = vld [vmem:[%s3 + $0x110] sm:$0xff]
  %v4739 = vld [vmem:[%s3 + $0x118] sm:$0xff]
  %v4740 = vld [vmem:[%s3 + $0x120] sm:$0xff]
  %v4741 = vld [vmem:[%s3 + $0x128] sm:$0xff]
  %v4742 = vld [vmem:[%s3 + $0x130] sm:$0xff]
  %v4743 = vld [vmem:[%s3 + $0x138] sm:$0xff]
  %v4744 = vld [vmem:[%s3 + $0x140] sm:$0xff]
  %v4745 = vld [vmem:[%s3 + $0x148] sm:$0xff]
  %v4746 = vld [vmem:[%s3 + $0x150] sm:$0xff]
  %v4747 = vld [vmem:[%s3 + $0x158] sm:$0xff]
  %v4748 = vld [vmem:[%s3 + $0x160] sm:$0xff]
  %v4749 = vld [vmem:[%s3 + $0x168] sm:$0xff]
  %v4750 = vld [vmem:[%s3 + $0x170] sm:$0xff]
  %v4751 = vld [vmem:[%s3 + $0x178] sm:$0xff]
  %v4752 = vld [vmem:[%s3 + $0x180] sm:$0xff]
  %v4753 = vld [vmem:[%s3 + $0x188] sm:$0xff]
  %v4754 = vld [vmem:[%s3 + $0x190] sm:$0xff]
  %v4755 = vld [vmem:[%s3 + $0x198] sm:$0xff]
  %v4756 = vld [vmem:[%s3 + $0x1a0] sm:$0xff]
  %v4757 = vld [vmem:[%s3 + $0x1a8] sm:$0xff]
  %v4758 = vld [vmem:[%s3 + $0x1b0] sm:$0xff]
  %v4759 = vld [vmem:[%s3 + $0x1b8] sm:$0xff]
  %v4760 = vld [vmem:[%s3 + $0x1c0] sm:$0xff]
  %v4761 = vld [vmem:[%s3 + $0x1c8] sm:$0xff]
  %v4762 = vld [vmem:[%s3 + $0x1d0] sm:$0xff]
  %v4763 = vld [vmem:[%s3 + $0x1d8] sm:$0xff]
  %v4764 = vld [vmem:[%s3 + $0x1e0] sm:$0xff]
  %v4765 = vld [vmem:[%s3 + $0x1e8] sm:$0xff]
  %v4766 = vld [vmem:[%s3 + $0x1f0] sm:$0xff]
  %v4767 = vld [vmem:[%s3 + $0x1f8] sm:$0xff]
  %v4768 = vld [vmem:[%s4] sm:$0x3]
  %v4770 = vlaneseq
  %v4771 = vshrl.u32 %v4770, 7
  %v4772 = vsub.s32 0, %v4771
  %v4773 = vrot.slane %v4768, %v4772
  %v4774 = vlaneseq
  %v4775 = vshrl.u32 %v4774, 7
  %v4776 = vsub.s32 1, %v4775
  %v4777 = vrot.slane %v4768, %v4776
  %v4844 = vunpack.c.l.b16 %v4704
  %v4845 = vunpack.c.h.b16 %v4704
  %v4846 = vunpack.c.l.b16 %v4705
  %v4847 = vunpack.c.h.b16 %v4705
  %v4848 = vunpack.c.l.b16 %v4706
  %v4849 = vunpack.c.h.b16 %v4706
  %v4850 = vunpack.c.l.b16 %v4707
  %v4851 = vunpack.c.h.b16 %v4707
  %v4852 = vunpack.c.l.b16 %v4708
  %v4853 = vunpack.c.h.b16 %v4708
  %v4854 = vunpack.c.l.b16 %v4709
  %v4855 = vunpack.c.h.b16 %v4709
  %v4856 = vunpack.c.l.b16 %v4710
  %v4857 = vunpack.c.h.b16 %v4710
  %v4858 = vunpack.c.l.b16 %v4711
  %v4859 = vunpack.c.h.b16 %v4711
  %v4860 = vunpack.c.l.b16 %v4712
  %v4861 = vunpack.c.h.b16 %v4712
  %v4862 = vunpack.c.l.b16 %v4713
  %v4863 = vunpack.c.h.b16 %v4713
  %v4864 = vunpack.c.l.b16 %v4714
  %v4865 = vunpack.c.h.b16 %v4714
  %v4866 = vunpack.c.l.b16 %v4715
  %v4867 = vunpack.c.h.b16 %v4715
  %v4868 = vunpack.c.l.b16 %v4716
  %v4869 = vunpack.c.h.b16 %v4716
  %v4870 = vunpack.c.l.b16 %v4717
  %v4871 = vunpack.c.h.b16 %v4717
  %v4872 = vunpack.c.l.b16 %v4718
  %v4873 = vunpack.c.h.b16 %v4718
  %v4874 = vunpack.c.l.b16 %v4719
  %v4875 = vunpack.c.h.b16 %v4719
  %v4876 = vunpack.c.l.b16 %v4720
  %v4877 = vunpack.c.h.b16 %v4720
  %v4878 = vunpack.c.l.b16 %v4721
  %v4879 = vunpack.c.h.b16 %v4721
  %v4880 = vunpack.c.l.b16 %v4722
  %v4881 = vunpack.c.h.b16 %v4722
  %v4882 = vunpack.c.l.b16 %v4723
  %v4883 = vunpack.c.h.b16 %v4723
  %v4884 = vunpack.c.l.b16 %v4724
  %v4885 = vunpack.c.h.b16 %v4724
  %v4886 = vunpack.c.l.b16 %v4725
  %v4887 = vunpack.c.h.b16 %v4725
  %v4888 = vunpack.c.l.b16 %v4726
  %v4889 = vunpack.c.h.b16 %v4726
  %v4890 = vunpack.c.l.b16 %v4727
  %v4891 = vunpack.c.h.b16 %v4727
  %v4892 = vunpack.c.l.b16 %v4728
  %v4893 = vunpack.c.h.b16 %v4728
  %v4894 = vunpack.c.l.b16 %v4729
  %v4895 = vunpack.c.h.b16 %v4729
  %v4896 = vunpack.c.l.b16 %v4730
  %v4897 = vunpack.c.h.b16 %v4730
  %v4898 = vunpack.c.l.b16 %v4731
  %v4899 = vunpack.c.h.b16 %v4731
  %v4900 = vunpack.c.l.b16 %v4732
  %v4901 = vunpack.c.h.b16 %v4732
  %v4902 = vunpack.c.l.b16 %v4733
  %v4903 = vunpack.c.h.b16 %v4733
  %v4904 = vunpack.c.l.b16 %v4734
  %v4905 = vunpack.c.h.b16 %v4734
  %v4906 = vunpack.c.l.b16 %v4735
  %v4907 = vunpack.c.h.b16 %v4735
  %v4908 = vunpack.c.l.b16 %v4736
  %v4909 = vunpack.c.h.b16 %v4736
  %v4910 = vunpack.c.l.b16 %v4737
  %v4911 = vunpack.c.h.b16 %v4737
  %v4912 = vunpack.c.l.b16 %v4738
  %v4913 = vunpack.c.h.b16 %v4738
  %v4914 = vunpack.c.l.b16 %v4739
  %v4915 = vunpack.c.h.b16 %v4739
  %v4916 = vunpack.c.l.b16 %v4740
  %v4917 = vunpack.c.h.b16 %v4740
  %v4918 = vunpack.c.l.b16 %v4741
  %v4919 = vunpack.c.h.b16 %v4741
  %v4920 = vunpack.c.l.b16 %v4742
  %v4921 = vunpack.c.h.b16 %v4742
  %v4922 = vunpack.c.l.b16 %v4743
  %v4923 = vunpack.c.h.b16 %v4743
  %v4924 = vunpack.c.l.b16 %v4744
  %v4925 = vunpack.c.h.b16 %v4744
  %v4926 = vunpack.c.l.b16 %v4745
  %v4927 = vunpack.c.h.b16 %v4745
  %v4928 = vunpack.c.l.b16 %v4746
  %v4929 = vunpack.c.h.b16 %v4746
  %v4930 = vunpack.c.l.b16 %v4747
  %v4931 = vunpack.c.h.b16 %v4747
  %v4932 = vunpack.c.l.b16 %v4748
  %v4933 = vunpack.c.h.b16 %v4748
  %v4934 = vunpack.c.l.b16 %v4749
  %v4935 = vunpack.c.h.b16 %v4749
  %v4936 = vunpack.c.l.b16 %v4750
  %v4937 = vunpack.c.h.b16 %v4750
  %v4938 = vunpack.c.l.b16 %v4751
  %v4939 = vunpack.c.h.b16 %v4751
  %v4940 = vunpack.c.l.b16 %v4752
  %v4941 = vunpack.c.h.b16 %v4752
  %v4942 = vunpack.c.l.b16 %v4753
  %v4943 = vunpack.c.h.b16 %v4753
  %v4944 = vunpack.c.l.b16 %v4754
  %v4945 = vunpack.c.h.b16 %v4754
  %v4946 = vunpack.c.l.b16 %v4755
  %v4947 = vunpack.c.h.b16 %v4755
  %v4948 = vunpack.c.l.b16 %v4756
  %v4949 = vunpack.c.h.b16 %v4756
  %v4950 = vunpack.c.l.b16 %v4757
  %v4951 = vunpack.c.h.b16 %v4757
  %v4952 = vunpack.c.l.b16 %v4758
  %v4953 = vunpack.c.h.b16 %v4758
  %v4954 = vunpack.c.l.b16 %v4759
  %v4955 = vunpack.c.h.b16 %v4759
  %v4956 = vunpack.c.l.b16 %v4760
  %v4957 = vunpack.c.h.b16 %v4760
  %v4958 = vunpack.c.l.b16 %v4761
  %v4959 = vunpack.c.h.b16 %v4761
  %v4960 = vunpack.c.l.b16 %v4762
  %v4961 = vunpack.c.h.b16 %v4762
  %v4962 = vunpack.c.l.b16 %v4763
  %v4963 = vunpack.c.h.b16 %v4763
  %v4964 = vunpack.c.l.b16 %v4764
  %v4965 = vunpack.c.h.b16 %v4764
  %v4966 = vunpack.c.l.b16 %v4765
  %v4967 = vunpack.c.h.b16 %v4765
  %v4968 = vunpack.c.l.b16 %v4766
  %v4969 = vunpack.c.h.b16 %v4766
  %v4970 = vunpack.c.l.b16 %v4767
  %v4971 = vunpack.c.h.b16 %v4767
  %v4972 = vpack.c.b16 %v4846, %v4844
  %v4973 = vpack.c.b16 %v4847, %v4845
  %v4974 = vpack.c.b16 %v4850, %v4848
  %v4975 = vpack.c.b16 %v4851, %v4849
  %v4976 = vpack.c.b16 %v4854, %v4852
  %v4977 = vpack.c.b16 %v4855, %v4853
  %v4978 = vpack.c.b16 %v4858, %v4856
  %v4979 = vpack.c.b16 %v4859, %v4857
  %v4980 = vpack.c.b16 %v4862, %v4860
  %v4981 = vpack.c.b16 %v4863, %v4861
  %v4982 = vpack.c.b16 %v4866, %v4864
  %v4983 = vpack.c.b16 %v4867, %v4865
  %v4984 = vpack.c.b16 %v4870, %v4868
  %v4985 = vpack.c.b16 %v4871, %v4869
  %v4986 = vpack.c.b16 %v4874, %v4872
  %v4987 = vpack.c.b16 %v4875, %v4873
  %v4988 = vpack.c.b16 %v4878, %v4876
  %v4989 = vpack.c.b16 %v4879, %v4877
  %v4990 = vpack.c.b16 %v4882, %v4880
  %v4991 = vpack.c.b16 %v4883, %v4881
  %v4992 = vpack.c.b16 %v4886, %v4884
  %v4993 = vpack.c.b16 %v4887, %v4885
  %v4994 = vpack.c.b16 %v4890, %v4888
  %v4995 = vpack.c.b16 %v4891, %v4889
  %v4996 = vpack.c.b16 %v4894, %v4892
  %v4997 = vpack.c.b16 %v4895, %v4893
  %v4998 = vpack.c.b16 %v4898, %v4896
  %v4999 = vpack.c.b16 %v4899, %v4897
  %v5000 = vpack.c.b16 %v4902, %v4900
  %v5001 = vpack.c.b16 %v4903, %v4901
  %v5002 = vpack.c.b16 %v4906, %v4904
  %v5003 = vpack.c.b16 %v4907, %v4905
  %v5004 = vpack.c.b16 %v4910, %v4908
  %v5005 = vpack.c.b16 %v4911, %v4909
  %v5006 = vpack.c.b16 %v4914, %v4912
  %v5007 = vpack.c.b16 %v4915, %v4913
  %v5008 = vpack.c.b16 %v4918, %v4916
  %v5009 = vpack.c.b16 %v4919, %v4917
  %v5010 = vpack.c.b16 %v4922, %v4920
  %v5011 = vpack.c.b16 %v4923, %v4921
  %v5012 = vpack.c.b16 %v4926, %v4924
  %v5013 = vpack.c.b16 %v4927, %v4925
  %v5014 = vpack.c.b16 %v4930, %v4928
  %v5015 = vpack.c.b16 %v4931, %v4929
  %v5016 = vpack.c.b16 %v4934, %v4932
  %v5017 = vpack.c.b16 %v4935, %v4933
  %v5018 = vpack.c.b16 %v4938, %v4936
  %v5019 = vpack.c.b16 %v4939, %v4937
  %v5020 = vpack.c.b16 %v4942, %v4940
  %v5021 = vpack.c.b16 %v4943, %v4941
  %v5022 = vpack.c.b16 %v4946, %v4944
  %v5023 = vpack.c.b16 %v4947, %v4945
  %v5024 = vpack.c.b16 %v4950, %v4948
  %v5025 = vpack.c.b16 %v4951, %v4949
  %v5026 = vpack.c.b16 %v4954, %v4952
  %v5027 = vpack.c.b16 %v4955, %v4953
  %v5028 = vpack.c.b16 %v4958, %v4956
  %v5029 = vpack.c.b16 %v4959, %v4957
  %v5030 = vpack.c.b16 %v4962, %v4960
  %v5031 = vpack.c.b16 %v4963, %v4961
  %v5032 = vpack.c.b16 %v4966, %v4964
  %v5033 = vpack.c.b16 %v4967, %v4965
  %v5034 = vpack.c.b16 %v4970, %v4968
  %v5035 = vpack.c.b16 %v4971, %v4969
  %5100 = vmatprep.subr.bf16.mxu0 %v4973
  %5101 = vmatpush1.bf16.msra.mxu0 %v4972
  %5102 = vmatprep.subr.bf16.mxu0 %v4975
  %5103 = vmatpush1.bf16.msra.mxu0 %v4974
  %5104 = vmatprep.subr.bf16.mxu0 %v4977
  %5105 = vmatpush1.bf16.msra.mxu0 %v4976
  %5106 = vmatprep.subr.bf16.mxu0 %v4979
  %5107 = vmatpush1.bf16.msra.mxu0 %v4978
  %5108 = vmatprep.subr.bf16.mxu0 %v4981
  %5109 = vmatpush1.bf16.msra.mxu0 %v4980
  %5110 = vmatprep.subr.bf16.mxu0 %v4983
  %5111 = vmatpush1.bf16.msra.mxu0 %v4982
  %5112 = vmatprep.subr.bf16.mxu0 %v4985
  %5113 = vmatpush1.bf16.msra.mxu0 %v4984
  %5114 = vmatprep.subr.bf16.mxu0 %v4987
  %5115 = vmatpush1.bf16.msra.mxu0 %v4986
  %5116 = vmatprep.subr.bf16.mxu0 %v4989
  %5117 = vmatpush1.bf16.msra.mxu0 %v4988
  %5118 = vmatprep.subr.bf16.mxu0 %v4991
  %5119 = vmatpush1.bf16.msra.mxu0 %v4990
  %5120 = vmatprep.subr.bf16.mxu0 %v4993
  %5121 = vmatpush1.bf16.msra.mxu0 %v4992
  %5122 = vmatprep.subr.bf16.mxu0 %v4995
  %5123 = vmatpush1.bf16.msra.mxu0 %v4994
  %5124 = vmatprep.subr.bf16.mxu0 %v4997
  %5125 = vmatpush1.bf16.msra.mxu0 %v4996
  %5126 = vmatprep.subr.bf16.mxu0 %v4999
  %5127 = vmatpush1.bf16.msra.mxu0 %v4998
  %5128 = vmatprep.subr.bf16.mxu0 %v5001
  %5129 = vmatpush1.bf16.msra.mxu0 %v5000
  %5130 = vmatprep.subr.bf16.mxu0 %v5003
  %5131 = vmatpush1.bf16.msra.mxu0 %v5002
  %5132 = vmatprep.mubr.bf16.mxu0 %v4701
  %5133 = vmatmul.mubr.bf16.gmra.mrb[0].mxu0 %v4700
  %v5134 = vpop.f32.mrb[0].mxu0
  %v5135 = vadd.f32 %v4773, %v5134
  %v5136 = vpop.f32.mrb[0].mxu0
  %v5137 = vadd.f32 %v4777, %v5136
  %v5138 = vpop.f32.mrb[0].mxu0
  %v5139 = vpop.f32.mrb[0].mxu0
  %5140 = vdwg.mxu0
  %5141 = vmatprep.subr.bf16.mxu0 %v5005
  %5142 = vmatpush1.bf16.msra.mxu0 %v5004
  %5143 = vmatprep.subr.bf16.mxu0 %v5007
  %5144 = vmatpush1.bf16.msra.mxu0 %v5006
  %5145 = vmatprep.subr.bf16.mxu0 %v5009
  %5146 = vmatpush1.bf16.msra.mxu0 %v5008
  %5147 = vmatprep.subr.bf16.mxu0 %v5011
  %5148 = vmatpush1.bf16.msra.mxu0 %v5010
  %5149 = vmatprep.subr.bf16.mxu0 %v5013
  %5150 = vmatpush1.bf16.msra.mxu0 %v5012
  %5151 = vmatprep.subr.bf16.mxu0 %v5015
  %5152 = vmatpush1.bf16.msra.mxu0 %v5014
  %5153 = vmatprep.subr.bf16.mxu0 %v5017
  %5154 = vmatpush1.bf16.msra.mxu0 %v5016
  %5155 = vmatprep.subr.bf16.mxu0 %v5019
  %5156 = vmatpush1.bf16.msra.mxu0 %v5018
  %5157 = vmatprep.subr.bf16.mxu0 %v5021
  %5158 = vmatpush1.bf16.msra.mxu0 %v5020
  %5159 = vmatprep.subr.bf16.mxu0 %v5023
  %5160 = vmatpush1.bf16.msra.mxu0 %v5022
  %5161 = vmatprep.subr.bf16.mxu0 %v5025
  %5162 = vmatpush1.bf16.msra.mxu0 %v5024
  %5163 = vmatprep.subr.bf16.mxu0 %v5027
  %5164 = vmatpush1.bf16.msra.mxu0 %v5026
  %5165 = vmatprep.subr.bf16.mxu0 %v5029
  %5166 = vmatpush1.bf16.msra.mxu0 %v5028
  %5167 = vmatprep.subr.bf16.mxu0 %v5031
  %5168 = vmatpush1.bf16.msra.mxu0 %v5030
  %5169 = vmatprep.subr.bf16.mxu0 %v5033
  %5170 = vmatpush1.bf16.msra.mxu0 %v5032
  %5171 = vmatprep.subr.bf16.mxu0 %v5035
  %5172 = vmatpush1.bf16.msra.mxu0 %v5034
  %5173 = vmatprep.mubr.bf16.mxu0 %v4703
  %5174 = vmatmul.mubr.bf16.gmra.mrb[0].mxu0 %v4702
  %v5175 = vpop.f32.mrb[0].mxu0
  %v5176 = vadd.f32 %v5135, %v5175
  %v5177 = vpop.f32.mrb[0].mxu0
  %v5178 = vadd.f32 %v5137, %v5177
  %v5179 = vpop.f32.mrb[0].mxu0
  %v5180 = vpop.f32.mrb[0].mxu0
  %5181 = vdwg.mxu0
  %v5182 = vmax.f32 %v5176, 0.0
  %v5183 = vmax.f32 %v5178, 0.0
  %v5184 = vpack.c.bf16 %v5182, %v5182
  %v5185 = vpack.c.bf16 %v5183, %v5183
  %v5186 = vld [vmem:[%s5] sm:$0xf]
  %v5187 = vld [vmem:[%s5 + $0x4] sm:$0xf]
  %v5188 = vld [vmem:[%s5 + $0x8] sm:$0xf]
  %v5189 = vld [vmem:[%s5 + $0xc] sm:$0xf]
  %v5190 = vld [vmem:[%s5 + $0x10] sm:$0xf]
  %v5191 = vld [vmem:[%s5 + $0x14] sm:$0xf]
  %v5192 = vld [vmem:[%s5 + $0x18] sm:$0xf]
  %v5193 = vld [vmem:[%s5 + $0x1c] sm:$0xf]
  %v5194 = vld [vmem:[%s5 + $0x20] sm:$0xf]
  %v5195 = vld [vmem:[%s5 + $0x24] sm:$0xf]
  %v5196 = vld [vmem:[%s5 + $0x28] sm:$0xf]
  %v5197 = vld [vmem:[%s5 + $0x2c] sm:$0xf]
  %v5198 = vld [vmem:[%s5 + $0x30] sm:$0xf]
  %v5199 = vld [vmem:[%s5 + $0x34] sm:$0xf]
  %v5200 = vld [vmem:[%s5 + $0x38] sm:$0xf]
  %v5201 = vld [vmem:[%s5 + $0x3c] sm:$0xf]
  %v5202 = vld [vmem:[%s5 + $0x40] sm:$0xf]
  %v5203 = vld [vmem:[%s5 + $0x44] sm:$0xf]
  %v5204 = vld [vmem:[%s5 + $0x48] sm:$0xf]
  %v5205 = vld [vmem:[%s5 + $0x4c] sm:$0xf]
  %v5206 = vld [vmem:[%s5 + $0x50] sm:$0xf]
  %v5207 = vld [vmem:[%s5 + $0x54] sm:$0xf]
  %v5208 = vld [vmem:[%s5 + $0x58] sm:$0xf]
  %v5209 = vld [vmem:[%s5 + $0x5c] sm:$0xf]
  %v5210 = vld [vmem:[%s5 + $0x60] sm:$0xf]
  %v5211 = vld [vmem:[%s5 + $0x64] sm:$0xf]
  %v5212 = vld [vmem:[%s5 + $0x68] sm:$0xf]
  %v5213 = vld [vmem:[%s5 + $0x6c] sm:$0xf]
  %v5214 = vld [vmem:[%s5 + $0x70] sm:$0xf]
  %v5215 = vld [vmem:[%s5 + $0x74] sm:$0xf]
  %v5216 = vld [vmem:[%s5 + $0x78] sm:$0xf]
  %v5217 = vld [vmem:[%s5 + $0x7c] sm:$0xf]
  %v5218 = vld [vmem:[%s6] sm:$0x1]
  %v5220 = vlaneseq
  %v5221 = vshrl.u32 %v5220, 7
  %v5222 = vsub.s32 0, %v5221
  %v5223 = vrot.slane %v5218, %v5222
  %v5257 = vunpack.c.l.b16 %v5186
  %v5258 = vunpack.c.l.b16 %v5187
  %v5259 = vunpack.c.l.b16 %v5188
  %v5260 = vunpack.c.l.b16 %v5189
  %v5261 = vunpack.c.l.b16 %v5190
  %v5262 = vunpack.c.l.b16 %v5191
  %v5263 = vunpack.c.l.b16 %v5192
  %v5264 = vunpack.c.l.b16 %v5193
  %v5265 = vunpack.c.l.b16 %v5194
  %v5266 = vunpack.c.l.b16 %v5195
  %v5267 = vunpack.c.l.b16 %v5196
  %v5268 = vunpack.c.l.b16 %v5197
  %v5269 = vunpack.c.l.b16 %v5198
  %v5270 = vunpack.c.l.b16 %v5199
  %v5271 = vunpack.c.l.b16 %v5200
  %v5272 = vunpack.c.l.b16 %v5201
  %v5273 = vunpack.c.l.b16 %v5202
  %v5274 = vunpack.c.l.b16 %v5203
  %v5275 = vunpack.c.l.b16 %v5204
  %v5276 = vunpack.c.l.b16 %v5205
  %v5277 = vunpack.c.l.b16 %v5206
  %v5278 = vunpack.c.l.b16 %v5207
  %v5279 = vunpack.c.l.b16 %v5208
  %v5280 = vunpack.c.l.b16 %v5209
  %v5281 = vunpack.c.l.b16 %v5210
  %v5282 = vunpack.c.l.b16 %v5211
  %v5283 = vunpack.c.l.b16 %v5212
  %v5284 = vunpack.c.l.b16 %v5213
  %v5285 = vunpack.c.l.b16 %v5214
  %v5286 = vunpack.c.l.b16 %v5215
  %v5287 = vunpack.c.l.b16 %v5216
  %v5288 = vunpack.c.l.b16 %v5217
  %v5289 = vpack.c.b16 %v5258, %v5257
  %v5290 = vpack.c.b16 %v5260, %v5259
  %v5291 = vpack.c.b16 %v5262, %v5261
  %v5292 = vpack.c.b16 %v5264, %v5263
  %v5293 = vpack.c.b16 %v5266, %v5265
  %v5294 = vpack.c.b16 %v5268, %v5267
  %v5295 = vpack.c.b16 %v5270, %v5269
  %v5296 = vpack.c.b16 %v5272, %v5271
  %v5297 = vpack.c.b16 %v5274, %v5273
  %v5298 = vpack.c.b16 %v5276, %v5275
  %v5299 = vpack.c.b16 %v5278, %v5277
  %v5300 = vpack.c.b16 %v5280, %v5279
  %v5301 = vpack.c.b16 %v5282, %v5281
  %v5302 = vpack.c.b16 %v5284, %v5283
  %v5303 = vpack.c.b16 %v5286, %v5285
  %v5304 = vpack.c.b16 %v5288, %v5287
  %5321 = vmatprep.subr.bf16.mxu0 0
  %5322 = vmatpush1.bf16.msra.mxu0 %v5289
  %5323 = vmatprep.subr.bf16.mxu0 0
  %5324 = vmatpush1.bf16.msra.mxu0 %v5290
  %5325 = vmatprep.subr.bf16.mxu0 0
  %5326 = vmatpush1.bf16.msra.mxu0 %v5291
  %5327 = vmatprep.subr.bf16.mxu0 0
  %5328 = vmatpush1.bf16.msra.mxu0 %v5292
  %5329 = vmatprep.subr.bf16.mxu0 0
  %5330 = vmatpush1.bf16.msra.mxu0 %v5293
  %5331 = vmatprep.subr.bf16.mxu0 0
  %5332 = vmatpush1.bf16.msra.mxu0 %v5294
  %5333 = vmatprep.subr.bf16.mxu0 0
  %5334 = vmatpush1.bf16.msra.mxu0 %v5295
  %5335 = vmatprep.subr.bf16.mxu0 0
  %5336 = vmatpush1.bf16.msra.mxu0 %v5296
  %5337 = vmatprep.subr.bf16.mxu0 0
  %5338 = vmatpush1.bf16.msra.mxu0 %v5297
  %5339 = vmatprep.subr.bf16.mxu0 0
  %5340 = vmatpush1.bf16.msra.mxu0 %v5298
  %5341 = vmatprep.subr.bf16.mxu0 0
  %5342 = vmatpush1.bf16.msra.mxu0 %v5299
  %5343 = vmatprep.subr.bf16.mxu0 0
  %5344 = vmatpush1.bf16.msra.mxu0 %v5300
  %5345 = vmatprep.subr.bf16.mxu0 0
  %5346 = vmatpush1.bf16.msra.mxu0 %v5301
  %5347 = vmatprep.subr.bf16.mxu0 0
  %5348 = vmatpush1.bf16.msra.mxu0 %v5302
  %5349 = vmatprep.subr.bf16.mxu0 0
  %5350 = vmatpush1.bf16.msra.mxu0 %v5303
  %5351 = vmatprep.subr.bf16.mxu0 0
  %5352 = vmatpush1.bf16.msra.mxu0 %v5304
  %5353 = vmatprep.mubr.bf16.mxu0 %v5185
  %5354 = vmatmul.mubr.bf16.gmra.mrb[0].mxu0 %v5184
  %v5355 = vpop.f32.mrb[0].mxu0
  %v5356 = vadd.f32 %v5223, %v5355
  %v5357 = vpop.f32.mrb[0].mxu0
  %v5358 = vpop.f32.mrb[0].mxu0
  %v5359 = vpop.f32.mrb[0].mxu0
  %5360 = vdwg.mxu0
  %vm5361 = vcmask 15360
  %5362 = vst.msk [vmem:[%s7] sm:$0xff] %vm5361, %v5356
  // Predicated region
  $region30: #{integration_model_forward.1} parent=0 // pred_check
    _
  $region31: #{integration_model_forward.1} parent=0 // pred_check_branch
    %5364 = sbr.rel (0) target = $region33
  $region32: #{integration_model_forward.1} parent=0 // pred_region
    _
  $region33: #{integration_model_forward.1} parent=0 // pred_fallthru
    _
  // Predicated region
  $region34: #{integration_model_forward.1} parent=0 // pred_check
    _
  $region35: #{integration_model_forward.1} parent=0 // pred_check_branch
    %5366 = sbr.rel (0) target = $region37
  $region36: #{integration_model_forward.1} parent=0 // pred_region
    _
  $region37: #{integration_model_forward.1} parent=0 // pred_fallthru
    _

</llo_original>
